<compile_context>
chip_gen: v7x
topology: tpu7x:2x2x1
jax: 0.10.0
libtpu: 0.0.40
codegen_flags: <defaults>
</compile_context>

<pallas_src>
import functools

import jax
import jax.numpy as jnp
from jax.experimental import pallas as pl
from jax.experimental.pallas import tpu as pltpu


# =============================================================== fused forward kernel
def _stemgnn_kernel(
    # activations
    x_seq_ref, x_flat_ref,
    # attention projection vectors (SMEM scalars)
    wk_ref, wq_ref,
    # GRU
    wi_ref, bi_ref, wh_ref, bh_ref,
    # stock block 0 (has backcast)
    w1a_ref, b1a_ref, w2a_ref, b2a_ref, w3a_ref, b3a_ref,
    wfa_ref, bfa_ref, wfra_ref, bfra_ref,
    wba_ref, bba_ref, wbsa_ref, bbsa_ref,
    # stock block 1
    w1b_ref, b1b_ref, w2b_ref, b2b_ref, w3b_ref, b3b_ref,
    wfb_ref, bfb_ref, wfrb_ref, bfrb_ref,
    # fc head
    fc1w_ref, fc1b_ref, fc2w_ref, fc2b_ref,
    # output
    out_ref,
    *, B, N, T, M, alpha):
    f32 = jnp.float32
    H = N          # GRU hidden size == unit == node count
    S = N          # GRU sequence length == node count
    C = 4 * M      # GLU channel width (= time_step * output_channel)

    # ------------------------------------------------------------------------ GRU
    # Input projection: one MXU matmul, off the recurrent critical path.
    gi = jnp.dot(x_seq_ref[...], wi_ref[...], preferred_element_type=f32) + bi_ref[...]
    wh = wh_ref[...]
    bh = bh_ref[...]
    wh_rows = [wh[k:k + 1, :] for k in range(H)]       # hoisted (1, 3H) row slices

    def tree_sum(xs):
        while len(xs) > 1:
            nxt = [xs[i] + xs[i + 1] for i in range(0, len(xs) - 1, 2)]
            if len(xs) % 2:
                nxt.append(xs[-1])
            xs = nxt
        return xs[0]

    h = jnp.zeros((B, H), f32)
    key_acc = jnp.zeros((B, H), f32)
    query_acc = jnp.zeros((B, H), f32)
    for t in range(S):                                  # static unroll
        gi_t = gi[t * B:(t + 1) * B, :]                 # (B, 3H)
        # recurrent matvec on the VPU (no per-step MXU push/pop)
        gh = bh + tree_sum([h[:, k:k + 1] * wh_rows[k] for k in range(H)])
        r = jax.nn.sigmoid(gi_t[:, 0:H] + gh[:, 0:H])
        z = jax.nn.sigmoid(gi_t[:, H:2 * H] + gh[:, H:2 * H])
        ng = jnp.tanh(gi_t[:, 2 * H:3 * H] + r * gh[:, 2 * H:3 * H])
        h = (1.0 - z) * ng + z * h
        # the GRU output is only consumed through these two projections:
        key_acc = key_acc + wk_ref[t] * h
        query_acc = query_acc + wq_ref[t] * h

    # ----------------------------------------- self graph attention -> Laplacian
    row_i = jax.lax.broadcasted_iota(jnp.int32, (N, N), 0)
    col_i = jax.lax.broadcasted_iota(jnp.int32, (N, N), 1)
    eye = (row_i == col_i).astype(f32)

    attn_sum = jnp.zeros((N, N), f32)
    attn_t_sum = jnp.zeros((N, N), f32)
    for b in range(B):
        krow = key_acc[b:b + 1, :]                                    # (1, N)
        qrow = query_acc[b:b + 1, :]                                  # (1, N)
        kcol = jnp.sum(krow * eye, axis=1, keepdims=True)             # (N, 1)
        qcol = jnp.sum(qrow * eye, axis=1, keepdims=True)             # (N, 1)
        d = kcol + qrow                                               # d[i,j]=key[i]+query[j]
        d = jnp.where(d > 0, d, alpha * d)                            # LeakyReLU(alpha)
        e = jnp.exp(d - jnp.max(d, axis=1, keepdims=True))
        attn_sum = attn_sum + e / jnp.sum(e, axis=1, keepdims=True)   # row softmax
        # transposed attention accumulated directly (column softmax) so no
        # in-kernel matrix transpose is needed.
        dt = qcol + krow                                              # dt[i,j] = d[j,i]
        dt = jnp.where(dt > 0, dt, alpha * dt)
        et = jnp.exp(dt - jnp.max(dt, axis=0, keepdims=True))
        attn_t_sum = attn_t_sum + et / jnp.sum(et, axis=0, keepdims=True)
    # TODO(synk): nn.Dropout(p=0.5) after the softmax is treated as eval-mode identity.

    inv_b = 1.0 / B
    attn = attn_sum * inv_b
    attn_t = attn_t_sum * inv_b
    deg = jnp.sum(attn, axis=1, keepdims=True)                        # (N, 1)
    attn_sym = 0.5 * (attn + attn_t)
    dhat = 1.0 / (jnp.sqrt(deg) + 1e-7)                               # (N, 1)
    dhat_row = jnp.sum(dhat * eye, axis=0, keepdims=True)             # (1, N)
    lap = dhat * (deg * eye - attn_sym) * dhat_row                    # normalized Laplacian

    # Chebyshev polynomials (K=4); the zero-th (all-zeros) term is dropped — its
    # contribution was folded out of the layer-1 GLU weights offline.
    lap2 = 2.0 * jnp.dot(lap, lap, preferred_element_type=f32)
    lap3 = 2.0 * jnp.dot(lap, lap2, preferred_element_type=f32) - lap
    lstack = jnp.concatenate([lap, lap2, lap3], axis=0)               # (3N, N)

    # -------------------------------------------------------------- stock blocks
    x_flat = x_flat_ref[...]

    def glu_pair(y):
        # column layout: [real_left | real_right | img_left | img_right], each C wide
        real = y[:, 0:C] * jax.nn.sigmoid(y[:, C:2 * C])
        img = y[:, 2 * C:3 * C] * jax.nn.sigmoid(y[:, 3 * C:4 * C])
        return jnp.concatenate([real, img], axis=1)                   # (B*N, 2C)

    def stock_block(xin, w1, b1, w2, b2, w3, b3, wf, bf, wfr, bfr):
        # Chebyshev graph multiply; the fixed 4-point DFT is folded into w1 offline.
        rows = []
        for b in range(B):
            xb = xin[b * N:(b + 1) * N, :]                            # (N, T)
            g = jnp.dot(lstack, xb, preferred_element_type=f32)      # (3N, T)
            rows.append(jnp.concatenate([g[0:N], g[N:2 * N], g[2 * N:3 * N]], axis=1))
        gcat = jnp.concatenate(rows, axis=0)                          # (B*N, 3T)

        ri = glu_pair(jnp.dot(gcat, w1[...], preferred_element_type=f32) + b1[...])
        ri = glu_pair(jnp.dot(ri, w2[...], preferred_element_type=f32) + b2[...])
        y3 = jnp.dot(ri, w3[...], preferred_element_type=f32) + b3[...]
        # layer-3 outputs were trimmed offline to the bins irfft actually uses:
        # column blocks of `head` are [Re bin0 | Re bin1 | Re bin2 | Im bin1].
        head = y3[:, 0:C] * jax.nn.sigmoid(y3[:, C:2 * C])            # (B*N, C)

        # irfft(n=4) butterflies + graph-conv weight are folded into wf offline.
        fsrc = jax.nn.sigmoid(
            jnp.dot(head, wf[...], preferred_element_type=f32) + bf[...])
        fore = jnp.dot(fsrc, wfr[...], preferred_element_type=f32) + bfr[...]
        return head, fore

    head0, fore0 = stock_block(x_flat, w1a_ref, b1a_ref, w2a_ref, b2a_ref,
                               w3a_ref, b3a_ref, wfa_ref, bfa_ref, wfra_ref, bfra_ref)
    # backcast (stack 0): sigmoid(backcast(igfted) - backcast_short_cut(x))
    bshort = jnp.dot(x_flat, wbsa_ref[...], preferred_element_type=f32) + bbsa_ref[...]
    bcast = jnp.dot(head0, wba_ref[...], preferred_element_type=f32) + bba_ref[...]
    x2 = jax.nn.sigmoid(bcast - bshort)                               # block-1 input

    _, fore1 = stock_block(x2, w1b_ref, b1b_ref, w2b_ref, b2b_ref,
                           w3b_ref, b3b_ref, wfb_ref, bfb_ref, wfrb_ref, bfrb_ref)

    forecast = fore0 + fore1                                          # (B*N, T)

    # ---------------------------------------------------------------------- fc head
    y = jnp.dot(forecast, fc1w_ref[...], preferred_element_type=f32) + fc1b_ref[...]
    y = jnp.where(y > 0, y, 0.01 * y)                                 # LeakyReLU(0.01)
    out_ref[...] = jnp.dot(y, fc2w_ref[...], preferred_element_type=f32) + fc2b_ref[...]


# ====================================================================== model wrapper
def make_forward(N, T, multi, stack_cnt, horizon, alpha):
    assert stack_cnt == 2, "reference forward hard-codes result[0] + result[1]"
    M = T * multi

    def _vmem_full(a):
        return pl.BlockSpec(a.shape, lambda i: (0,) * a.ndim)

    def forward(params, x):
        # x: (B, T, N), same layout as the PyTorch reference
        B = x.shape[0]
        x_seq = jnp.transpose(x, (2, 0, 1)).reshape(N * B, T)   # GRU input, rows (step, batch)
        x_flat = jnp.transpose(x, (0, 2, 1)).reshape(B * N, T)  # block input, rows (batch, node)

        s0, s1 = params["stock"]
        ins = [x_seq, x_flat, params["wk"], params["wq"],
               params["W_i"], params["b_i"], params["W_h"], params["b_h"],
               s0["W1"], s0["b1"], s0["W2"], s0["b2"], s0["W3"], s0["b3"],
               s0["Wf"], s0["bf"], s0["Wfr"], s0["bfr"],
               s0["Wb"], s0["bb"], s0["Wbs"], s0["bbs"],
               s1["W1"], s1["b1"], s1["W2"], s1["b2"], s1["W3"], s1["b3"],
               s1["Wf"], s1["bf"], s1["Wfr"], s1["bfr"],
               params["fc1_w"], params["fc1_b"], params["fc2_w"], params["fc2_b"]]

        smem_spec = pl.BlockSpec(memory_space=pltpu.MemorySpace.SMEM)
        in_specs = [smem_spec if i in (2, 3) else _vmem_full(a) for i, a in enumerate(ins)]

        kernel = functools.partial(_stemgnn_kernel, B=B, N=N, T=T, M=M, alpha=alpha)
        out = pl.pallas_call(
            kernel,
            out_shape=jax.ShapeDtypeStruct((B * N, horizon), jnp.float32),
            grid=(1,),
            in_specs=in_specs,
            out_specs=pl.BlockSpec((B * N, horizon), lambda i: (0, 0)),
            compiler_params=pltpu.CompilerParams(
                dimension_semantics=("arbitrary",)),
        )(*ins)

        out = out.reshape(B, N, horizon)
        if horizon == 1:
            return out[:, None, :, 0]                            # (B, 1, N)
        return jnp.transpose(out, (0, 2, 1))                     # (B, horizon, N)

    return jax.jit(forward)


# =========================================================================== parameters
def init_params(key, N, T, multi, stack_cnt, horizon):
    # Per-module parameters in a PyTorch-like (in, out) layout; folded by fuse_params.
    M = T * multi
    C = 4 * M                       # = time_step * output_channel
    keys = iter(jax.random.split(key, 128))

    def nrm(shape, scale=0.1):
        return (scale * jax.random.normal(next(keys), shape)).astype(jnp.float32)

    params = {
        "weight_key": nrm((N, 1), 0.5),
        "weight_query": nrm((N, 1), 0.5),
        "gru": {"W_i": nrm((T, 3 * N)), "b_i": nrm((3 * N,)),
                "W_h": nrm((N, 3 * N)), "b_h": nrm((3 * N,))},
        "fc1_w": nrm((T, T)), "fc1_b": nrm((T,)),
        "fc2_w": nrm((T, horizon)), "fc2_b": nrm((horizon,)),
        "stock": [],
    }
    for s in range(stack_cnt):
        p = {"weight": nrm((4, M, M), 1.0 / (M ** 0.5)),   # torch (1,4,1,M,M) squeezed
             "Wf": nrm((M, M)), "bf": nrm((M,)),
             "Wfr": nrm((M, T)), "bfr": nrm((T,)),
             "Wbs": nrm((T, T)), "bbs": nrm((T,))}
        if s == 0:
            p["Wb"] = nrm((M, T))
            p["bb"] = nrm((T,))
        dims = [(4 * T, C), (4 * T, C), (C, C), (C, C), (C, C), (C, C)]
        p["glu"] = [(nrm((ci, co), 0.05), nrm((co,)), nrm((ci, co), 0.05), nrm((co,)))
                    for (ci, co) in dims]        # (Wl, bl, Wr, br); even idx = real path
        params["stock"].append(p)
    return params


def fuse_params(params, *, N, T, multi):
    # One-time (outside jit) exact folds of every fixed linear map into the learned
    # weights: zero Chebyshev term, 4-point DFT, irfft(n=4), graph-conv weight,
    # GLU left/right and real/img fusion, layer-3 dead-output trimming.
    M = T * multi
    C = 4 * M
    f32 = jnp.float32
    I_T = jnp.eye(T, dtype=f32)
    I_M = jnp.eye(M, dtype=f32)

    def row(b):
        return jnp.asarray(b, f32).reshape(1, -1)

    # DFT(4) over [0, g1, g2, g3]; input blocks to layer 1 are [g1|g2|g3] (3T wide).
    dft_r = jnp.array([[1., 0., -1., 0.],
                       [1., -1., 1., -1.],
                       [1., 0., -1., 0.]], f32)
    dft_i = jnp.array([[0., -1., 0., 1.],
                       [0., 0., 0., 0.],
                       [0., 1., 0., -1.]], f32)
    D_r = jnp.kron(dft_r, I_T)                      # (3T, 4T)
    D_i = jnp.kron(dft_i, I_T)
    # irfft(n=4) on the trimmed spectrum [Re0|Re1|Re2|Im1] -> time samples [y0..y3]
    irf = 0.25 * jnp.array([[1., 1., 1., 1.],
                            [2., 0., -2., 0.],
                            [1., -1., 1., -1.],
                            [0., -2., 0., 2.]], f32)
    E = jnp.kron(irf, I_M)                          # (4M, 4M)

    fused = {
        "wk": params["weight_key"].reshape(-1).astype(f32),
        "wq": params["weight_query"].reshape(-1).astype(f32),
        "W_i": params["gru"]["W_i"], "b_i": row(params["gru"]["b_i"]),
        "W_h": params["gru"]["W_h"], "b_h": row(params["gru"]["b_h"]),
        "fc1_w": params["fc1_w"], "fc1_b": row(params["fc1_b"]),
        "fc2_w": params["fc2_w"], "fc2_b": row(params["fc2_b"]),
        "stock": [],
    }

    zC2 = jnp.zeros((C, 2 * C), f32)
    zC3M = jnp.zeros((C, 3 * M), f32)
    zCM = jnp.zeros((C, M), f32)
    for p in params["stock"]:
        (Wrl1, brl1, Wrr1, brr1) = p["glu"][0]
        (Wil1, bil1, Wir1, bir1) = p["glu"][1]
        (Wrl2, brl2, Wrr2, brr2) = p["glu"][2]
        (Wil2, bil2, Wir2, bir2) = p["glu"][3]
        (Wrl3, brl3, Wrr3, brr3) = p["glu"][4]
        (Wil3, bil3, Wir3, bir3) = p["glu"][5]

        # layer 1: DFT folded; real/img chains share the same input -> one matmul
        W1 = jnp.concatenate([D_r @ Wrl1, D_r @ Wrr1, D_i @ Wil1, D_i @ Wir1], axis=1)
        b1 = row(jnp.concatenate([brl1, brr1, bil1, bir1]))

        # layer 2: block-diag over the (real, img) inputs, left/right fused
        W2 = jnp.concatenate(
            [jnp.concatenate([Wrl2, Wrr2, zC2], axis=1),
             jnp.concatenate([zC2, Wil2, Wir2], axis=1)], axis=0)     # (2C, 4C)
        b2 = row(jnp.concatenate([brl2, brr2, bil2, bir2]))

        # layer 3: same, with dead outputs trimmed (real keeps bins 0..2, img keeps bin 1)
        W3 = jnp.concatenate(
            [jnp.concatenate([Wrl3[:, 0:3 * M], zCM, Wrr3[:, 0:3 * M], zCM], axis=1),
             jnp.concatenate([zC3M, Wil3[:, M:2 * M], zC3M, Wir3[:, M:2 * M]], axis=1)],
            axis=0)                                                    # (2C, 2C)
        b3 = row(jnp.concatenate([brl3[0:3 * M], bil3[M:2 * M],
                                  brr3[0:3 * M], bir3[M:2 * M]]))

        gcw = p["weight"].reshape(4 * M, M)
        Eg = E @ gcw                                                   # irfft + graph conv
        sp = {"W1": W1, "b1": b1, "W2": W2, "b2": b2, "W3": W3, "b3": b3,
              "Wf": Eg @ p["Wf"], "bf": row(p["bf"]),
              "Wfr": p["Wfr"], "bfr": row(p["bfr"])}
        if "Wb" in p:
            sp["Wb"] = Eg @ p["Wb"]
            sp["bb"] = row(p["bb"])
            sp["Wbs"] = p["Wbs"]
            sp["bbs"] = row(p["bbs"])
        fused["stock"].append(sp)
    return fused


# ================================================================================ main
if __name__ == "__main__":
    B, N, T = 2, 8, 16            # batch, nodes(units), time_step
    MULTI, STACKS, HORIZON = 2, 2, 1
    ALPHA = 0.2

    key = jax.random.PRNGKey(0)
    pkey, xkey = jax.random.split(key)
    raw_params = init_params(pkey, N, T, MULTI, STACKS, HORIZON)
    params = fuse_params(raw_params, N=N, T=T, multi=MULTI)
    x = jax.random.normal(xkey, (B, T, N), dtype=jnp.float32)     # layout: (B, T, N)

    fwd = make_forward(N, T, MULTI, STACKS, HORIZON, ALPHA)
    out = jax.block_until_ready(fwd(params, x))
    assert out.shape == (B, 1, N), out.shape
    print("KERNEL_OK")
</pallas_src>

<mosaic_0001>
module attributes {stable_mosaic.version = 11 : i64} {
  func.func @_stemgnn_kernel(%arg0: i32, %arg1: memref<16x16xf32, #tpu.memory_space<vmem>>, %arg2: memref<16x16xf32, #tpu.memory_space<vmem>>, %arg3: memref<8xf32, #tpu.memory_space<smem>>, %arg4: memref<8xf32, #tpu.memory_space<smem>>, %arg5: memref<16x24xf32, #tpu.memory_space<vmem>>, %arg6: memref<1x24xf32, #tpu.memory_space<vmem>>, %arg7: memref<8x24xf32, #tpu.memory_space<vmem>>, %arg8: memref<1x24xf32, #tpu.memory_space<vmem>>, %arg9: memref<48x512xf32, #tpu.memory_space<vmem>>, %arg10: memref<1x512xf32, #tpu.memory_space<vmem>>, %arg11: memref<256x512xf32, #tpu.memory_space<vmem>>, %arg12: memref<1x512xf32, #tpu.memory_space<vmem>>, %arg13: memref<256x256xf32, #tpu.memory_space<vmem>>, %arg14: memref<1x256xf32, #tpu.memory_space<vmem>>, %arg15: memref<128x32xf32, #tpu.memory_space<vmem>>, %arg16: memref<1x32xf32, #tpu.memory_space<vmem>>, %arg17: memref<32x16xf32, #tpu.memory_space<vmem>>, %arg18: memref<1x16xf32, #tpu.memory_space<vmem>>, %arg19: memref<128x16xf32, #tpu.memory_space<vmem>>, %arg20: memref<1x16xf32, #tpu.memory_space<vmem>>, %arg21: memref<16x16xf32, #tpu.memory_space<vmem>>, %arg22: memref<1x16xf32, #tpu.memory_space<vmem>>, %arg23: memref<48x512xf32, #tpu.memory_space<vmem>>, %arg24: memref<1x512xf32, #tpu.memory_space<vmem>>, %arg25: memref<256x512xf32, #tpu.memory_space<vmem>>, %arg26: memref<1x512xf32, #tpu.memory_space<vmem>>, %arg27: memref<256x256xf32, #tpu.memory_space<vmem>>, %arg28: memref<1x256xf32, #tpu.memory_space<vmem>>, %arg29: memref<128x32xf32, #tpu.memory_space<vmem>>, %arg30: memref<1x32xf32, #tpu.memory_space<vmem>>, %arg31: memref<32x16xf32, #tpu.memory_space<vmem>>, %arg32: memref<1x16xf32, #tpu.memory_space<vmem>>, %arg33: memref<16x16xf32, #tpu.memory_space<vmem>>, %arg34: memref<1x16xf32, #tpu.memory_space<vmem>>, %arg35: memref<16x1xf32, #tpu.memory_space<vmem>>, %arg36: memref<1x1xf32, #tpu.memory_space<vmem>>, %arg37: memref<16x1xf32, #tpu.memory_space<vmem>>) attributes {dimension_semantics = [#tpu.dimension_semantics<arbitrary>], iteration_bounds = array<i64: 1>, scalar_prefetch = 0 : i64, scratch_operands = 0 : i64, tpu.core_type = #tpu.core_type<tc>, window_params = [{pipeline_mode = #tpu.pipeline_mode<synchronous>, transform_indices = @transform_0, window_bounds = array<i64: 16, 16>}, {pipeline_mode = #tpu.pipeline_mode<synchronous>, transform_indices = @transform_1, window_bounds = array<i64: 16, 16>}, {transform_indices = @transform_2, window_bounds = array<i64: 8>}, {transform_indices = @transform_3, window_bounds = array<i64: 8>}, {pipeline_mode = #tpu.pipeline_mode<synchronous>, transform_indices = @transform_4, window_bounds = array<i64: 16, 24>}, {pipeline_mode = #tpu.pipeline_mode<synchronous>, transform_indices = @transform_5, window_bounds = array<i64: 1, 24>}, {pipeline_mode = #tpu.pipeline_mode<synchronous>, transform_indices = @transform_6, window_bounds = array<i64: 8, 24>}, {pipeline_mode = #tpu.pipeline_mode<synchronous>, transform_indices = @transform_7, window_bounds = array<i64: 1, 24>}, {pipeline_mode = #tpu.pipeline_mode<synchronous>, transform_indices = @transform_8, window_bounds = array<i64: 48, 512>}, {pipeline_mode = #tpu.pipeline_mode<synchronous>, transform_indices = @transform_9, window_bounds = array<i64: 1, 512>}, {pipeline_mode = #tpu.pipeline_mode<synchronous>, transform_indices = @transform_10, window_bounds = array<i64: 256, 512>}, {pipeline_mode = #tpu.pipeline_mode<synchronous>, transform_indices = @transform_11, window_bounds = array<i64: 1, 512>}, {pipeline_mode = #tpu.pipeline_mode<synchronous>, transform_indices = @transform_12, window_bounds = array<i64: 256, 256>}, {pipeline_mode = #tpu.pipeline_mode<synchronous>, transform_indices = @transform_13, window_bounds = array<i64: 1, 256>}, {pipeline_mode = #tpu.pipeline_mode<synchronous>, transform_indices = @transform_14, window_bounds = array<i64: 128, 32>}, {pipeline_mode = #tpu.pipeline_mode<synchronous>, transform_indices = @transform_15, window_bounds = array<i64: 1, 32>}, {pipeline_mode = #tpu.pipeline_mode<synchronous>, transform_indices = @transform_16, window_bounds = array<i64: 32, 16>}, {pipeline_mode = #tpu.pipeline_mode<synchronous>, transform_indices = @transform_17, window_bounds = array<i64: 1, 16>}, {pipeline_mode = #tpu.pipeline_mode<synchronous>, transform_indices = @transform_18, window_bounds = array<i64: 128, 16>}, {pipeline_mode = #tpu.pipeline_mode<synchronous>, transform_indices = @transform_19, window_bounds = array<i64: 1, 16>}, {pipeline_mode = #tpu.pipeline_mode<synchronous>, transform_indices = @transform_20, window_bounds = array<i64: 16, 16>}, {pipeline_mode = #tpu.pipeline_mode<synchronous>, transform_indices = @transform_21, window_bounds = array<i64: 1, 16>}, {pipeline_mode = #tpu.pipeline_mode<synchronous>, transform_indices = @transform_22, window_bounds = array<i64: 48, 512>}, {pipeline_mode = #tpu.pipeline_mode<synchronous>, transform_indices = @transform_23, window_bounds = array<i64: 1, 512>}, {pipeline_mode = #tpu.pipeline_mode<synchronous>, transform_indices = @transform_24, window_bounds = array<i64: 256, 512>}, {pipeline_mode = #tpu.pipeline_mode<synchronous>, transform_indices = @transform_25, window_bounds = array<i64: 1, 512>}, {pipeline_mode = #tpu.pipeline_mode<synchronous>, transform_indices = @transform_26, window_bounds = array<i64: 256, 256>}, {pipeline_mode = #tpu.pipeline_mode<synchronous>, transform_indices = @transform_27, window_bounds = array<i64: 1, 256>}, {pipeline_mode = #tpu.pipeline_mode<synchronous>, transform_indices = @transform_28, window_bounds = array<i64: 128, 32>}, {pipeline_mode = #tpu.pipeline_mode<synchronous>, transform_indices = @transform_29, window_bounds = array<i64: 1, 32>}, {pipeline_mode = #tpu.pipeline_mode<synchronous>, transform_indices = @transform_30, window_bounds = array<i64: 32, 16>}, {pipeline_mode = #tpu.pipeline_mode<synchronous>, transform_indices = @transform_31, window_bounds = array<i64: 1, 16>}, {pipeline_mode = #tpu.pipeline_mode<synchronous>, transform_indices = @transform_32, window_bounds = array<i64: 16, 16>}, {pipeline_mode = #tpu.pipeline_mode<synchronous>, transform_indices = @transform_33, window_bounds = array<i64: 1, 16>}, {pipeline_mode = #tpu.pipeline_mode<synchronous>, transform_indices = @transform_34, window_bounds = array<i64: 16, 1>}, {pipeline_mode = #tpu.pipeline_mode<synchronous>, transform_indices = @transform_35, window_bounds = array<i64: 1, 1>}, {pipeline_mode = #tpu.pipeline_mode<synchronous>, transform_indices = @transform_36, window_bounds = array<i64: 16, 1>}]} {
    %c0 = arith.constant 0 : index
    %c0_0 = arith.constant 0 : index
    %0 = vector.load %arg1[%c0, %c0_0] : memref<16x16xf32, #tpu.memory_space<vmem>>, vector<16x16xf32>
    %c0_1 = arith.constant 0 : index
    %c0_2 = arith.constant 0 : index
    %1 = vector.load %arg5[%c0_1, %c0_2] : memref<16x24xf32, #tpu.memory_space<vmem>>, vector<16x24xf32>
    %cst = arith.constant dense<0.000000e+00> : vector<16x24xf32>
    %2 = tpu.matmul %0, %1, %cst {dimension_numbers = #tpu.dot_dimension_numbers<[1], [0], [0], [1], [0, 0, 1, 1], [], []>} : vector<16x16xf32>, vector<16x24xf32>, vector<16x24xf32> -> vector<16x24xf32>
    %c0_3 = arith.constant 0 : index
    %c0_4 = arith.constant 0 : index
    %3 = vector.load %arg6[%c0_3, %c0_4] : memref<1x24xf32, #tpu.memory_space<vmem>>, vector<1x24xf32>
    %4 = vector.broadcast %3 : vector<1x24xf32> to vector<16x24xf32>
    %5 = arith.addf %2, %4 : vector<16x24xf32>
    %c0_5 = arith.constant 0 : index
    %c0_6 = arith.constant 0 : index
    %6 = vector.load %arg7[%c0_5, %c0_6] : memref<8x24xf32, #tpu.memory_space<vmem>>, vector<8x24xf32>
    %c0_7 = arith.constant 0 : index
    %c0_8 = arith.constant 0 : index
    %7 = vector.load %arg8[%c0_7, %c0_8] : memref<1x24xf32, #tpu.memory_space<vmem>>, vector<1x24xf32>
    %8 = vector.extract_strided_slice %6 {offsets = [0, 0], sizes = [1, 24], strides = [1, 1]} : vector<8x24xf32> to vector<1x24xf32>
    %9 = vector.extract_strided_slice %6 {offsets = [1, 0], sizes = [1, 24], strides = [1, 1]} : vector<8x24xf32> to vector<1x24xf32>
    %10 = vector.extract_strided_slice %6 {offsets = [2, 0], sizes = [1, 24], strides = [1, 1]} : vector<8x24xf32> to vector<1x24xf32>
    %11 = vector.extract_strided_slice %6 {offsets = [3, 0], sizes = [1, 24], strides = [1, 1]} : vector<8x24xf32> to vector<1x24xf32>
    %12 = vector.extract_strided_slice %6 {offsets = [4, 0], sizes = [1, 24], strides = [1, 1]} : vector<8x24xf32> to vector<1x24xf32>
    %13 = vector.extract_strided_slice %6 {offsets = [5, 0], sizes = [1, 24], strides = [1, 1]} : vector<8x24xf32> to vector<1x24xf32>
    %14 = vector.extract_strided_slice %6 {offsets = [6, 0], sizes = [1, 24], strides = [1, 1]} : vector<8x24xf32> to vector<1x24xf32>
    %15 = vector.extract_strided_slice %6 {offsets = [7, 0], sizes = [1, 24], strides = [1, 1]} : vector<8x24xf32> to vector<1x24xf32>
    %cst_9 = arith.constant 0.000000e+00 : f32
    %16 = vector.broadcast %cst_9 : f32 to vector<2x8xf32>
    %cst_10 = arith.constant 0.000000e+00 : f32
    %17 = vector.broadcast %cst_10 : f32 to vector<2x8xf32>
    %cst_11 = arith.constant 0.000000e+00 : f32
    %18 = vector.broadcast %cst_11 : f32 to vector<2x8xf32>
    %19 = vector.extract_strided_slice %5 {offsets = [0, 0], sizes = [2, 24], strides = [1, 1]} : vector<16x24xf32> to vector<2x24xf32>
    %20 = vector.extract_strided_slice %16 {offsets = [0, 0], sizes = [2, 1], strides = [1, 1]} : vector<2x8xf32> to vector<2x1xf32>
    %21 = vector.broadcast %20 : vector<2x1xf32> to vector<2x24xf32>
    %22 = vector.broadcast %8 : vector<1x24xf32> to vector<2x24xf32>
    %23 = arith.mulf %21, %22 : vector<2x24xf32>
    %24 = vector.extract_strided_slice %16 {offsets = [0, 1], sizes = [2, 1], strides = [1, 1]} : vector<2x8xf32> to vector<2x1xf32>
    %25 = vector.broadcast %24 : vector<2x1xf32> to vector<2x24xf32>
    %26 = vector.broadcast %9 : vector<1x24xf32> to vector<2x24xf32>
    %27 = arith.mulf %25, %26 : vector<2x24xf32>
    %28 = vector.extract_strided_slice %16 {offsets = [0, 2], sizes = [2, 1], strides = [1, 1]} : vector<2x8xf32> to vector<2x1xf32>
    %29 = vector.broadcast %28 : vector<2x1xf32> to vector<2x24xf32>
    %30 = vector.broadcast %10 : vector<1x24xf32> to vector<2x24xf32>
    %31 = arith.mulf %29, %30 : vector<2x24xf32>
    %32 = vector.extract_strided_slice %16 {offsets = [0, 3], sizes = [2, 1], strides = [1, 1]} : vector<2x8xf32> to vector<2x1xf32>
    %33 = vector.broadcast %32 : vector<2x1xf32> to vector<2x24xf32>
    %34 = vector.broadcast %11 : vector<1x24xf32> to vector<2x24xf32>
    %35 = arith.mulf %33, %34 : vector<2x24xf32>
    %36 = vector.extract_strided_slice %16 {offsets = [0, 4], sizes = [2, 1], strides = [1, 1]} : vector<2x8xf32> to vector<2x1xf32>
    %37 = vector.broadcast %36 : vector<2x1xf32> to vector<2x24xf32>
    %38 = vector.broadcast %12 : vector<1x24xf32> to vector<2x24xf32>
    %39 = arith.mulf %37, %38 : vector<2x24xf32>
    %40 = vector.extract_strided_slice %16 {offsets = [0, 5], sizes = [2, 1], strides = [1, 1]} : vector<2x8xf32> to vector<2x1xf32>
    %41 = vector.broadcast %40 : vector<2x1xf32> to vector<2x24xf32>
    %42 = vector.broadcast %13 : vector<1x24xf32> to vector<2x24xf32>
    %43 = arith.mulf %41, %42 : vector<2x24xf32>
    %44 = vector.extract_strided_slice %16 {offsets = [0, 6], sizes = [2, 1], strides = [1, 1]} : vector<2x8xf32> to vector<2x1xf32>
    %45 = vector.broadcast %44 : vector<2x1xf32> to vector<2x24xf32>
    %46 = vector.broadcast %14 : vector<1x24xf32> to vector<2x24xf32>
    %47 = arith.mulf %45, %46 : vector<2x24xf32>
    %48 = vector.extract_strided_slice %16 {offsets = [0, 7], sizes = [2, 1], strides = [1, 1]} : vector<2x8xf32> to vector<2x1xf32>
    %49 = vector.broadcast %48 : vector<2x1xf32> to vector<2x24xf32>
    %50 = vector.broadcast %15 : vector<1x24xf32> to vector<2x24xf32>
    %51 = arith.mulf %49, %50 : vector<2x24xf32>
    %52 = arith.addf %23, %27 : vector<2x24xf32>
    %53 = arith.addf %31, %35 : vector<2x24xf32>
    %54 = arith.addf %39, %43 : vector<2x24xf32>
    %55 = arith.addf %47, %51 : vector<2x24xf32>
    %56 = arith.addf %52, %53 : vector<2x24xf32>
    %57 = arith.addf %54, %55 : vector<2x24xf32>
    %58 = arith.addf %56, %57 : vector<2x24xf32>
    %59 = vector.broadcast %7 : vector<1x24xf32> to vector<2x24xf32>
    %60 = arith.addf %59, %58 : vector<2x24xf32>
    %61 = vector.extract_strided_slice %19 {offsets = [0, 0], sizes = [2, 8], strides = [1, 1]} : vector<2x24xf32> to vector<2x8xf32>
    %62 = vector.extract_strided_slice %60 {offsets = [0, 0], sizes = [2, 8], strides = [1, 1]} : vector<2x24xf32> to vector<2x8xf32>
    %63 = arith.addf %61, %62 : vector<2x8xf32>
    %64 = arith.negf %63 : vector<2x8xf32>
    %65 = math.exp %64 : vector<2x8xf32>
    %cst_12 = arith.constant 1.000000e+00 : f32
    %66 = vector.broadcast %cst_12 : f32 to vector<2x8xf32>
    %67 = arith.addf %66, %65 : vector<2x8xf32>
    %68 = arith.divf %66, %67 : vector<2x8xf32>
    %69 = vector.extract_strided_slice %19 {offsets = [0, 8], sizes = [2, 8], strides = [1, 1]} : vector<2x24xf32> to vector<2x8xf32>
    %70 = vector.extract_strided_slice %60 {offsets = [0, 8], sizes = [2, 8], strides = [1, 1]} : vector<2x24xf32> to vector<2x8xf32>
    %71 = arith.addf %69, %70 : vector<2x8xf32>
    %72 = arith.negf %71 : vector<2x8xf32>
    %73 = math.exp %72 : vector<2x8xf32>
    %cst_13 = arith.constant 1.000000e+00 : f32
    %74 = vector.broadcast %cst_13 : f32 to vector<2x8xf32>
    %75 = arith.addf %74, %73 : vector<2x8xf32>
    %76 = arith.divf %74, %75 : vector<2x8xf32>
    %77 = vector.extract_strided_slice %19 {offsets = [0, 16], sizes = [2, 8], strides = [1, 1]} : vector<2x24xf32> to vector<2x8xf32>
    %78 = vector.extract_strided_slice %60 {offsets = [0, 16], sizes = [2, 8], strides = [1, 1]} : vector<2x24xf32> to vector<2x8xf32>
    %79 = arith.mulf %68, %78 : vector<2x8xf32>
    %80 = arith.addf %77, %79 : vector<2x8xf32>
    %81 = math.tanh %80 : vector<2x8xf32>
    %cst_14 = arith.constant 1.000000e+00 : f32
    %82 = vector.broadcast %cst_14 : f32 to vector<2x8xf32>
    %83 = arith.subf %82, %76 : vector<2x8xf32>
    %84 = arith.mulf %83, %81 : vector<2x8xf32>
    %85 = arith.mulf %76, %16 : vector<2x8xf32>
    %86 = arith.addf %84, %85 : vector<2x8xf32>
    %c0_15 = arith.constant 0 : index
    %87 = memref.load %arg3[%c0_15] : memref<8xf32, #tpu.memory_space<smem>>
    %88 = vector.broadcast %87 : f32 to vector<2x8xf32>
    %89 = arith.mulf %88, %86 : vector<2x8xf32>
    %90 = arith.addf %17, %89 : vector<2x8xf32>
    %c0_16 = arith.constant 0 : index
    %91 = memref.load %arg4[%c0_16] : memref<8xf32, #tpu.memory_space<smem>>
    %92 = vector.broadcast %91 : f32 to vector<2x8xf32>
    %93 = arith.mulf %92, %86 : vector<2x8xf32>
    %94 = arith.addf %18, %93 : vector<2x8xf32>
    %95 = vector.extract_strided_slice %5 {offsets = [2, 0], sizes = [2, 24], strides = [1, 1]} : vector<16x24xf32> to vector<2x24xf32>
    %96 = vector.extract_strided_slice %86 {offsets = [0, 0], sizes = [2, 1], strides = [1, 1]} : vector<2x8xf32> to vector<2x1xf32>
    %97 = vector.broadcast %96 : vector<2x1xf32> to vector<2x24xf32>
    %98 = vector.broadcast %8 : vector<1x24xf32> to vector<2x24xf32>
    %99 = arith.mulf %97, %98 : vector<2x24xf32>
    %100 = vector.extract_strided_slice %86 {offsets = [0, 1], sizes = [2, 1], strides = [1, 1]} : vector<2x8xf32> to vector<2x1xf32>
    %101 = vector.broadcast %100 : vector<2x1xf32> to vector<2x24xf32>
    %102 = vector.broadcast %9 : vector<1x24xf32> to vector<2x24xf32>
    %103 = arith.mulf %101, %102 : vector<2x24xf32>
    %104 = vector.extract_strided_slice %86 {offsets = [0, 2], sizes = [2, 1], strides = [1, 1]} : vector<2x8xf32> to vector<2x1xf32>
    %105 = vector.broadcast %104 : vector<2x1xf32> to vector<2x24xf32>
    %106 = vector.broadcast %10 : vector<1x24xf32> to vector<2x24xf32>
    %107 = arith.mulf %105, %106 : vector<2x24xf32>
    %108 = vector.extract_strided_slice %86 {offsets = [0, 3], sizes = [2, 1], strides = [1, 1]} : vector<2x8xf32> to vector<2x1xf32>
    %109 = vector.broadcast %108 : vector<2x1xf32> to vector<2x24xf32>
    %110 = vector.broadcast %11 : vector<1x24xf32> to vector<2x24xf32>
    %111 = arith.mulf %109, %110 : vector<2x24xf32>
    %112 = vector.extract_strided_slice %86 {offsets = [0, 4], sizes = [2, 1], strides = [1, 1]} : vector<2x8xf32> to vector<2x1xf32>
    %113 = vector.broadcast %112 : vector<2x1xf32> to vector<2x24xf32>
    %114 = vector.broadcast %12 : vector<1x24xf32> to vector<2x24xf32>
    %115 = arith.mulf %113, %114 : vector<2x24xf32>
    %116 = vector.extract_strided_slice %86 {offsets = [0, 5], sizes = [2, 1], strides = [1, 1]} : vector<2x8xf32> to vector<2x1xf32>
    %117 = vector.broadcast %116 : vector<2x1xf32> to vector<2x24xf32>
    %118 = vector.broadcast %13 : vector<1x24xf32> to vector<2x24xf32>
    %119 = arith.mulf %117, %118 : vector<2x24xf32>
    %120 = vector.extract_strided_slice %86 {offsets = [0, 6], sizes = [2, 1], strides = [1, 1]} : vector<2x8xf32> to vector<2x1xf32>
    %121 = vector.broadcast %120 : vector<2x1xf32> to vector<2x24xf32>
    %122 = vector.broadcast %14 : vector<1x24xf32> to vector<2x24xf32>
    %123 = arith.mulf %121, %122 : vector<2x24xf32>
    %124 = vector.extract_strided_slice %86 {offsets = [0, 7], sizes = [2, 1], strides = [1, 1]} : vector<2x8xf32> to vector<2x1xf32>
    %125 = vector.broadcast %124 : vector<2x1xf32> to vector<2x24xf32>
    %126 = vector.broadcast %15 : vector<1x24xf32> to vector<2x24xf32>
    %127 = arith.mulf %125, %126 : vector<2x24xf32>
    %128 = arith.addf %99, %103 : vector<2x24xf32>
    %129 = arith.addf %107, %111 : vector<2x24xf32>
    %130 = arith.addf %115, %119 : vector<2x24xf32>
    %131 = arith.addf %123, %127 : vector<2x24xf32>
    %132 = arith.addf %128, %129 : vector<2x24xf32>
    %133 = arith.addf %130, %131 : vector<2x24xf32>
    %134 = arith.addf %132, %133 : vector<2x24xf32>
    %135 = vector.broadcast %7 : vector<1x24xf32> to vector<2x24xf32>
    %136 = arith.addf %135, %134 : vector<2x24xf32>
    %137 = vector.extract_strided_slice %95 {offsets = [0, 0], sizes = [2, 8], strides = [1, 1]} : vector<2x24xf32> to vector<2x8xf32>
    %138 = vector.extract_strided_slice %136 {offsets = [0, 0], sizes = [2, 8], strides = [1, 1]} : vector<2x24xf32> to vector<2x8xf32>
    %139 = arith.addf %137, %138 : vector<2x8xf32>
    %140 = arith.negf %139 : vector<2x8xf32>
    %141 = math.exp %140 : vector<2x8xf32>
    %cst_17 = arith.constant 1.000000e+00 : f32
    %142 = vector.broadcast %cst_17 : f32 to vector<2x8xf32>
    %143 = arith.addf %142, %141 : vector<2x8xf32>
    %144 = arith.divf %142, %143 : vector<2x8xf32>
    %145 = vector.extract_strided_slice %95 {offsets = [0, 8], sizes = [2, 8], strides = [1, 1]} : vector<2x24xf32> to vector<2x8xf32>
    %146 = vector.extract_strided_slice %136 {offsets = [0, 8], sizes = [2, 8], strides = [1, 1]} : vector<2x24xf32> to vector<2x8xf32>
    %147 = arith.addf %145, %146 : vector<2x8xf32>
    %148 = arith.negf %147 : vector<2x8xf32>
    %149 = math.exp %148 : vector<2x8xf32>
    %cst_18 = arith.constant 1.000000e+00 : f32
    %150 = vector.broadcast %cst_18 : f32 to vector<2x8xf32>
    %151 = arith.addf %150, %149 : vector<2x8xf32>
    %152 = arith.divf %150, %151 : vector<2x8xf32>
    %153 = vector.extract_strided_slice %95 {offsets = [0, 16], sizes = [2, 8], strides = [1, 1]} : vector<2x24xf32> to vector<2x8xf32>
    %154 = vector.extract_strided_slice %136 {offsets = [0, 16], sizes = [2, 8], strides = [1, 1]} : vector<2x24xf32> to vector<2x8xf32>
    %155 = arith.mulf %144, %154 : vector<2x8xf32>
    %156 = arith.addf %153, %155 : vector<2x8xf32>
    %157 = math.tanh %156 : vector<2x8xf32>
    %cst_19 = arith.constant 1.000000e+00 : f32
    %158 = vector.broadcast %cst_19 : f32 to vector<2x8xf32>
    %159 = arith.subf %158, %152 : vector<2x8xf32>
    %160 = arith.mulf %159, %157 : vector<2x8xf32>
    %161 = arith.mulf %152, %86 : vector<2x8xf32>
    %162 = arith.addf %160, %161 : vector<2x8xf32>
    %c1 = arith.constant 1 : index
    %163 = memref.load %arg3[%c1] : memref<8xf32, #tpu.memory_space<smem>>
    %164 = vector.broadcast %163 : f32 to vector<2x8xf32>
    %165 = arith.mulf %164, %162 : vector<2x8xf32>
    %166 = arith.addf %90, %165 : vector<2x8xf32>
    %c1_20 = arith.constant 1 : index
    %167 = memref.load %arg4[%c1_20] : memref<8xf32, #tpu.memory_space<smem>>
    %168 = vector.broadcast %167 : f32 to vector<2x8xf32>
    %169 = arith.mulf %168, %162 : vector<2x8xf32>
    %170 = arith.addf %94, %169 : vector<2x8xf32>
    %171 = vector.extract_strided_slice %5 {offsets = [4, 0], sizes = [2, 24], strides = [1, 1]} : vector<16x24xf32> to vector<2x24xf32>
    %172 = vector.extract_strided_slice %162 {offsets = [0, 0], sizes = [2, 1], strides = [1, 1]} : vector<2x8xf32> to vector<2x1xf32>
    %173 = vector.broadcast %172 : vector<2x1xf32> to vector<2x24xf32>
    %174 = vector.broadcast %8 : vector<1x24xf32> to vector<2x24xf32>
    %175 = arith.mulf %173, %174 : vector<2x24xf32>
    %176 = vector.extract_strided_slice %162 {offsets = [0, 1], sizes = [2, 1], strides = [1, 1]} : vector<2x8xf32> to vector<2x1xf32>
    %177 = vector.broadcast %176 : vector<2x1xf32> to vector<2x24xf32>
    %178 = vector.broadcast %9 : vector<1x24xf32> to vector<2x24xf32>
    %179 = arith.mulf %177, %178 : vector<2x24xf32>
    %180 = vector.extract_strided_slice %162 {offsets = [0, 2], sizes = [2, 1], strides = [1, 1]} : vector<2x8xf32> to vector<2x1xf32>
    %181 = vector.broadcast %180 : vector<2x1xf32> to vector<2x24xf32>
    %182 = vector.broadcast %10 : vector<1x24xf32> to vector<2x24xf32>
    %183 = arith.mulf %181, %182 : vector<2x24xf32>
    %184 = vector.extract_strided_slice %162 {offsets = [0, 3], sizes = [2, 1], strides = [1, 1]} : vector<2x8xf32> to vector<2x1xf32>
    %185 = vector.broadcast %184 : vector<2x1xf32> to vector<2x24xf32>
    %186 = vector.broadcast %11 : vector<1x24xf32> to vector<2x24xf32>
    %187 = arith.mulf %185, %186 : vector<2x24xf32>
    %188 = vector.extract_strided_slice %162 {offsets = [0, 4], sizes = [2, 1], strides = [1, 1]} : vector<2x8xf32> to vector<2x1xf32>
    %189 = vector.broadcast %188 : vector<2x1xf32> to vector<2x24xf32>
    %190 = vector.broadcast %12 : vector<1x24xf32> to vector<2x24xf32>
    %191 = arith.mulf %189, %190 : vector<2x24xf32>
    %192 = vector.extract_strided_slice %162 {offsets = [0, 5], sizes = [2, 1], strides = [1, 1]} : vector<2x8xf32> to vector<2x1xf32>
    %193 = vector.broadcast %192 : vector<2x1xf32> to vector<2x24xf32>
    %194 = vector.broadcast %13 : vector<1x24xf32> to vector<2x24xf32>
    %195 = arith.mulf %193, %194 : vector<2x24xf32>
    %196 = vector.extract_strided_slice %162 {offsets = [0, 6], sizes = [2, 1], strides = [1, 1]} : vector<2x8xf32> to vector<2x1xf32>
    %197 = vector.broadcast %196 : vector<2x1xf32> to vector<2x24xf32>
    %198 = vector.broadcast %14 : vector<1x24xf32> to vector<2x24xf32>
    %199 = arith.mulf %197, %198 : vector<2x24xf32>
    %200 = vector.extract_strided_slice %162 {offsets = [0, 7], sizes = [2, 1], strides = [1, 1]} : vector<2x8xf32> to vector<2x1xf32>
    %201 = vector.broadcast %200 : vector<2x1xf32> to vector<2x24xf32>
    %202 = vector.broadcast %15 : vector<1x24xf32> to vector<2x24xf32>
    %203 = arith.mulf %201, %202 : vector<2x24xf32>
    %204 = arith.addf %175, %179 : vector<2x24xf32>
    %205 = arith.addf %183, %187 : vector<2x24xf32>
    %206 = arith.addf %191, %195 : vector<2x24xf32>
    %207 = arith.addf %199, %203 : vector<2x24xf32>
    %208 = arith.addf %204, %205 : vector<2x24xf32>
    %209 = arith.addf %206, %207 : vector<2x24xf32>
    %210 = arith.addf %208, %209 : vector<2x24xf32>
    %211 = vector.broadcast %7 : vector<1x24xf32> to vector<2x24xf32>
    %212 = arith.addf %211, %210 : vector<2x24xf32>
    %213 = vector.extract_strided_slice %171 {offsets = [0, 0], sizes = [2, 8], strides = [1, 1]} : vector<2x24xf32> to vector<2x8xf32>
    %214 = vector.extract_strided_slice %212 {offsets = [0, 0], sizes = [2, 8], strides = [1, 1]} : vector<2x24xf32> to vector<2x8xf32>
    %215 = arith.addf %213, %214 : vector<2x8xf32>
    %216 = arith.negf %215 : vector<2x8xf32>
    %217 = math.exp %216 : vector<2x8xf32>
    %cst_21 = arith.constant 1.000000e+00 : f32
    %218 = vector.broadcast %cst_21 : f32 to vector<2x8xf32>
    %219 = arith.addf %218, %217 : vector<2x8xf32>
    %220 = arith.divf %218, %219 : vector<2x8xf32>
    %221 = vector.extract_strided_slice %171 {offsets = [0, 8], sizes = [2, 8], strides = [1, 1]} : vector<2x24xf32> to vector<2x8xf32>
    %222 = vector.extract_strided_slice %212 {offsets = [0, 8], sizes = [2, 8], strides = [1, 1]} : vector<2x24xf32> to vector<2x8xf32>
    %223 = arith.addf %221, %222 : vector<2x8xf32>
    %224 = arith.negf %223 : vector<2x8xf32>
    %225 = math.exp %224 : vector<2x8xf32>
    %cst_22 = arith.constant 1.000000e+00 : f32
    %226 = vector.broadcast %cst_22 : f32 to vector<2x8xf32>
    %227 = arith.addf %226, %225 : vector<2x8xf32>
    %228 = arith.divf %226, %227 : vector<2x8xf32>
    %229 = vector.extract_strided_slice %171 {offsets = [0, 16], sizes = [2, 8], strides = [1, 1]} : vector<2x24xf32> to vector<2x8xf32>
    %230 = vector.extract_strided_slice %212 {offsets = [0, 16], sizes = [2, 8], strides = [1, 1]} : vector<2x24xf32> to vector<2x8xf32>
    %231 = arith.mulf %220, %230 : vector<2x8xf32>
    %232 = arith.addf %229, %231 : vector<2x8xf32>
    %233 = math.tanh %232 : vector<2x8xf32>
    %cst_23 = arith.constant 1.000000e+00 : f32
    %234 = vector.broadcast %cst_23 : f32 to vector<2x8xf32>
    %235 = arith.subf %234, %228 : vector<2x8xf32>
    %236 = arith.mulf %235, %233 : vector<2x8xf32>
    %237 = arith.mulf %228, %162 : vector<2x8xf32>
    %238 = arith.addf %236, %237 : vector<2x8xf32>
    %c2 = arith.constant 2 : index
    %239 = memref.load %arg3[%c2] : memref<8xf32, #tpu.memory_space<smem>>
    %240 = vector.broadcast %239 : f32 to vector<2x8xf32>
    %241 = arith.mulf %240, %238 : vector<2x8xf32>
    %242 = arith.addf %166, %241 : vector<2x8xf32>
    %c2_24 = arith.constant 2 : index
    %243 = memref.load %arg4[%c2_24] : memref<8xf32, #tpu.memory_space<smem>>
    %244 = vector.broadcast %243 : f32 to vector<2x8xf32>
    %245 = arith.mulf %244, %238 : vector<2x8xf32>
    %246 = arith.addf %170, %245 : vector<2x8xf32>
    %247 = vector.extract_strided_slice %5 {offsets = [6, 0], sizes = [2, 24], strides = [1, 1]} : vector<16x24xf32> to vector<2x24xf32>
    %248 = vector.extract_strided_slice %238 {offsets = [0, 0], sizes = [2, 1], strides = [1, 1]} : vector<2x8xf32> to vector<2x1xf32>
    %249 = vector.broadcast %248 : vector<2x1xf32> to vector<2x24xf32>
    %250 = vector.broadcast %8 : vector<1x24xf32> to vector<2x24xf32>
    %251 = arith.mulf %249, %250 : vector<2x24xf32>
    %252 = vector.extract_strided_slice %238 {offsets = [0, 1], sizes = [2, 1], strides = [1, 1]} : vector<2x8xf32> to vector<2x1xf32>
    %253 = vector.broadcast %252 : vector<2x1xf32> to vector<2x24xf32>
    %254 = vector.broadcast %9 : vector<1x24xf32> to vector<2x24xf32>
    %255 = arith.mulf %253, %254 : vector<2x24xf32>
    %256 = vector.extract_strided_slice %238 {offsets = [0, 2], sizes = [2, 1], strides = [1, 1]} : vector<2x8xf32> to vector<2x1xf32>
    %257 = vector.broadcast %256 : vector<2x1xf32> to vector<2x24xf32>
    %258 = vector.broadcast %10 : vector<1x24xf32> to vector<2x24xf32>
    %259 = arith.mulf %257, %258 : vector<2x24xf32>
    %260 = vector.extract_strided_slice %238 {offsets = [0, 3], sizes = [2, 1], strides = [1, 1]} : vector<2x8xf32> to vector<2x1xf32>
    %261 = vector.broadcast %260 : vector<2x1xf32> to vector<2x24xf32>
    %262 = vector.broadcast %11 : vector<1x24xf32> to vector<2x24xf32>
    %263 = arith.mulf %261, %262 : vector<2x24xf32>
    %264 = vector.extract_strided_slice %238 {offsets = [0, 4], sizes = [2, 1], strides = [1, 1]} : vector<2x8xf32> to vector<2x1xf32>
    %265 = vector.broadcast %264 : vector<2x1xf32> to vector<2x24xf32>
    %266 = vector.broadcast %12 : vector<1x24xf32> to vector<2x24xf32>
    %267 = arith.mulf %265, %266 : vector<2x24xf32>
    %268 = vector.extract_strided_slice %238 {offsets = [0, 5], sizes = [2, 1], strides = [1, 1]} : vector<2x8xf32> to vector<2x1xf32>
    %269 = vector.broadcast %268 : vector<2x1xf32> to vector<2x24xf32>
    %270 = vector.broadcast %13 : vector<1x24xf32> to vector<2x24xf32>
    %271 = arith.mulf %269, %270 : vector<2x24xf32>
    %272 = vector.extract_strided_slice %238 {offsets = [0, 6], sizes = [2, 1], strides = [1, 1]} : vector<2x8xf32> to vector<2x1xf32>
    %273 = vector.broadcast %272 : vector<2x1xf32> to vector<2x24xf32>
    %274 = vector.broadcast %14 : vector<1x24xf32> to vector<2x24xf32>
    %275 = arith.mulf %273, %274 : vector<2x24xf32>
    %276 = vector.extract_strided_slice %238 {offsets = [0, 7], sizes = [2, 1], strides = [1, 1]} : vector<2x8xf32> to vector<2x1xf32>
    %277 = vector.broadcast %276 : vector<2x1xf32> to vector<2x24xf32>
    %278 = vector.broadcast %15 : vector<1x24xf32> to vector<2x24xf32>
    %279 = arith.mulf %277, %278 : vector<2x24xf32>
    %280 = arith.addf %251, %255 : vector<2x24xf32>
    %281 = arith.addf %259, %263 : vector<2x24xf32>
    %282 = arith.addf %267, %271 : vector<2x24xf32>
    %283 = arith.addf %275, %279 : vector<2x24xf32>
    %284 = arith.addf %280, %281 : vector<2x24xf32>
    %285 = arith.addf %282, %283 : vector<2x24xf32>
    %286 = arith.addf %284, %285 : vector<2x24xf32>
    %287 = vector.broadcast %7 : vector<1x24xf32> to vector<2x24xf32>
    %288 = arith.addf %287, %286 : vector<2x24xf32>
    %289 = vector.extract_strided_slice %247 {offsets = [0, 0], sizes = [2, 8], strides = [1, 1]} : vector<2x24xf32> to vector<2x8xf32>
    %290 = vector.extract_strided_slice %288 {offsets = [0, 0], sizes = [2, 8], strides = [1, 1]} : vector<2x24xf32> to vector<2x8xf32>
    %291 = arith.addf %289, %290 : vector<2x8xf32>
    %292 = arith.negf %291 : vector<2x8xf32>
    %293 = math.exp %292 : vector<2x8xf32>
    %cst_25 = arith.constant 1.000000e+00 : f32
    %294 = vector.broadcast %cst_25 : f32 to vector<2x8xf32>
    %295 = arith.addf %294, %293 : vector<2x8xf32>
    %296 = arith.divf %294, %295 : vector<2x8xf32>
    %297 = vector.extract_strided_slice %247 {offsets = [0, 8], sizes = [2, 8], strides = [1, 1]} : vector<2x24xf32> to vector<2x8xf32>
    %298 = vector.extract_strided_slice %288 {offsets = [0, 8], sizes = [2, 8], strides = [1, 1]} : vector<2x24xf32> to vector<2x8xf32>
    %299 = arith.addf %297, %298 : vector<2x8xf32>
    %300 = arith.negf %299 : vector<2x8xf32>
    %301 = math.exp %300 : vector<2x8xf32>
    %cst_26 = arith.constant 1.000000e+00 : f32
    %302 = vector.broadcast %cst_26 : f32 to vector<2x8xf32>
    %303 = arith.addf %302, %301 : vector<2x8xf32>
    %304 = arith.divf %302, %303 : vector<2x8xf32>
    %305 = vector.extract_strided_slice %247 {offsets = [0, 16], sizes = [2, 8], strides = [1, 1]} : vector<2x24xf32> to vector<2x8xf32>
    %306 = vector.extract_strided_slice %288 {offsets = [0, 16], sizes = [2, 8], strides = [1, 1]} : vector<2x24xf32> to vector<2x8xf32>
    %307 = arith.mulf %296, %306 : vector<2x8xf32>
    %308 = arith.addf %305, %307 : vector<2x8xf32>
    %309 = math.tanh %308 : vector<2x8xf32>
    %cst_27 = arith.constant 1.000000e+00 : f32
    %310 = vector.broadcast %cst_27 : f32 to vector<2x8xf32>
    %311 = arith.subf %310, %304 : vector<2x8xf32>
    %312 = arith.mulf %311, %309 : vector<2x8xf32>
    %313 = arith.mulf %304, %238 : vector<2x8xf32>
    %314 = arith.addf %312, %313 : vector<2x8xf32>
    %c3 = arith.constant 3 : index
    %315 = memref.load %arg3[%c3] : memref<8xf32, #tpu.memory_space<smem>>
    %316 = vector.broadcast %315 : f32 to vector<2x8xf32>
    %317 = arith.mulf %316, %314 : vector<2x8xf32>
    %318 = arith.addf %242, %317 : vector<2x8xf32>
    %c3_28 = arith.constant 3 : index
    %319 = memref.load %arg4[%c3_28] : memref<8xf32, #tpu.memory_space<smem>>
    %320 = vector.broadcast %319 : f32 to vector<2x8xf32>
    %321 = arith.mulf %320, %314 : vector<2x8xf32>
    %322 = arith.addf %246, %321 : vector<2x8xf32>
    %323 = vector.extract_strided_slice %5 {offsets = [8, 0], sizes = [2, 24], strides = [1, 1]} : vector<16x24xf32> to vector<2x24xf32>
    %324 = vector.extract_strided_slice %314 {offsets = [0, 0], sizes = [2, 1], strides = [1, 1]} : vector<2x8xf32> to vector<2x1xf32>
    %325 = vector.broadcast %324 : vector<2x1xf32> to vector<2x24xf32>
    %326 = vector.broadcast %8 : vector<1x24xf32> to vector<2x24xf32>
    %327 = arith.mulf %325, %326 : vector<2x24xf32>
    %328 = vector.extract_strided_slice %314 {offsets = [0, 1], sizes = [2, 1], strides = [1, 1]} : vector<2x8xf32> to vector<2x1xf32>
    %329 = vector.broadcast %328 : vector<2x1xf32> to vector<2x24xf32>
    %330 = vector.broadcast %9 : vector<1x24xf32> to vector<2x24xf32>
    %331 = arith.mulf %329, %330 : vector<2x24xf32>
    %332 = vector.extract_strided_slice %314 {offsets = [0, 2], sizes = [2, 1], strides = [1, 1]} : vector<2x8xf32> to vector<2x1xf32>
    %333 = vector.broadcast %332 : vector<2x1xf32> to vector<2x24xf32>
    %334 = vector.broadcast %10 : vector<1x24xf32> to vector<2x24xf32>
    %335 = arith.mulf %333, %334 : vector<2x24xf32>
    %336 = vector.extract_strided_slice %314 {offsets = [0, 3], sizes = [2, 1], strides = [1, 1]} : vector<2x8xf32> to vector<2x1xf32>
    %337 = vector.broadcast %336 : vector<2x1xf32> to vector<2x24xf32>
    %338 = vector.broadcast %11 : vector<1x24xf32> to vector<2x24xf32>
    %339 = arith.mulf %337, %338 : vector<2x24xf32>
    %340 = vector.extract_strided_slice %314 {offsets = [0, 4], sizes = [2, 1], strides = [1, 1]} : vector<2x8xf32> to vector<2x1xf32>
    %341 = vector.broadcast %340 : vector<2x1xf32> to vector<2x24xf32>
    %342 = vector.broadcast %12 : vector<1x24xf32> to vector<2x24xf32>
    %343 = arith.mulf %341, %342 : vector<2x24xf32>
    %344 = vector.extract_strided_slice %314 {offsets = [0, 5], sizes = [2, 1], strides = [1, 1]} : vector<2x8xf32> to vector<2x1xf32>
    %345 = vector.broadcast %344 : vector<2x1xf32> to vector<2x24xf32>
    %346 = vector.broadcast %13 : vector<1x24xf32> to vector<2x24xf32>
    %347 = arith.mulf %345, %346 : vector<2x24xf32>
    %348 = vector.extract_strided_slice %314 {offsets = [0, 6], sizes = [2, 1], strides = [1, 1]} : vector<2x8xf32> to vector<2x1xf32>
    %349 = vector.broadcast %348 : vector<2x1xf32> to vector<2x24xf32>
    %350 = vector.broadcast %14 : vector<1x24xf32> to vector<2x24xf32>
    %351 = arith.mulf %349, %350 : vector<2x24xf32>
    %352 = vector.extract_strided_slice %314 {offsets = [0, 7], sizes = [2, 1], strides = [1, 1]} : vector<2x8xf32> to vector<2x1xf32>
    %353 = vector.broadcast %352 : vector<2x1xf32> to vector<2x24xf32>
    %354 = vector.broadcast %15 : vector<1x24xf32> to vector<2x24xf32>
    %355 = arith.mulf %353, %354 : vector<2x24xf32>
    %356 = arith.addf %327, %331 : vector<2x24xf32>
    %357 = arith.addf %335, %339 : vector<2x24xf32>
    %358 = arith.addf %343, %347 : vector<2x24xf32>
    %359 = arith.addf %351, %355 : vector<2x24xf32>
    %360 = arith.addf %356, %357 : vector<2x24xf32>
    %361 = arith.addf %358, %359 : vector<2x24xf32>
    %362 = arith.addf %360, %361 : vector<2x24xf32>
    %363 = vector.broadcast %7 : vector<1x24xf32> to vector<2x24xf32>
    %364 = arith.addf %363, %362 : vector<2x24xf32>
    %365 = vector.extract_strided_slice %323 {offsets = [0, 0], sizes = [2, 8], strides = [1, 1]} : vector<2x24xf32> to vector<2x8xf32>
    %366 = vector.extract_strided_slice %364 {offsets = [0, 0], sizes = [2, 8], strides = [1, 1]} : vector<2x24xf32> to vector<2x8xf32>
    %367 = arith.addf %365, %366 : vector<2x8xf32>
    %368 = arith.negf %367 : vector<2x8xf32>
    %369 = math.exp %368 : vector<2x8xf32>
    %cst_29 = arith.constant 1.000000e+00 : f32
    %370 = vector.broadcast %cst_29 : f32 to vector<2x8xf32>
    %371 = arith.addf %370, %369 : vector<2x8xf32>
    %372 = arith.divf %370, %371 : vector<2x8xf32>
    %373 = vector.extract_strided_slice %323 {offsets = [0, 8], sizes = [2, 8], strides = [1, 1]} : vector<2x24xf32> to vector<2x8xf32>
    %374 = vector.extract_strided_slice %364 {offsets = [0, 8], sizes = [2, 8], strides = [1, 1]} : vector<2x24xf32> to vector<2x8xf32>
    %375 = arith.addf %373, %374 : vector<2x8xf32>
    %376 = arith.negf %375 : vector<2x8xf32>
    %377 = math.exp %376 : vector<2x8xf32>
    %cst_30 = arith.constant 1.000000e+00 : f32
    %378 = vector.broadcast %cst_30 : f32 to vector<2x8xf32>
    %379 = arith.addf %378, %377 : vector<2x8xf32>
    %380 = arith.divf %378, %379 : vector<2x8xf32>
    %381 = vector.extract_strided_slice %323 {offsets = [0, 16], sizes = [2, 8], strides = [1, 1]} : vector<2x24xf32> to vector<2x8xf32>
    %382 = vector.extract_strided_slice %364 {offsets = [0, 16], sizes = [2, 8], strides = [1, 1]} : vector<2x24xf32> to vector<2x8xf32>
    %383 = arith.mulf %372, %382 : vector<2x8xf32>
    %384 = arith.addf %381, %383 : vector<2x8xf32>
    %385 = math.tanh %384 : vector<2x8xf32>
    %cst_31 = arith.constant 1.000000e+00 : f32
    %386 = vector.broadcast %cst_31 : f32 to vector<2x8xf32>
    %387 = arith.subf %386, %380 : vector<2x8xf32>
    %388 = arith.mulf %387, %385 : vector<2x8xf32>
    %389 = arith.mulf %380, %314 : vector<2x8xf32>
    %390 = arith.addf %388, %389 : vector<2x8xf32>
    %c4 = arith.constant 4 : index
    %391 = memref.load %arg3[%c4] : memref<8xf32, #tpu.memory_space<smem>>
    %392 = vector.broadcast %391 : f32 to vector<2x8xf32>
    %393 = arith.mulf %392, %390 : vector<2x8xf32>
    %394 = arith.addf %318, %393 : vector<2x8xf32>
    %c4_32 = arith.constant 4 : index
    %395 = memref.load %arg4[%c4_32] : memref<8xf32, #tpu.memory_space<smem>>
    %396 = vector.broadcast %395 : f32 to vector<2x8xf32>
    %397 = arith.mulf %396, %390 : vector<2x8xf32>
    %398 = arith.addf %322, %397 : vector<2x8xf32>
    %399 = vector.extract_strided_slice %5 {offsets = [10, 0], sizes = [2, 24], strides = [1, 1]} : vector<16x24xf32> to vector<2x24xf32>
    %400 = vector.extract_strided_slice %390 {offsets = [0, 0], sizes = [2, 1], strides = [1, 1]} : vector<2x8xf32> to vector<2x1xf32>
    %401 = vector.broadcast %400 : vector<2x1xf32> to vector<2x24xf32>
    %402 = vector.broadcast %8 : vector<1x24xf32> to vector<2x24xf32>
    %403 = arith.mulf %401, %402 : vector<2x24xf32>
    %404 = vector.extract_strided_slice %390 {offsets = [0, 1], sizes = [2, 1], strides = [1, 1]} : vector<2x8xf32> to vector<2x1xf32>
    %405 = vector.broadcast %404 : vector<2x1xf32> to vector<2x24xf32>
    %406 = vector.broadcast %9 : vector<1x24xf32> to vector<2x24xf32>
    %407 = arith.mulf %405, %406 : vector<2x24xf32>
    %408 = vector.extract_strided_slice %390 {offsets = [0, 2], sizes = [2, 1], strides = [1, 1]} : vector<2x8xf32> to vector<2x1xf32>
    %409 = vector.broadcast %408 : vector<2x1xf32> to vector<2x24xf32>
    %410 = vector.broadcast %10 : vector<1x24xf32> to vector<2x24xf32>
    %411 = arith.mulf %409, %410 : vector<2x24xf32>
    %412 = vector.extract_strided_slice %390 {offsets = [0, 3], sizes = [2, 1], strides = [1, 1]} : vector<2x8xf32> to vector<2x1xf32>
    %413 = vector.broadcast %412 : vector<2x1xf32> to vector<2x24xf32>
    %414 = vector.broadcast %11 : vector<1x24xf32> to vector<2x24xf32>
    %415 = arith.mulf %413, %414 : vector<2x24xf32>
    %416 = vector.extract_strided_slice %390 {offsets = [0, 4], sizes = [2, 1], strides = [1, 1]} : vector<2x8xf32> to vector<2x1xf32>
    %417 = vector.broadcast %416 : vector<2x1xf32> to vector<2x24xf32>
    %418 = vector.broadcast %12 : vector<1x24xf32> to vector<2x24xf32>
    %419 = arith.mulf %417, %418 : vector<2x24xf32>
    %420 = vector.extract_strided_slice %390 {offsets = [0, 5], sizes = [2, 1], strides = [1, 1]} : vector<2x8xf32> to vector<2x1xf32>
    %421 = vector.broadcast %420 : vector<2x1xf32> to vector<2x24xf32>
    %422 = vector.broadcast %13 : vector<1x24xf32> to vector<2x24xf32>
    %423 = arith.mulf %421, %422 : vector<2x24xf32>
    %424 = vector.extract_strided_slice %390 {offsets = [0, 6], sizes = [2, 1], strides = [1, 1]} : vector<2x8xf32> to vector<2x1xf32>
    %425 = vector.broadcast %424 : vector<2x1xf32> to vector<2x24xf32>
    %426 = vector.broadcast %14 : vector<1x24xf32> to vector<2x24xf32>
    %427 = arith.mulf %425, %426 : vector<2x24xf32>
    %428 = vector.extract_strided_slice %390 {offsets = [0, 7], sizes = [2, 1], strides = [1, 1]} : vector<2x8xf32> to vector<2x1xf32>
    %429 = vector.broadcast %428 : vector<2x1xf32> to vector<2x24xf32>
    %430 = vector.broadcast %15 : vector<1x24xf32> to vector<2x24xf32>
    %431 = arith.mulf %429, %430 : vector<2x24xf32>
    %432 = arith.addf %403, %407 : vector<2x24xf32>
    %433 = arith.addf %411, %415 : vector<2x24xf32>
    %434 = arith.addf %419, %423 : vector<2x24xf32>
    %435 = arith.addf %427, %431 : vector<2x24xf32>
    %436 = arith.addf %432, %433 : vector<2x24xf32>
    %437 = arith.addf %434, %435 : vector<2x24xf32>
    %438 = arith.addf %436, %437 : vector<2x24xf32>
    %439 = vector.broadcast %7 : vector<1x24xf32> to vector<2x24xf32>
    %440 = arith.addf %439, %438 : vector<2x24xf32>
    %441 = vector.extract_strided_slice %399 {offsets = [0, 0], sizes = [2, 8], strides = [1, 1]} : vector<2x24xf32> to vector<2x8xf32>
    %442 = vector.extract_strided_slice %440 {offsets = [0, 0], sizes = [2, 8], strides = [1, 1]} : vector<2x24xf32> to vector<2x8xf32>
    %443 = arith.addf %441, %442 : vector<2x8xf32>
    %444 = arith.negf %443 : vector<2x8xf32>
    %445 = math.exp %444 : vector<2x8xf32>
    %cst_33 = arith.constant 1.000000e+00 : f32
    %446 = vector.broadcast %cst_33 : f32 to vector<2x8xf32>
    %447 = arith.addf %446, %445 : vector<2x8xf32>
    %448 = arith.divf %446, %447 : vector<2x8xf32>
    %449 = vector.extract_strided_slice %399 {offsets = [0, 8], sizes = [2, 8], strides = [1, 1]} : vector<2x24xf32> to vector<2x8xf32>
    %450 = vector.extract_strided_slice %440 {offsets = [0, 8], sizes = [2, 8], strides = [1, 1]} : vector<2x24xf32> to vector<2x8xf32>
    %451 = arith.addf %449, %450 : vector<2x8xf32>
    %452 = arith.negf %451 : vector<2x8xf32>
    %453 = math.exp %452 : vector<2x8xf32>
    %cst_34 = arith.constant 1.000000e+00 : f32
    %454 = vector.broadcast %cst_34 : f32 to vector<2x8xf32>
    %455 = arith.addf %454, %453 : vector<2x8xf32>
    %456 = arith.divf %454, %455 : vector<2x8xf32>
    %457 = vector.extract_strided_slice %399 {offsets = [0, 16], sizes = [2, 8], strides = [1, 1]} : vector<2x24xf32> to vector<2x8xf32>
    %458 = vector.extract_strided_slice %440 {offsets = [0, 16], sizes = [2, 8], strides = [1, 1]} : vector<2x24xf32> to vector<2x8xf32>
    %459 = arith.mulf %448, %458 : vector<2x8xf32>
    %460 = arith.addf %457, %459 : vector<2x8xf32>
    %461 = math.tanh %460 : vector<2x8xf32>
    %cst_35 = arith.constant 1.000000e+00 : f32
    %462 = vector.broadcast %cst_35 : f32 to vector<2x8xf32>
    %463 = arith.subf %462, %456 : vector<2x8xf32>
    %464 = arith.mulf %463, %461 : vector<2x8xf32>
    %465 = arith.mulf %456, %390 : vector<2x8xf32>
    %466 = arith.addf %464, %465 : vector<2x8xf32>
    %c5 = arith.constant 5 : index
    %467 = memref.load %arg3[%c5] : memref<8xf32, #tpu.memory_space<smem>>
    %468 = vector.broadcast %467 : f32 to vector<2x8xf32>
    %469 = arith.mulf %468, %466 : vector<2x8xf32>
    %470 = arith.addf %394, %469 : vector<2x8xf32>
    %c5_36 = arith.constant 5 : index
    %471 = memref.load %arg4[%c5_36] : memref<8xf32, #tpu.memory_space<smem>>
    %472 = vector.broadcast %471 : f32 to vector<2x8xf32>
    %473 = arith.mulf %472, %466 : vector<2x8xf32>
    %474 = arith.addf %398, %473 : vector<2x8xf32>
    %475 = vector.extract_strided_slice %5 {offsets = [12, 0], sizes = [2, 24], strides = [1, 1]} : vector<16x24xf32> to vector<2x24xf32>
    %476 = vector.extract_strided_slice %466 {offsets = [0, 0], sizes = [2, 1], strides = [1, 1]} : vector<2x8xf32> to vector<2x1xf32>
    %477 = vector.broadcast %476 : vector<2x1xf32> to vector<2x24xf32>
    %478 = vector.broadcast %8 : vector<1x24xf32> to vector<2x24xf32>
    %479 = arith.mulf %477, %478 : vector<2x24xf32>
    %480 = vector.extract_strided_slice %466 {offsets = [0, 1], sizes = [2, 1], strides = [1, 1]} : vector<2x8xf32> to vector<2x1xf32>
    %481 = vector.broadcast %480 : vector<2x1xf32> to vector<2x24xf32>
    %482 = vector.broadcast %9 : vector<1x24xf32> to vector<2x24xf32>
    %483 = arith.mulf %481, %482 : vector<2x24xf32>
    %484 = vector.extract_strided_slice %466 {offsets = [0, 2], sizes = [2, 1], strides = [1, 1]} : vector<2x8xf32> to vector<2x1xf32>
    %485 = vector.broadcast %484 : vector<2x1xf32> to vector<2x24xf32>
    %486 = vector.broadcast %10 : vector<1x24xf32> to vector<2x24xf32>
    %487 = arith.mulf %485, %486 : vector<2x24xf32>
    %488 = vector.extract_strided_slice %466 {offsets = [0, 3], sizes = [2, 1], strides = [1, 1]} : vector<2x8xf32> to vector<2x1xf32>
    %489 = vector.broadcast %488 : vector<2x1xf32> to vector<2x24xf32>
    %490 = vector.broadcast %11 : vector<1x24xf32> to vector<2x24xf32>
    %491 = arith.mulf %489, %490 : vector<2x24xf32>
    %492 = vector.extract_strided_slice %466 {offsets = [0, 4], sizes = [2, 1], strides = [1, 1]} : vector<2x8xf32> to vector<2x1xf32>
    %493 = vector.broadcast %492 : vector<2x1xf32> to vector<2x24xf32>
    %494 = vector.broadcast %12 : vector<1x24xf32> to vector<2x24xf32>
    %495 = arith.mulf %493, %494 : vector<2x24xf32>
    %496 = vector.extract_strided_slice %466 {offsets = [0, 5], sizes = [2, 1], strides = [1, 1]} : vector<2x8xf32> to vector<2x1xf32>
    %497 = vector.broadcast %496 : vector<2x1xf32> to vector<2x24xf32>
    %498 = vector.broadcast %13 : vector<1x24xf32> to vector<2x24xf32>
    %499 = arith.mulf %497, %498 : vector<2x24xf32>
    %500 = vector.extract_strided_slice %466 {offsets = [0, 6], sizes = [2, 1], strides = [1, 1]} : vector<2x8xf32> to vector<2x1xf32>
    %501 = vector.broadcast %500 : vector<2x1xf32> to vector<2x24xf32>
    %502 = vector.broadcast %14 : vector<1x24xf32> to vector<2x24xf32>
    %503 = arith.mulf %501, %502 : vector<2x24xf32>
    %504 = vector.extract_strided_slice %466 {offsets = [0, 7], sizes = [2, 1], strides = [1, 1]} : vector<2x8xf32> to vector<2x1xf32>
    %505 = vector.broadcast %504 : vector<2x1xf32> to vector<2x24xf32>
    %506 = vector.broadcast %15 : vector<1x24xf32> to vector<2x24xf32>
    %507 = arith.mulf %505, %506 : vector<2x24xf32>
    %508 = arith.addf %479, %483 : vector<2x24xf32>
    %509 = arith.addf %487, %491 : vector<2x24xf32>
    %510 = arith.addf %495, %499 : vector<2x24xf32>
    %511 = arith.addf %503, %507 : vector<2x24xf32>
    %512 = arith.addf %508, %509 : vector<2x24xf32>
    %513 = arith.addf %510, %511 : vector<2x24xf32>
    %514 = arith.addf %512, %513 : vector<2x24xf32>
    %515 = vector.broadcast %7 : vector<1x24xf32> to vector<2x24xf32>
    %516 = arith.addf %515, %514 : vector<2x24xf32>
    %517 = vector.extract_strided_slice %475 {offsets = [0, 0], sizes = [2, 8], strides = [1, 1]} : vector<2x24xf32> to vector<2x8xf32>
    %518 = vector.extract_strided_slice %516 {offsets = [0, 0], sizes = [2, 8], strides = [1, 1]} : vector<2x24xf32> to vector<2x8xf32>
    %519 = arith.addf %517, %518 : vector<2x8xf32>
    %520 = arith.negf %519 : vector<2x8xf32>
    %521 = math.exp %520 : vector<2x8xf32>
    %cst_37 = arith.constant 1.000000e+00 : f32
    %522 = vector.broadcast %cst_37 : f32 to vector<2x8xf32>
    %523 = arith.addf %522, %521 : vector<2x8xf32>
    %524 = arith.divf %522, %523 : vector<2x8xf32>
    %525 = vector.extract_strided_slice %475 {offsets = [0, 8], sizes = [2, 8], strides = [1, 1]} : vector<2x24xf32> to vector<2x8xf32>
    %526 = vector.extract_strided_slice %516 {offsets = [0, 8], sizes = [2, 8], strides = [1, 1]} : vector<2x24xf32> to vector<2x8xf32>
    %527 = arith.addf %525, %526 : vector<2x8xf32>
    %528 = arith.negf %527 : vector<2x8xf32>
    %529 = math.exp %528 : vector<2x8xf32>
    %cst_38 = arith.constant 1.000000e+00 : f32
    %530 = vector.broadcast %cst_38 : f32 to vector<2x8xf32>
    %531 = arith.addf %530, %529 : vector<2x8xf32>
    %532 = arith.divf %530, %531 : vector<2x8xf32>
    %533 = vector.extract_strided_slice %475 {offsets = [0, 16], sizes = [2, 8], strides = [1, 1]} : vector<2x24xf32> to vector<2x8xf32>
    %534 = vector.extract_strided_slice %516 {offsets = [0, 16], sizes = [2, 8], strides = [1, 1]} : vector<2x24xf32> to vector<2x8xf32>
    %535 = arith.mulf %524, %534 : vector<2x8xf32>
    %536 = arith.addf %533, %535 : vector<2x8xf32>
    %537 = math.tanh %536 : vector<2x8xf32>
    %cst_39 = arith.constant 1.000000e+00 : f32
    %538 = vector.broadcast %cst_39 : f32 to vector<2x8xf32>
    %539 = arith.subf %538, %532 : vector<2x8xf32>
    %540 = arith.mulf %539, %537 : vector<2x8xf32>
    %541 = arith.mulf %532, %466 : vector<2x8xf32>
    %542 = arith.addf %540, %541 : vector<2x8xf32>
    %c6 = arith.constant 6 : index
    %543 = memref.load %arg3[%c6] : memref<8xf32, #tpu.memory_space<smem>>
    %544 = vector.broadcast %543 : f32 to vector<2x8xf32>
    %545 = arith.mulf %544, %542 : vector<2x8xf32>
    %546 = arith.addf %470, %545 : vector<2x8xf32>
    %c6_40 = arith.constant 6 : index
    %547 = memref.load %arg4[%c6_40] : memref<8xf32, #tpu.memory_space<smem>>
    %548 = vector.broadcast %547 : f32 to vector<2x8xf32>
    %549 = arith.mulf %548, %542 : vector<2x8xf32>
    %550 = arith.addf %474, %549 : vector<2x8xf32>
    %551 = vector.extract_strided_slice %5 {offsets = [14, 0], sizes = [2, 24], strides = [1, 1]} : vector<16x24xf32> to vector<2x24xf32>
    %552 = vector.extract_strided_slice %542 {offsets = [0, 0], sizes = [2, 1], strides = [1, 1]} : vector<2x8xf32> to vector<2x1xf32>
    %553 = vector.broadcast %552 : vector<2x1xf32> to vector<2x24xf32>
    %554 = vector.broadcast %8 : vector<1x24xf32> to vector<2x24xf32>
    %555 = arith.mulf %553, %554 : vector<2x24xf32>
    %556 = vector.extract_strided_slice %542 {offsets = [0, 1], sizes = [2, 1], strides = [1, 1]} : vector<2x8xf32> to vector<2x1xf32>
    %557 = vector.broadcast %556 : vector<2x1xf32> to vector<2x24xf32>
    %558 = vector.broadcast %9 : vector<1x24xf32> to vector<2x24xf32>
    %559 = arith.mulf %557, %558 : vector<2x24xf32>
    %560 = vector.extract_strided_slice %542 {offsets = [0, 2], sizes = [2, 1], strides = [1, 1]} : vector<2x8xf32> to vector<2x1xf32>
    %561 = vector.broadcast %560 : vector<2x1xf32> to vector<2x24xf32>
    %562 = vector.broadcast %10 : vector<1x24xf32> to vector<2x24xf32>
    %563 = arith.mulf %561, %562 : vector<2x24xf32>
    %564 = vector.extract_strided_slice %542 {offsets = [0, 3], sizes = [2, 1], strides = [1, 1]} : vector<2x8xf32> to vector<2x1xf32>
    %565 = vector.broadcast %564 : vector<2x1xf32> to vector<2x24xf32>
    %566 = vector.broadcast %11 : vector<1x24xf32> to vector<2x24xf32>
    %567 = arith.mulf %565, %566 : vector<2x24xf32>
    %568 = vector.extract_strided_slice %542 {offsets = [0, 4], sizes = [2, 1], strides = [1, 1]} : vector<2x8xf32> to vector<2x1xf32>
    %569 = vector.broadcast %568 : vector<2x1xf32> to vector<2x24xf32>
    %570 = vector.broadcast %12 : vector<1x24xf32> to vector<2x24xf32>
    %571 = arith.mulf %569, %570 : vector<2x24xf32>
    %572 = vector.extract_strided_slice %542 {offsets = [0, 5], sizes = [2, 1], strides = [1, 1]} : vector<2x8xf32> to vector<2x1xf32>
    %573 = vector.broadcast %572 : vector<2x1xf32> to vector<2x24xf32>
    %574 = vector.broadcast %13 : vector<1x24xf32> to vector<2x24xf32>
    %575 = arith.mulf %573, %574 : vector<2x24xf32>
    %576 = vector.extract_strided_slice %542 {offsets = [0, 6], sizes = [2, 1], strides = [1, 1]} : vector<2x8xf32> to vector<2x1xf32>
    %577 = vector.broadcast %576 : vector<2x1xf32> to vector<2x24xf32>
    %578 = vector.broadcast %14 : vector<1x24xf32> to vector<2x24xf32>
    %579 = arith.mulf %577, %578 : vector<2x24xf32>
    %580 = vector.extract_strided_slice %542 {offsets = [0, 7], sizes = [2, 1], strides = [1, 1]} : vector<2x8xf32> to vector<2x1xf32>
    %581 = vector.broadcast %580 : vector<2x1xf32> to vector<2x24xf32>
    %582 = vector.broadcast %15 : vector<1x24xf32> to vector<2x24xf32>
    %583 = arith.mulf %581, %582 : vector<2x24xf32>
    %584 = arith.addf %555, %559 : vector<2x24xf32>
    %585 = arith.addf %563, %567 : vector<2x24xf32>
    %586 = arith.addf %571, %575 : vector<2x24xf32>
    %587 = arith.addf %579, %583 : vector<2x24xf32>
    %588 = arith.addf %584, %585 : vector<2x24xf32>
    %589 = arith.addf %586, %587 : vector<2x24xf32>
    %590 = arith.addf %588, %589 : vector<2x24xf32>
    %591 = vector.broadcast %7 : vector<1x24xf32> to vector<2x24xf32>
    %592 = arith.addf %591, %590 : vector<2x24xf32>
    %593 = vector.extract_strided_slice %551 {offsets = [0, 0], sizes = [2, 8], strides = [1, 1]} : vector<2x24xf32> to vector<2x8xf32>
    %594 = vector.extract_strided_slice %592 {offsets = [0, 0], sizes = [2, 8], strides = [1, 1]} : vector<2x24xf32> to vector<2x8xf32>
    %595 = arith.addf %593, %594 : vector<2x8xf32>
    %596 = arith.negf %595 : vector<2x8xf32>
    %597 = math.exp %596 : vector<2x8xf32>
    %cst_41 = arith.constant 1.000000e+00 : f32
    %598 = vector.broadcast %cst_41 : f32 to vector<2x8xf32>
    %599 = arith.addf %598, %597 : vector<2x8xf32>
    %600 = arith.divf %598, %599 : vector<2x8xf32>
    %601 = vector.extract_strided_slice %551 {offsets = [0, 8], sizes = [2, 8], strides = [1, 1]} : vector<2x24xf32> to vector<2x8xf32>
    %602 = vector.extract_strided_slice %592 {offsets = [0, 8], sizes = [2, 8], strides = [1, 1]} : vector<2x24xf32> to vector<2x8xf32>
    %603 = arith.addf %601, %602 : vector<2x8xf32>
    %604 = arith.negf %603 : vector<2x8xf32>
    %605 = math.exp %604 : vector<2x8xf32>
    %cst_42 = arith.constant 1.000000e+00 : f32
    %606 = vector.broadcast %cst_42 : f32 to vector<2x8xf32>
    %607 = arith.addf %606, %605 : vector<2x8xf32>
    %608 = arith.divf %606, %607 : vector<2x8xf32>
    %609 = vector.extract_strided_slice %551 {offsets = [0, 16], sizes = [2, 8], strides = [1, 1]} : vector<2x24xf32> to vector<2x8xf32>
    %610 = vector.extract_strided_slice %592 {offsets = [0, 16], sizes = [2, 8], strides = [1, 1]} : vector<2x24xf32> to vector<2x8xf32>
    %611 = arith.mulf %600, %610 : vector<2x8xf32>
    %612 = arith.addf %609, %611 : vector<2x8xf32>
    %613 = math.tanh %612 : vector<2x8xf32>
    %cst_43 = arith.constant 1.000000e+00 : f32
    %614 = vector.broadcast %cst_43 : f32 to vector<2x8xf32>
    %615 = arith.subf %614, %608 : vector<2x8xf32>
    %616 = arith.mulf %615, %613 : vector<2x8xf32>
    %617 = arith.mulf %608, %542 : vector<2x8xf32>
    %618 = arith.addf %616, %617 : vector<2x8xf32>
    %c7 = arith.constant 7 : index
    %619 = memref.load %arg3[%c7] : memref<8xf32, #tpu.memory_space<smem>>
    %620 = vector.broadcast %619 : f32 to vector<2x8xf32>
    %621 = arith.mulf %620, %618 : vector<2x8xf32>
    %622 = arith.addf %546, %621 : vector<2x8xf32>
    %c7_44 = arith.constant 7 : index
    %623 = memref.load %arg4[%c7_44] : memref<8xf32, #tpu.memory_space<smem>>
    %624 = vector.broadcast %623 : f32 to vector<2x8xf32>
    %625 = arith.mulf %624, %618 : vector<2x8xf32>
    %626 = arith.addf %550, %625 : vector<2x8xf32>
    %627 = tpu.iota {dimensions = array<i32: 0>} : vector<8x8xi32>
    %628 = tpu.iota {dimensions = array<i32: 1>} : vector<8x8xi32>
    %629 = arith.cmpi eq, %627, %628 : vector<8x8xi32>
    %630 = arith.extui %629 : vector<8x8xi1> to vector<8x8xi32>
    %631 = arith.sitofp %630 : vector<8x8xi32> to vector<8x8xf32>
    %cst_45 = arith.constant 0.000000e+00 : f32
    %632 = vector.broadcast %cst_45 : f32 to vector<8x8xf32>
    %cst_46 = arith.constant 0.000000e+00 : f32
    %633 = vector.broadcast %cst_46 : f32 to vector<8x8xf32>
    %634 = vector.extract_strided_slice %622 {offsets = [0, 0], sizes = [1, 8], strides = [1, 1]} : vector<2x8xf32> to vector<1x8xf32>
    %635 = vector.extract_strided_slice %626 {offsets = [0, 0], sizes = [1, 8], strides = [1, 1]} : vector<2x8xf32> to vector<1x8xf32>
    %636 = vector.broadcast %634 : vector<1x8xf32> to vector<8x8xf32>
    %637 = arith.mulf %636, %631 : vector<8x8xf32>
    %cst_47 = arith.constant dense<0.000000e+00> : vector<8xf32>
    %638 = vector.multi_reduction <add>, %637, %cst_47 [1] : vector<8x8xf32> to vector<8xf32>
    %639 = vector.shape_cast %638 : vector<8xf32> to vector<8x1xf32>
    %640 = vector.broadcast %635 : vector<1x8xf32> to vector<8x8xf32>
    %641 = arith.mulf %640, %631 : vector<8x8xf32>
    %cst_48 = arith.constant dense<0.000000e+00> : vector<8xf32>
    %642 = vector.multi_reduction <add>, %641, %cst_48 [1] : vector<8x8xf32> to vector<8xf32>
    %643 = vector.shape_cast %642 : vector<8xf32> to vector<8x1xf32>
    %644 = vector.broadcast %639 : vector<8x1xf32> to vector<8x8xf32>
    %645 = vector.broadcast %635 : vector<1x8xf32> to vector<8x8xf32>
    %646 = arith.addf %644, %645 : vector<8x8xf32>
    %cst_49 = arith.constant 0.000000e+00 : f32
    %647 = vector.broadcast %cst_49 : f32 to vector<8x8xf32>
    %648 = arith.cmpf ogt, %646, %647 : vector<8x8xf32>
    %cst_50 = arith.constant 2.000000e-01 : f32
    %649 = vector.broadcast %cst_50 : f32 to vector<8x8xf32>
    %650 = arith.mulf %649, %646 : vector<8x8xf32>
    %651 = arith.select %648, %646, %650 : vector<8x8xi1>, vector<8x8xf32>
    %cst_51 = arith.constant dense<0xFF800000> : vector<8xf32>
    %652 = vector.multi_reduction <maximumf>, %651, %cst_51 [1] : vector<8x8xf32> to vector<8xf32>
    %653 = vector.shape_cast %652 : vector<8xf32> to vector<8x1xf32>
    %654 = vector.broadcast %653 : vector<8x1xf32> to vector<8x8xf32>
    %655 = arith.subf %651, %654 : vector<8x8xf32>
    %656 = math.exp %655 : vector<8x8xf32>
    %cst_52 = arith.constant dense<0.000000e+00> : vector<8xf32>
    %657 = vector.multi_reduction <add>, %656, %cst_52 [1] : vector<8x8xf32> to vector<8xf32>
    %658 = vector.shape_cast %657 : vector<8xf32> to vector<8x1xf32>
    %659 = vector.broadcast %658 : vector<8x1xf32> to vector<8x8xf32>
    %660 = arith.divf %656, %659 : vector<8x8xf32>
    %661 = arith.addf %632, %660 : vector<8x8xf32>
    %662 = vector.broadcast %643 : vector<8x1xf32> to vector<8x8xf32>
    %663 = vector.broadcast %634 : vector<1x8xf32> to vector<8x8xf32>
    %664 = arith.addf %662, %663 : vector<8x8xf32>
    %cst_53 = arith.constant 0.000000e+00 : f32
    %665 = vector.broadcast %cst_53 : f32 to vector<8x8xf32>
    %666 = arith.cmpf ogt, %664, %665 : vector<8x8xf32>
    %cst_54 = arith.constant 2.000000e-01 : f32
    %667 = vector.broadcast %cst_54 : f32 to vector<8x8xf32>
    %668 = arith.mulf %667, %664 : vector<8x8xf32>
    %669 = arith.select %666, %664, %668 : vector<8x8xi1>, vector<8x8xf32>
    %cst_55 = arith.constant dense<0xFF800000> : vector<8xf32>
    %670 = vector.multi_reduction <maximumf>, %669, %cst_55 [0] : vector<8x8xf32> to vector<8xf32>
    %671 = vector.shape_cast %670 : vector<8xf32> to vector<1x8xf32>
    %672 = vector.broadcast %671 : vector<1x8xf32> to vector<8x8xf32>
    %673 = arith.subf %669, %672 : vector<8x8xf32>
    %674 = math.exp %673 : vector<8x8xf32>
    %cst_56 = arith.constant dense<0.000000e+00> : vector<8xf32>
    %675 = vector.multi_reduction <add>, %674, %cst_56 [0] : vector<8x8xf32> to vector<8xf32>
    %676 = vector.shape_cast %675 : vector<8xf32> to vector<1x8xf32>
    %677 = vector.broadcast %676 : vector<1x8xf32> to vector<8x8xf32>
    %678 = arith.divf %674, %677 : vector<8x8xf32>
    %679 = arith.addf %633, %678 : vector<8x8xf32>
    %680 = vector.extract_strided_slice %622 {offsets = [1, 0], sizes = [1, 8], strides = [1, 1]} : vector<2x8xf32> to vector<1x8xf32>
    %681 = vector.extract_strided_slice %626 {offsets = [1, 0], sizes = [1, 8], strides = [1, 1]} : vector<2x8xf32> to vector<1x8xf32>
    %682 = vector.broadcast %680 : vector<1x8xf32> to vector<8x8xf32>
    %683 = arith.mulf %682, %631 : vector<8x8xf32>
    %cst_57 = arith.constant dense<0.000000e+00> : vector<8xf32>
    %684 = vector.multi_reduction <add>, %683, %cst_57 [1] : vector<8x8xf32> to vector<8xf32>
    %685 = vector.shape_cast %684 : vector<8xf32> to vector<8x1xf32>
    %686 = vector.broadcast %681 : vector<1x8xf32> to vector<8x8xf32>
    %687 = arith.mulf %686, %631 : vector<8x8xf32>
    %cst_58 = arith.constant dense<0.000000e+00> : vector<8xf32>
    %688 = vector.multi_reduction <add>, %687, %cst_58 [1] : vector<8x8xf32> to vector<8xf32>
    %689 = vector.shape_cast %688 : vector<8xf32> to vector<8x1xf32>
    %690 = vector.broadcast %685 : vector<8x1xf32> to vector<8x8xf32>
    %691 = vector.broadcast %681 : vector<1x8xf32> to vector<8x8xf32>
    %692 = arith.addf %690, %691 : vector<8x8xf32>
    %cst_59 = arith.constant 0.000000e+00 : f32
    %693 = vector.broadcast %cst_59 : f32 to vector<8x8xf32>
    %694 = arith.cmpf ogt, %692, %693 : vector<8x8xf32>
    %cst_60 = arith.constant 2.000000e-01 : f32
    %695 = vector.broadcast %cst_60 : f32 to vector<8x8xf32>
    %696 = arith.mulf %695, %692 : vector<8x8xf32>
    %697 = arith.select %694, %692, %696 : vector<8x8xi1>, vector<8x8xf32>
    %cst_61 = arith.constant dense<0xFF800000> : vector<8xf32>
    %698 = vector.multi_reduction <maximumf>, %697, %cst_61 [1] : vector<8x8xf32> to vector<8xf32>
    %699 = vector.shape_cast %698 : vector<8xf32> to vector<8x1xf32>
    %700 = vector.broadcast %699 : vector<8x1xf32> to vector<8x8xf32>
    %701 = arith.subf %697, %700 : vector<8x8xf32>
    %702 = math.exp %701 : vector<8x8xf32>
    %cst_62 = arith.constant dense<0.000000e+00> : vector<8xf32>
    %703 = vector.multi_reduction <add>, %702, %cst_62 [1] : vector<8x8xf32> to vector<8xf32>
    %704 = vector.shape_cast %703 : vector<8xf32> to vector<8x1xf32>
    %705 = vector.broadcast %704 : vector<8x1xf32> to vector<8x8xf32>
    %706 = arith.divf %702, %705 : vector<8x8xf32>
    %707 = arith.addf %661, %706 : vector<8x8xf32>
    %708 = vector.broadcast %689 : vector<8x1xf32> to vector<8x8xf32>
    %709 = vector.broadcast %680 : vector<1x8xf32> to vector<8x8xf32>
    %710 = arith.addf %708, %709 : vector<8x8xf32>
    %cst_63 = arith.constant 0.000000e+00 : f32
    %711 = vector.broadcast %cst_63 : f32 to vector<8x8xf32>
    %712 = arith.cmpf ogt, %710, %711 : vector<8x8xf32>
    %cst_64 = arith.constant 2.000000e-01 : f32
    %713 = vector.broadcast %cst_64 : f32 to vector<8x8xf32>
    %714 = arith.mulf %713, %710 : vector<8x8xf32>
    %715 = arith.select %712, %710, %714 : vector<8x8xi1>, vector<8x8xf32>
    %cst_65 = arith.constant dense<0xFF800000> : vector<8xf32>
    %716 = vector.multi_reduction <maximumf>, %715, %cst_65 [0] : vector<8x8xf32> to vector<8xf32>
    %717 = vector.shape_cast %716 : vector<8xf32> to vector<1x8xf32>
    %718 = vector.broadcast %717 : vector<1x8xf32> to vector<8x8xf32>
    %719 = arith.subf %715, %718 : vector<8x8xf32>
    %720 = math.exp %719 : vector<8x8xf32>
    %cst_66 = arith.constant dense<0.000000e+00> : vector<8xf32>
    %721 = vector.multi_reduction <add>, %720, %cst_66 [0] : vector<8x8xf32> to vector<8xf32>
    %722 = vector.shape_cast %721 : vector<8xf32> to vector<1x8xf32>
    %723 = vector.broadcast %722 : vector<1x8xf32> to vector<8x8xf32>
    %724 = arith.divf %720, %723 : vector<8x8xf32>
    %725 = arith.addf %679, %724 : vector<8x8xf32>
    %cst_67 = arith.constant 5.000000e-01 : f32
    %726 = vector.broadcast %cst_67 : f32 to vector<8x8xf32>
    %727 = arith.mulf %707, %726 : vector<8x8xf32>
    %cst_68 = arith.constant 5.000000e-01 : f32
    %728 = vector.broadcast %cst_68 : f32 to vector<8x8xf32>
    %729 = arith.mulf %725, %728 : vector<8x8xf32>
    %cst_69 = arith.constant dense<0.000000e+00> : vector<8xf32>
    %730 = vector.multi_reduction <add>, %727, %cst_69 [1] : vector<8x8xf32> to vector<8xf32>
    %731 = vector.shape_cast %730 : vector<8xf32> to vector<8x1xf32>
    %732 = arith.addf %727, %729 : vector<8x8xf32>
    %cst_70 = arith.constant 5.000000e-01 : f32
    %733 = vector.broadcast %cst_70 : f32 to vector<8x8xf32>
    %734 = arith.mulf %733, %732 : vector<8x8xf32>
    %735 = math.sqrt %731 : vector<8x1xf32>
    %cst_71 = arith.constant 1.000000e-07 : f32
    %736 = vector.broadcast %cst_71 : f32 to vector<8x1xf32>
    %737 = arith.addf %735, %736 : vector<8x1xf32>
    %cst_72 = arith.constant 1.000000e+00 : f32
    %738 = vector.broadcast %cst_72 : f32 to vector<8x1xf32>
    %739 = arith.divf %738, %737 : vector<8x1xf32>
    %740 = vector.broadcast %739 : vector<8x1xf32> to vector<8x8xf32>
    %741 = arith.mulf %740, %631 : vector<8x8xf32>
    %cst_73 = arith.constant dense<0.000000e+00> : vector<8xf32>
    %742 = vector.multi_reduction <add>, %741, %cst_73 [0] : vector<8x8xf32> to vector<8xf32>
    %743 = vector.shape_cast %742 : vector<8xf32> to vector<1x8xf32>
    %744 = vector.broadcast %731 : vector<8x1xf32> to vector<8x8xf32>
    %745 = arith.mulf %744, %631 : vector<8x8xf32>
    %746 = arith.subf %745, %734 : vector<8x8xf32>
    %747 = vector.broadcast %739 : vector<8x1xf32> to vector<8x8xf32>
    %748 = arith.mulf %747, %746 : vector<8x8xf32>
    %749 = vector.broadcast %743 : vector<1x8xf32> to vector<8x8xf32>
    %750 = arith.mulf %748, %749 : vector<8x8xf32>
    %cst_74 = arith.constant dense<0.000000e+00> : vector<8x8xf32>
    %751 = tpu.matmul %750, %750, %cst_74 {dimension_numbers = #tpu.dot_dimension_numbers<[1], [0], [0], [1], [0, 0, 1, 1], [], []>} : vector<8x8xf32>, vector<8x8xf32>, vector<8x8xf32> -> vector<8x8xf32>
    %cst_75 = arith.constant 2.000000e+00 : f32
    %752 = vector.broadcast %cst_75 : f32 to vector<8x8xf32>
    %753 = arith.mulf %752, %751 : vector<8x8xf32>
    %cst_76 = arith.constant dense<0.000000e+00> : vector<8x8xf32>
    %754 = tpu.matmul %750, %753, %cst_76 {dimension_numbers = #tpu.dot_dimension_numbers<[1], [0], [0], [1], [0, 0, 1, 1], [], []>} : vector<8x8xf32>, vector<8x8xf32>, vector<8x8xf32> -> vector<8x8xf32>
    %cst_77 = arith.constant 2.000000e+00 : f32
    %755 = vector.broadcast %cst_77 : f32 to vector<8x8xf32>
    %756 = arith.mulf %755, %754 : vector<8x8xf32>
    %757 = arith.subf %756, %750 : vector<8x8xf32>
    %758 = tpu.concatenate %750, %753, %757 in 0 : vector<8x8xf32>, vector<8x8xf32>, vector<8x8xf32> -> vector<24x8xf32>
    %c0_78 = arith.constant 0 : index
    %c0_79 = arith.constant 0 : index
    %759 = vector.load %arg2[%c0_78, %c0_79] : memref<16x16xf32, #tpu.memory_space<vmem>>, vector<16x16xf32>
    %760 = vector.extract_strided_slice %759 {offsets = [0, 0], sizes = [8, 16], strides = [1, 1]} : vector<16x16xf32> to vector<8x16xf32>
    %cst_80 = arith.constant dense<0.000000e+00> : vector<24x16xf32>
    %761 = tpu.matmul %758, %760, %cst_80 {dimension_numbers = #tpu.dot_dimension_numbers<[1], [0], [0], [1], [0, 0, 1, 1], [], []>} : vector<24x8xf32>, vector<8x16xf32>, vector<24x16xf32> -> vector<24x16xf32>
    %762 = vector.extract_strided_slice %761 {offsets = [0, 0], sizes = [8, 16], strides = [1, 1]} : vector<24x16xf32> to vector<8x16xf32>
    %763 = vector.extract_strided_slice %761 {offsets = [8, 0], sizes = [8, 16], strides = [1, 1]} : vector<24x16xf32> to vector<8x16xf32>
    %764 = vector.extract_strided_slice %761 {offsets = [16, 0], sizes = [8, 16], strides = [1, 1]} : vector<24x16xf32> to vector<8x16xf32>
    %765 = tpu.concatenate %762, %763, %764 in 1 : vector<8x16xf32>, vector<8x16xf32>, vector<8x16xf32> -> vector<8x48xf32>
    %766 = vector.extract_strided_slice %759 {offsets = [8, 0], sizes = [8, 16], strides = [1, 1]} : vector<16x16xf32> to vector<8x16xf32>
    %cst_81 = arith.constant dense<0.000000e+00> : vector<24x16xf32>
    %767 = tpu.matmul %758, %766, %cst_81 {dimension_numbers = #tpu.dot_dimension_numbers<[1], [0], [0], [1], [0, 0, 1, 1], [], []>} : vector<24x8xf32>, vector<8x16xf32>, vector<24x16xf32> -> vector<24x16xf32>
    %768 = vector.extract_strided_slice %767 {offsets = [0, 0], sizes = [8, 16], strides = [1, 1]} : vector<24x16xf32> to vector<8x16xf32>
    %769 = vector.extract_strided_slice %767 {offsets = [8, 0], sizes = [8, 16], strides = [1, 1]} : vector<24x16xf32> to vector<8x16xf32>
    %770 = vector.extract_strided_slice %767 {offsets = [16, 0], sizes = [8, 16], strides = [1, 1]} : vector<24x16xf32> to vector<8x16xf32>
    %771 = tpu.concatenate %768, %769, %770 in 1 : vector<8x16xf32>, vector<8x16xf32>, vector<8x16xf32> -> vector<8x48xf32>
    %772 = tpu.concatenate %765, %771 in 0 : vector<8x48xf32>, vector<8x48xf32> -> vector<16x48xf32>
    %c0_82 = arith.constant 0 : index
    %c0_83 = arith.constant 0 : index
    %773 = vector.load %arg9[%c0_82, %c0_83] : memref<48x512xf32, #tpu.memory_space<vmem>>, vector<48x512xf32>
    %cst_84 = arith.constant dense<0.000000e+00> : vector<16x512xf32>
    %774 = tpu.matmul %772, %773, %cst_84 {dimension_numbers = #tpu.dot_dimension_numbers<[1], [0], [0], [1], [0, 0, 1, 1], [], []>} : vector<16x48xf32>, vector<48x512xf32>, vector<16x512xf32> -> vector<16x512xf32>
    %c0_85 = arith.constant 0 : index
    %c0_86 = arith.constant 0 : index
    %775 = vector.load %arg10[%c0_85, %c0_86] : memref<1x512xf32, #tpu.memory_space<vmem>>, vector<1x512xf32>
    %776 = vector.broadcast %775 : vector<1x512xf32> to vector<16x512xf32>
    %777 = arith.addf %774, %776 : vector<16x512xf32>
    %778 = vector.extract_strided_slice %777 {offsets = [0, 0], sizes = [16, 128], strides = [1, 1]} : vector<16x512xf32> to vector<16x128xf32>
    %779 = vector.extract_strided_slice %777 {offsets = [0, 128], sizes = [16, 128], strides = [1, 1]} : vector<16x512xf32> to vector<16x128xf32>
    %780 = arith.negf %779 : vector<16x128xf32>
    %781 = math.exp %780 : vector<16x128xf32>
    %cst_87 = arith.constant 1.000000e+00 : f32
    %782 = vector.broadcast %cst_87 : f32 to vector<16x128xf32>
    %783 = arith.addf %782, %781 : vector<16x128xf32>
    %784 = arith.divf %782, %783 : vector<16x128xf32>
    %785 = arith.mulf %778, %784 : vector<16x128xf32>
    %786 = vector.extract_strided_slice %777 {offsets = [0, 256], sizes = [16, 128], strides = [1, 1]} : vector<16x512xf32> to vector<16x128xf32>
    %787 = vector.extract_strided_slice %777 {offsets = [0, 384], sizes = [16, 128], strides = [1, 1]} : vector<16x512xf32> to vector<16x128xf32>
    %788 = arith.negf %787 : vector<16x128xf32>
    %789 = math.exp %788 : vector<16x128xf32>
    %cst_88 = arith.constant 1.000000e+00 : f32
    %790 = vector.broadcast %cst_88 : f32 to vector<16x128xf32>
    %791 = arith.addf %790, %789 : vector<16x128xf32>
    %792 = arith.divf %790, %791 : vector<16x128xf32>
    %793 = arith.mulf %786, %792 : vector<16x128xf32>
    %794 = tpu.concatenate %785, %793 in 1 : vector<16x128xf32>, vector<16x128xf32> -> vector<16x256xf32>
    %c0_89 = arith.constant 0 : index
    %c0_90 = arith.constant 0 : index
    %795 = vector.load %arg11[%c0_89, %c0_90] : memref<256x512xf32, #tpu.memory_space<vmem>>, vector<256x512xf32>
    %cst_91 = arith.constant dense<0.000000e+00> : vector<16x512xf32>
    %796 = tpu.matmul %794, %795, %cst_91 {dimension_numbers = #tpu.dot_dimension_numbers<[1], [0], [0], [1], [0, 0, 1, 1], [], []>} : vector<16x256xf32>, vector<256x512xf32>, vector<16x512xf32> -> vector<16x512xf32>
    %c0_92 = arith.constant 0 : index
    %c0_93 = arith.constant 0 : index
    %797 = vector.load %arg12[%c0_92, %c0_93] : memref<1x512xf32, #tpu.memory_space<vmem>>, vector<1x512xf32>
    %798 = vector.broadcast %797 : vector<1x512xf32> to vector<16x512xf32>
    %799 = arith.addf %796, %798 : vector<16x512xf32>
    %800 = vector.extract_strided_slice %799 {offsets = [0, 0], sizes = [16, 128], strides = [1, 1]} : vector<16x512xf32> to vector<16x128xf32>
    %801 = vector.extract_strided_slice %799 {offsets = [0, 128], sizes = [16, 128], strides = [1, 1]} : vector<16x512xf32> to vector<16x128xf32>
    %802 = arith.negf %801 : vector<16x128xf32>
    %803 = math.exp %802 : vector<16x128xf32>
    %cst_94 = arith.constant 1.000000e+00 : f32
    %804 = vector.broadcast %cst_94 : f32 to vector<16x128xf32>
    %805 = arith.addf %804, %803 : vector<16x128xf32>
    %806 = arith.divf %804, %805 : vector<16x128xf32>
    %807 = arith.mulf %800, %806 : vector<16x128xf32>
    %808 = vector.extract_strided_slice %799 {offsets = [0, 256], sizes = [16, 128], strides = [1, 1]} : vector<16x512xf32> to vector<16x128xf32>
    %809 = vector.extract_strided_slice %799 {offsets = [0, 384], sizes = [16, 128], strides = [1, 1]} : vector<16x512xf32> to vector<16x128xf32>
    %810 = arith.negf %809 : vector<16x128xf32>
    %811 = math.exp %810 : vector<16x128xf32>
    %cst_95 = arith.constant 1.000000e+00 : f32
    %812 = vector.broadcast %cst_95 : f32 to vector<16x128xf32>
    %813 = arith.addf %812, %811 : vector<16x128xf32>
    %814 = arith.divf %812, %813 : vector<16x128xf32>
    %815 = arith.mulf %808, %814 : vector<16x128xf32>
    %816 = tpu.concatenate %807, %815 in 1 : vector<16x128xf32>, vector<16x128xf32> -> vector<16x256xf32>
    %c0_96 = arith.constant 0 : index
    %c0_97 = arith.constant 0 : index
    %817 = vector.load %arg13[%c0_96, %c0_97] : memref<256x256xf32, #tpu.memory_space<vmem>>, vector<256x256xf32>
    %cst_98 = arith.constant dense<0.000000e+00> : vector<16x256xf32>
    %818 = tpu.matmul %816, %817, %cst_98 {dimension_numbers = #tpu.dot_dimension_numbers<[1], [0], [0], [1], [0, 0, 1, 1], [], []>} : vector<16x256xf32>, vector<256x256xf32>, vector<16x256xf32> -> vector<16x256xf32>
    %c0_99 = arith.constant 0 : index
    %c0_100 = arith.constant 0 : index
    %819 = vector.load %arg14[%c0_99, %c0_100] : memref<1x256xf32, #tpu.memory_space<vmem>>, vector<1x256xf32>
    %820 = vector.broadcast %819 : vector<1x256xf32> to vector<16x256xf32>
    %821 = arith.addf %818, %820 : vector<16x256xf32>
    %822 = vector.extract_strided_slice %821 {offsets = [0, 0], sizes = [16, 128], strides = [1, 1]} : vector<16x256xf32> to vector<16x128xf32>
    %823 = vector.extract_strided_slice %821 {offsets = [0, 128], sizes = [16, 128], strides = [1, 1]} : vector<16x256xf32> to vector<16x128xf32>
    %824 = arith.negf %823 : vector<16x128xf32>
    %825 = math.exp %824 : vector<16x128xf32>
    %cst_101 = arith.constant 1.000000e+00 : f32
    %826 = vector.broadcast %cst_101 : f32 to vector<16x128xf32>
    %827 = arith.addf %826, %825 : vector<16x128xf32>
    %828 = arith.divf %826, %827 : vector<16x128xf32>
    %829 = arith.mulf %822, %828 : vector<16x128xf32>
    %c0_102 = arith.constant 0 : index
    %c0_103 = arith.constant 0 : index
    %830 = vector.load %arg15[%c0_102, %c0_103] : memref<128x32xf32, #tpu.memory_space<vmem>>, vector<128x32xf32>
    %cst_104 = arith.constant dense<0.000000e+00> : vector<16x32xf32>
    %831 = tpu.matmul %829, %830, %cst_104 {dimension_numbers = #tpu.dot_dimension_numbers<[1], [0], [0], [1], [0, 0, 1, 1], [], []>} : vector<16x128xf32>, vector<128x32xf32>, vector<16x32xf32> -> vector<16x32xf32>
    %c0_105 = arith.constant 0 : index
    %c0_106 = arith.constant 0 : index
    %832 = vector.load %arg16[%c0_105, %c0_106] : memref<1x32xf32, #tpu.memory_space<vmem>>, vector<1x32xf32>
    %833 = vector.broadcast %832 : vector<1x32xf32> to vector<16x32xf32>
    %834 = arith.addf %831, %833 : vector<16x32xf32>
    %835 = arith.negf %834 : vector<16x32xf32>
    %836 = math.exp %835 : vector<16x32xf32>
    %cst_107 = arith.constant 1.000000e+00 : f32
    %837 = vector.broadcast %cst_107 : f32 to vector<16x32xf32>
    %838 = arith.addf %837, %836 : vector<16x32xf32>
    %839 = arith.divf %837, %838 : vector<16x32xf32>
    %c0_108 = arith.constant 0 : index
    %c0_109 = arith.constant 0 : index
    %840 = vector.load %arg17[%c0_108, %c0_109] : memref<32x16xf32, #tpu.memory_space<vmem>>, vector<32x16xf32>
    %cst_110 = arith.constant dense<0.000000e+00> : vector<16x16xf32>
    %841 = tpu.matmul %839, %840, %cst_110 {dimension_numbers = #tpu.dot_dimension_numbers<[1], [0], [0], [1], [0, 0, 1, 1], [], []>} : vector<16x32xf32>, vector<32x16xf32>, vector<16x16xf32> -> vector<16x16xf32>
    %c0_111 = arith.constant 0 : index
    %c0_112 = arith.constant 0 : index
    %842 = vector.load %arg18[%c0_111, %c0_112] : memref<1x16xf32, #tpu.memory_space<vmem>>, vector<1x16xf32>
    %843 = vector.broadcast %842 : vector<1x16xf32> to vector<16x16xf32>
    %844 = arith.addf %841, %843 : vector<16x16xf32>
    %c0_113 = arith.constant 0 : index
    %c0_114 = arith.constant 0 : index
    %845 = vector.load %arg21[%c0_113, %c0_114] : memref<16x16xf32, #tpu.memory_space<vmem>>, vector<16x16xf32>
    %cst_115 = arith.constant dense<0.000000e+00> : vector<16x16xf32>
    %846 = tpu.matmul %759, %845, %cst_115 {dimension_numbers = #tpu.dot_dimension_numbers<[1], [0], [0], [1], [0, 0, 1, 1], [], []>} : vector<16x16xf32>, vector<16x16xf32>, vector<16x16xf32> -> vector<16x16xf32>
    %c0_116 = arith.constant 0 : index
    %c0_117 = arith.constant 0 : index
    %847 = vector.load %arg22[%c0_116, %c0_117] : memref<1x16xf32, #tpu.memory_space<vmem>>, vector<1x16xf32>
    %848 = vector.broadcast %847 : vector<1x16xf32> to vector<16x16xf32>
    %849 = arith.addf %846, %848 : vector<16x16xf32>
    %c0_118 = arith.constant 0 : index
    %c0_119 = arith.constant 0 : index
    %850 = vector.load %arg19[%c0_118, %c0_119] : memref<128x16xf32, #tpu.memory_space<vmem>>, vector<128x16xf32>
    %cst_120 = arith.constant dense<0.000000e+00> : vector<16x16xf32>
    %851 = tpu.matmul %829, %850, %cst_120 {dimension_numbers = #tpu.dot_dimension_numbers<[1], [0], [0], [1], [0, 0, 1, 1], [], []>} : vector<16x128xf32>, vector<128x16xf32>, vector<16x16xf32> -> vector<16x16xf32>
    %c0_121 = arith.constant 0 : index
    %c0_122 = arith.constant 0 : index
    %852 = vector.load %arg20[%c0_121, %c0_122] : memref<1x16xf32, #tpu.memory_space<vmem>>, vector<1x16xf32>
    %853 = vector.broadcast %852 : vector<1x16xf32> to vector<16x16xf32>
    %854 = arith.addf %851, %853 : vector<16x16xf32>
    %855 = arith.subf %854, %849 : vector<16x16xf32>
    %856 = arith.negf %855 : vector<16x16xf32>
    %857 = math.exp %856 : vector<16x16xf32>
    %cst_123 = arith.constant 1.000000e+00 : f32
    %858 = vector.broadcast %cst_123 : f32 to vector<16x16xf32>
    %859 = arith.addf %858, %857 : vector<16x16xf32>
    %860 = arith.divf %858, %859 : vector<16x16xf32>
    %861 = vector.extract_strided_slice %860 {offsets = [0, 0], sizes = [8, 16], strides = [1, 1]} : vector<16x16xf32> to vector<8x16xf32>
    %cst_124 = arith.constant dense<0.000000e+00> : vector<24x16xf32>
    %862 = tpu.matmul %758, %861, %cst_124 {dimension_numbers = #tpu.dot_dimension_numbers<[1], [0], [0], [1], [0, 0, 1, 1], [], []>} : vector<24x8xf32>, vector<8x16xf32>, vector<24x16xf32> -> vector<24x16xf32>
    %863 = vector.extract_strided_slice %862 {offsets = [0, 0], sizes = [8, 16], strides = [1, 1]} : vector<24x16xf32> to vector<8x16xf32>
    %864 = vector.extract_strided_slice %862 {offsets = [8, 0], sizes = [8, 16], strides = [1, 1]} : vector<24x16xf32> to vector<8x16xf32>
    %865 = vector.extract_strided_slice %862 {offsets = [16, 0], sizes = [8, 16], strides = [1, 1]} : vector<24x16xf32> to vector<8x16xf32>
    %866 = tpu.concatenate %863, %864, %865 in 1 : vector<8x16xf32>, vector<8x16xf32>, vector<8x16xf32> -> vector<8x48xf32>
    %867 = vector.extract_strided_slice %860 {offsets = [8, 0], sizes = [8, 16], strides = [1, 1]} : vector<16x16xf32> to vector<8x16xf32>
    %cst_125 = arith.constant dense<0.000000e+00> : vector<24x16xf32>
    %868 = tpu.matmul %758, %867, %cst_125 {dimension_numbers = #tpu.dot_dimension_numbers<[1], [0], [0], [1], [0, 0, 1, 1], [], []>} : vector<24x8xf32>, vector<8x16xf32>, vector<24x16xf32> -> vector<24x16xf32>
    %869 = vector.extract_strided_slice %868 {offsets = [0, 0], sizes = [8, 16], strides = [1, 1]} : vector<24x16xf32> to vector<8x16xf32>
    %870 = vector.extract_strided_slice %868 {offsets = [8, 0], sizes = [8, 16], strides = [1, 1]} : vector<24x16xf32> to vector<8x16xf32>
    %871 = vector.extract_strided_slice %868 {offsets = [16, 0], sizes = [8, 16], strides = [1, 1]} : vector<24x16xf32> to vector<8x16xf32>
    %872 = tpu.concatenate %869, %870, %871 in 1 : vector<8x16xf32>, vector<8x16xf32>, vector<8x16xf32> -> vector<8x48xf32>
    %873 = tpu.concatenate %866, %872 in 0 : vector<8x48xf32>, vector<8x48xf32> -> vector<16x48xf32>
    %c0_126 = arith.constant 0 : index
    %c0_127 = arith.constant 0 : index
    %874 = vector.load %arg23[%c0_126, %c0_127] : memref<48x512xf32, #tpu.memory_space<vmem>>, vector<48x512xf32>
    %cst_128 = arith.constant dense<0.000000e+00> : vector<16x512xf32>
    %875 = tpu.matmul %873, %874, %cst_128 {dimension_numbers = #tpu.dot_dimension_numbers<[1], [0], [0], [1], [0, 0, 1, 1], [], []>} : vector<16x48xf32>, vector<48x512xf32>, vector<16x512xf32> -> vector<16x512xf32>
    %c0_129 = arith.constant 0 : index
    %c0_130 = arith.constant 0 : index
    %876 = vector.load %arg24[%c0_129, %c0_130] : memref<1x512xf32, #tpu.memory_space<vmem>>, vector<1x512xf32>
    %877 = vector.broadcast %876 : vector<1x512xf32> to vector<16x512xf32>
    %878 = arith.addf %875, %877 : vector<16x512xf32>
    %879 = vector.extract_strided_slice %878 {offsets = [0, 0], sizes = [16, 128], strides = [1, 1]} : vector<16x512xf32> to vector<16x128xf32>
    %880 = vector.extract_strided_slice %878 {offsets = [0, 128], sizes = [16, 128], strides = [1, 1]} : vector<16x512xf32> to vector<16x128xf32>
    %881 = arith.negf %880 : vector<16x128xf32>
    %882 = math.exp %881 : vector<16x128xf32>
    %cst_131 = arith.constant 1.000000e+00 : f32
    %883 = vector.broadcast %cst_131 : f32 to vector<16x128xf32>
    %884 = arith.addf %883, %882 : vector<16x128xf32>
    %885 = arith.divf %883, %884 : vector<16x128xf32>
    %886 = arith.mulf %879, %885 : vector<16x128xf32>
    %887 = vector.extract_strided_slice %878 {offsets = [0, 256], sizes = [16, 128], strides = [1, 1]} : vector<16x512xf32> to vector<16x128xf32>
    %888 = vector.extract_strided_slice %878 {offsets = [0, 384], sizes = [16, 128], strides = [1, 1]} : vector<16x512xf32> to vector<16x128xf32>
    %889 = arith.negf %888 : vector<16x128xf32>
    %890 = math.exp %889 : vector<16x128xf32>
    %cst_132 = arith.constant 1.000000e+00 : f32
    %891 = vector.broadcast %cst_132 : f32 to vector<16x128xf32>
    %892 = arith.addf %891, %890 : vector<16x128xf32>
    %893 = arith.divf %891, %892 : vector<16x128xf32>
    %894 = arith.mulf %887, %893 : vector<16x128xf32>
    %895 = tpu.concatenate %886, %894 in 1 : vector<16x128xf32>, vector<16x128xf32> -> vector<16x256xf32>
    %c0_133 = arith.constant 0 : index
    %c0_134 = arith.constant 0 : index
    %896 = vector.load %arg25[%c0_133, %c0_134] : memref<256x512xf32, #tpu.memory_space<vmem>>, vector<256x512xf32>
    %cst_135 = arith.constant dense<0.000000e+00> : vector<16x512xf32>
    %897 = tpu.matmul %895, %896, %cst_135 {dimension_numbers = #tpu.dot_dimension_numbers<[1], [0], [0], [1], [0, 0, 1, 1], [], []>} : vector<16x256xf32>, vector<256x512xf32>, vector<16x512xf32> -> vector<16x512xf32>
    %c0_136 = arith.constant 0 : index
    %c0_137 = arith.constant 0 : index
    %898 = vector.load %arg26[%c0_136, %c0_137] : memref<1x512xf32, #tpu.memory_space<vmem>>, vector<1x512xf32>
    %899 = vector.broadcast %898 : vector<1x512xf32> to vector<16x512xf32>
    %900 = arith.addf %897, %899 : vector<16x512xf32>
    %901 = vector.extract_strided_slice %900 {offsets = [0, 0], sizes = [16, 128], strides = [1, 1]} : vector<16x512xf32> to vector<16x128xf32>
    %902 = vector.extract_strided_slice %900 {offsets = [0, 128], sizes = [16, 128], strides = [1, 1]} : vector<16x512xf32> to vector<16x128xf32>
    %903 = arith.negf %902 : vector<16x128xf32>
    %904 = math.exp %903 : vector<16x128xf32>
    %cst_138 = arith.constant 1.000000e+00 : f32
    %905 = vector.broadcast %cst_138 : f32 to vector<16x128xf32>
    %906 = arith.addf %905, %904 : vector<16x128xf32>
    %907 = arith.divf %905, %906 : vector<16x128xf32>
    %908 = arith.mulf %901, %907 : vector<16x128xf32>
    %909 = vector.extract_strided_slice %900 {offsets = [0, 256], sizes = [16, 128], strides = [1, 1]} : vector<16x512xf32> to vector<16x128xf32>
    %910 = vector.extract_strided_slice %900 {offsets = [0, 384], sizes = [16, 128], strides = [1, 1]} : vector<16x512xf32> to vector<16x128xf32>
    %911 = arith.negf %910 : vector<16x128xf32>
    %912 = math.exp %911 : vector<16x128xf32>
    %cst_139 = arith.constant 1.000000e+00 : f32
    %913 = vector.broadcast %cst_139 : f32 to vector<16x128xf32>
    %914 = arith.addf %913, %912 : vector<16x128xf32>
    %915 = arith.divf %913, %914 : vector<16x128xf32>
    %916 = arith.mulf %909, %915 : vector<16x128xf32>
    %917 = tpu.concatenate %908, %916 in 1 : vector<16x128xf32>, vector<16x128xf32> -> vector<16x256xf32>
    %c0_140 = arith.constant 0 : index
    %c0_141 = arith.constant 0 : index
    %918 = vector.load %arg27[%c0_140, %c0_141] : memref<256x256xf32, #tpu.memory_space<vmem>>, vector<256x256xf32>
    %cst_142 = arith.constant dense<0.000000e+00> : vector<16x256xf32>
    %919 = tpu.matmul %917, %918, %cst_142 {dimension_numbers = #tpu.dot_dimension_numbers<[1], [0], [0], [1], [0, 0, 1, 1], [], []>} : vector<16x256xf32>, vector<256x256xf32>, vector<16x256xf32> -> vector<16x256xf32>
    %c0_143 = arith.constant 0 : index
    %c0_144 = arith.constant 0 : index
    %920 = vector.load %arg28[%c0_143, %c0_144] : memref<1x256xf32, #tpu.memory_space<vmem>>, vector<1x256xf32>
    %921 = vector.broadcast %920 : vector<1x256xf32> to vector<16x256xf32>
    %922 = arith.addf %919, %921 : vector<16x256xf32>
    %923 = vector.extract_strided_slice %922 {offsets = [0, 0], sizes = [16, 128], strides = [1, 1]} : vector<16x256xf32> to vector<16x128xf32>
    %924 = vector.extract_strided_slice %922 {offsets = [0, 128], sizes = [16, 128], strides = [1, 1]} : vector<16x256xf32> to vector<16x128xf32>
    %925 = arith.negf %924 : vector<16x128xf32>
    %926 = math.exp %925 : vector<16x128xf32>
    %cst_145 = arith.constant 1.000000e+00 : f32
    %927 = vector.broadcast %cst_145 : f32 to vector<16x128xf32>
    %928 = arith.addf %927, %926 : vector<16x128xf32>
    %929 = arith.divf %927, %928 : vector<16x128xf32>
    %930 = arith.mulf %923, %929 : vector<16x128xf32>
    %c0_146 = arith.constant 0 : index
    %c0_147 = arith.constant 0 : index
    %931 = vector.load %arg29[%c0_146, %c0_147] : memref<128x32xf32, #tpu.memory_space<vmem>>, vector<128x32xf32>
    %cst_148 = arith.constant dense<0.000000e+00> : vector<16x32xf32>
    %932 = tpu.matmul %930, %931, %cst_148 {dimension_numbers = #tpu.dot_dimension_numbers<[1], [0], [0], [1], [0, 0, 1, 1], [], []>} : vector<16x128xf32>, vector<128x32xf32>, vector<16x32xf32> -> vector<16x32xf32>
    %c0_149 = arith.constant 0 : index
    %c0_150 = arith.constant 0 : index
    %933 = vector.load %arg30[%c0_149, %c0_150] : memref<1x32xf32, #tpu.memory_space<vmem>>, vector<1x32xf32>
    %934 = vector.broadcast %933 : vector<1x32xf32> to vector<16x32xf32>
    %935 = arith.addf %932, %934 : vector<16x32xf32>
    %936 = arith.negf %935 : vector<16x32xf32>
    %937 = math.exp %936 : vector<16x32xf32>
    %cst_151 = arith.constant 1.000000e+00 : f32
    %938 = vector.broadcast %cst_151 : f32 to vector<16x32xf32>
    %939 = arith.addf %938, %937 : vector<16x32xf32>
    %940 = arith.divf %938, %939 : vector<16x32xf32>
    %c0_152 = arith.constant 0 : index
    %c0_153 = arith.constant 0 : index
    %941 = vector.load %arg31[%c0_152, %c0_153] : memref<32x16xf32, #tpu.memory_space<vmem>>, vector<32x16xf32>
    %cst_154 = arith.constant dense<0.000000e+00> : vector<16x16xf32>
    %942 = tpu.matmul %940, %941, %cst_154 {dimension_numbers = #tpu.dot_dimension_numbers<[1], [0], [0], [1], [0, 0, 1, 1], [], []>} : vector<16x32xf32>, vector<32x16xf32>, vector<16x16xf32> -> vector<16x16xf32>
    %c0_155 = arith.constant 0 : index
    %c0_156 = arith.constant 0 : index
    %943 = vector.load %arg32[%c0_155, %c0_156] : memref<1x16xf32, #tpu.memory_space<vmem>>, vector<1x16xf32>
    %944 = vector.broadcast %943 : vector<1x16xf32> to vector<16x16xf32>
    %945 = arith.addf %942, %944 : vector<16x16xf32>
    %946 = arith.addf %844, %945 : vector<16x16xf32>
    %c0_157 = arith.constant 0 : index
    %c0_158 = arith.constant 0 : index
    %947 = vector.load %arg33[%c0_157, %c0_158] : memref<16x16xf32, #tpu.memory_space<vmem>>, vector<16x16xf32>
    %cst_159 = arith.constant dense<0.000000e+00> : vector<16x16xf32>
    %948 = tpu.matmul %946, %947, %cst_159 {dimension_numbers = #tpu.dot_dimension_numbers<[1], [0], [0], [1], [0, 0, 1, 1], [], []>} : vector<16x16xf32>, vector<16x16xf32>, vector<16x16xf32> -> vector<16x16xf32>
    %c0_160 = arith.constant 0 : index
    %c0_161 = arith.constant 0 : index
    %949 = vector.load %arg34[%c0_160, %c0_161] : memref<1x16xf32, #tpu.memory_space<vmem>>, vector<1x16xf32>
    %950 = vector.broadcast %949 : vector<1x16xf32> to vector<16x16xf32>
    %951 = arith.addf %948, %950 : vector<16x16xf32>
    %cst_162 = arith.constant 0.000000e+00 : f32
    %952 = vector.broadcast %cst_162 : f32 to vector<16x16xf32>
    %953 = arith.cmpf ogt, %951, %952 : vector<16x16xf32>
    %cst_163 = arith.constant 0.00999999977 : f32
    %954 = vector.broadcast %cst_163 : f32 to vector<16x16xf32>
    %955 = arith.mulf %954, %951 : vector<16x16xf32>
    %956 = arith.select %953, %951, %955 : vector<16x16xi1>, vector<16x16xf32>
    %c0_164 = arith.constant 0 : index
    %c0_165 = arith.constant 0 : index
    %957 = vector.load %arg35[%c0_164, %c0_165] : memref<16x1xf32, #tpu.memory_space<vmem>>, vector<16x1xf32>
    %cst_166 = arith.constant dense<0.000000e+00> : vector<16x1xf32>
    %958 = tpu.matmul %956, %957, %cst_166 {dimension_numbers = #tpu.dot_dimension_numbers<[1], [0], [0], [1], [0, 0, 1, 1], [], []>} : vector<16x16xf32>, vector<16x1xf32>, vector<16x1xf32> -> vector<16x1xf32>
    %c0_167 = arith.constant 0 : index
    %c0_168 = arith.constant 0 : index
    %959 = vector.load %arg36[%c0_167, %c0_168] : memref<1x1xf32, #tpu.memory_space<vmem>>, vector<1x1xf32>
    %960 = vector.broadcast %959 : vector<1x1xf32> to vector<16x1xf32>
    %961 = arith.addf %958, %960 : vector<16x1xf32>
    %c0_169 = arith.constant 0 : index
    %c0_170 = arith.constant 0 : index
    %962 = vector.load %arg37[%c0_169, %c0_170] : memref<16x1xf32, #tpu.memory_space<vmem>>, vector<16x1xf32>
    tpu.vector_store %arg37[%c0_169, %c0_170], %961 {strides = array<i32>} : memref<16x1xf32, #tpu.memory_space<vmem>>, vector<16x1xf32>,
    return
  }
  func.func @transform_0(%arg0: i32) -> (i32, i32) {
    %c0_i32 = arith.constant 0 : i32
    %c0_i32_0 = arith.constant 0 : i32
    %c0_i32_1 = arith.constant 0 : i32
    return %c0_i32, %c0_i32_0 : i32, i32
  }
  func.func @transform_1(%arg0: i32) -> (i32, i32) {
    %c0_i32 = arith.constant 0 : i32
    %c0_i32_0 = arith.constant 0 : i32
    %c0_i32_1 = arith.constant 0 : i32
    return %c0_i32, %c0_i32_0 : i32, i32
  }
  func.func @transform_2(%arg0: i32) -> i32 {
    %c0_i32 = arith.constant 0 : i32
    %c0_i32_0 = arith.constant 0 : i32
    return %c0_i32 : i32
  }
  func.func @transform_3(%arg0: i32) -> i32 {
    %c0_i32 = arith.constant 0 : i32
    %c0_i32_0 = arith.constant 0 : i32
    return %c0_i32 : i32
  }
  func.func @transform_4(%arg0: i32) -> (i32, i32) {
    %c0_i32 = arith.constant 0 : i32
    %c0_i32_0 = arith.constant 0 : i32
    %c0_i32_1 = arith.constant 0 : i32
    return %c0_i32, %c0_i32_0 : i32, i32
  }
  func.func @transform_5(%arg0: i32) -> (i32, i32) {
    %c0_i32 = arith.constant 0 : i32
    %c0_i32_0 = arith.constant 0 : i32
    %c0_i32_1 = arith.constant 0 : i32
    return %c0_i32, %c0_i32_0 : i32, i32
  }
  func.func @transform_6(%arg0: i32) -> (i32, i32) {
    %c0_i32 = arith.constant 0 : i32
    %c0_i32_0 = arith.constant 0 : i32
    %c0_i32_1 = arith.constant 0 : i32
    return %c0_i32, %c0_i32_0 : i32, i32
  }
  func.func @transform_7(%arg0: i32) -> (i32, i32) {
    %c0_i32 = arith.constant 0 : i32
    %c0_i32_0 = arith.constant 0 : i32
    %c0_i32_1 = arith.constant 0 : i32
    return %c0_i32, %c0_i32_0 : i32, i32
  }
  func.func @transform_8(%arg0: i32) -> (i32, i32) {
    %c0_i32 = arith.constant 0 : i32
    %c0_i32_0 = arith.constant 0 : i32
    %c0_i32_1 = arith.constant 0 : i32
    return %c0_i32, %c0_i32_0 : i32, i32
  }
  func.func @transform_9(%arg0: i32) -> (i32, i32) {
    %c0_i32 = arith.constant 0 : i32
    %c0_i32_0 = arith.constant 0 : i32
    %c0_i32_1 = arith.constant 0 : i32
    return %c0_i32, %c0_i32_0 : i32, i32
  }
  func.func @transform_10(%arg0: i32) -> (i32, i32) {
    %c0_i32 = arith.constant 0 : i32
    %c0_i32_0 = arith.constant 0 : i32
    %c0_i32_1 = arith.constant 0 : i32
    return %c0_i32, %c0_i32_0 : i32, i32
  }
  func.func @transform_11(%arg0: i32) -> (i32, i32) {
    %c0_i32 = arith.constant 0 : i32
    %c0_i32_0 = arith.constant 0 : i32
    %c0_i32_1 = arith.constant 0 : i32
    return %c0_i32, %c0_i32_0 : i32, i32
  }
  func.func @transform_12(%arg0: i32) -> (i32, i32) {
    %c0_i32 = arith.constant 0 : i32
    %c0_i32_0 = arith.constant 0 : i32
    %c0_i32_1 = arith.constant 0 : i32
    return %c0_i32, %c0_i32_0 : i32, i32
  }
  func.func @transform_13(%arg0: i32) -> (i32, i32) {
    %c0_i32 = arith.constant 0 : i32
    %c0_i32_0 = arith.constant 0 : i32
    %c0_i32_1 = arith.constant 0 : i32
    return %c0_i32, %c0_i32_0 : i32, i32
  }
  func.func @transform_14(%arg0: i32) -> (i32, i32) {
    %c0_i32 = arith.constant 0 : i32
    %c0_i32_0 = arith.constant 0 : i32
    %c0_i32_1 = arith.constant 0 : i32
    return %c0_i32, %c0_i32_0 : i32, i32
  }
  func.func @transform_15(%arg0: i32) -> (i32, i32) {
    %c0_i32 = arith.constant 0 : i32
    %c0_i32_0 = arith.constant 0 : i32
    %c0_i32_1 = arith.constant 0 : i32
    return %c0_i32, %c0_i32_0 : i32, i32
  }
  func.func @transform_16(%arg0: i32) -> (i32, i32) {
    %c0_i32 = arith.constant 0 : i32
    %c0_i32_0 = arith.constant 0 : i32
    %c0_i32_1 = arith.constant 0 : i32
    return %c0_i32, %c0_i32_0 : i32, i32
  }
  func.func @transform_17(%arg0: i32) -> (i32, i32) {
    %c0_i32 = arith.constant 0 : i32
    %c0_i32_0 = arith.constant 0 : i32
    %c0_i32_1 = arith.constant 0 : i32
    return %c0_i32, %c0_i32_0 : i32, i32
  }
  func.func @transform_18(%arg0: i32) -> (i32, i32) {
    %c0_i32 = arith.constant 0 : i32
    %c0_i32_0 = arith.constant 0 : i32
    %c0_i32_1 = arith.constant 0 : i32
    return %c0_i32, %c0_i32_0 : i32, i32
  }
  func.func @transform_19(%arg0: i32) -> (i32, i32) {
    %c0_i32 = arith.constant 0 : i32
    %c0_i32_0 = arith.constant 0 : i32
    %c0_i32_1 = arith.constant 0 : i32
    return %c0_i32, %c0_i32_0 : i32, i32
  }
  func.func @transform_20(%arg0: i32) -> (i32, i32) {
    %c0_i32 = arith.constant 0 : i32
    %c0_i32_0 = arith.constant 0 : i32
    %c0_i32_1 = arith.constant 0 : i32
    return %c0_i32, %c0_i32_0 : i32, i32
  }
  func.func @transform_21(%arg0: i32) -> (i32, i32) {
    %c0_i32 = arith.constant 0 : i32
    %c0_i32_0 = arith.constant 0 : i32
    %c0_i32_1 = arith.constant 0 : i32
    return %c0_i32, %c0_i32_0 : i32, i32
  }
  func.func @transform_22(%arg0: i32) -> (i32, i32) {
    %c0_i32 = arith.constant 0 : i32
    %c0_i32_0 = arith.constant 0 : i32
    %c0_i32_1 = arith.constant 0 : i32
    return %c0_i32, %c0_i32_0 : i32, i32
  }
  func.func @transform_23(%arg0: i32) -> (i32, i32) {
    %c0_i32 = arith.constant 0 : i32
    %c0_i32_0 = arith.constant 0 : i32
    %c0_i32_1 = arith.constant 0 : i32
    return %c0_i32, %c0_i32_0 : i32, i32
  }
  func.func @transform_24(%arg0: i32) -> (i32, i32) {
    %c0_i32 = arith.constant 0 : i32
    %c0_i32_0 = arith.constant 0 : i32
    %c0_i32_1 = arith.constant 0 : i32
    return %c0_i32, %c0_i32_0 : i32, i32
  }
  func.func @transform_25(%arg0: i32) -> (i32, i32) {
    %c0_i32 = arith.constant 0 : i32
    %c0_i32_0 = arith.constant 0 : i32
    %c0_i32_1 = arith.constant 0 : i32
    return %c0_i32, %c0_i32_0 : i32, i32
  }
  func.func @transform_26(%arg0: i32) -> (i32, i32) {
    %c0_i32 = arith.constant 0 : i32
    %c0_i32_0 = arith.constant 0 : i32
    %c0_i32_1 = arith.constant 0 : i32
    return %c0_i32, %c0_i32_0 : i32, i32
  }
  func.func @transform_27(%arg0: i32) -> (i32, i32) {
    %c0_i32 = arith.constant 0 : i32
    %c0_i32_0 = arith.constant 0 : i32
    %c0_i32_1 = arith.constant 0 : i32
    return %c0_i32, %c0_i32_0 : i32, i32
  }
  func.func @transform_28(%arg0: i32) -> (i32, i32) {
    %c0_i32 = arith.constant 0 : i32
    %c0_i32_0 = arith.constant 0 : i32
    %c0_i32_1 = arith.constant 0 : i32
    return %c0_i32, %c0_i32_0 : i32, i32
  }
  func.func @transform_29(%arg0: i32) -> (i32, i32) {
    %c0_i32 = arith.constant 0 : i32
    %c0_i32_0 = arith.constant 0 : i32
    %c0_i32_1 = arith.constant 0 : i32
    return %c0_i32, %c0_i32_0 : i32, i32
  }
  func.func @transform_30(%arg0: i32) -> (i32, i32) {
    %c0_i32 = arith.constant 0 : i32
    %c0_i32_0 = arith.constant 0 : i32
    %c0_i32_1 = arith.constant 0 : i32
    return %c0_i32, %c0_i32_0 : i32, i32
  }
  func.func @transform_31(%arg0: i32) -> (i32, i32) {
    %c0_i32 = arith.constant 0 : i32
    %c0_i32_0 = arith.constant 0 : i32
    %c0_i32_1 = arith.constant 0 : i32
    return %c0_i32, %c0_i32_0 : i32, i32
  }
  func.func @transform_32(%arg0: i32) -> (i32, i32) {
    %c0_i32 = arith.constant 0 : i32
    %c0_i32_0 = arith.constant 0 : i32
    %c0_i32_1 = arith.constant 0 : i32
    return %c0_i32, %c0_i32_0 : i32, i32
  }
  func.func @transform_33(%arg0: i32) -> (i32, i32) {
    %c0_i32 = arith.constant 0 : i32
    %c0_i32_0 = arith.constant 0 : i32
    %c0_i32_1 = arith.constant 0 : i32
    return %c0_i32, %c0_i32_0 : i32, i32
  }
  func.func @transform_34(%arg0: i32) -> (i32, i32) {
    %c0_i32 = arith.constant 0 : i32
    %c0_i32_0 = arith.constant 0 : i32
    %c0_i32_1 = arith.constant 0 : i32
    return %c0_i32, %c0_i32_0 : i32, i32
  }
  func.func @transform_35(%arg0: i32) -> (i32, i32) {
    %c0_i32 = arith.constant 0 : i32
    %c0_i32_0 = arith.constant 0 : i32
    %c0_i32_1 = arith.constant 0 : i32
    return %c0_i32, %c0_i32_0 : i32, i32
  }
  func.func @transform_36(%arg0: i32) -> (i32, i32) {
    %c0_i32 = arith.constant 0 : i32
    %c0_i32_0 = arith.constant 0 : i32
    %c0_i32_1 = arith.constant 0 : i32
    return %c0_i32, %c0_i32_0 : i32, i32
  }
}

</mosaic_0001>

<llo_original>
// kernel: forward.1
$region0: #{forward.1}
  #allocation0 [shape = 'u32[]', space=smem, size = 0x4, offset = 0x4, fixed_abs, tag = 'smem constant byte address 0x4 - core index']
  #allocation1 [shape = 'u32[144,128]{1,0:T(1,128)}', space=vmem, size = 0x12000, scoped, tag = 'internal scratch']
  #allocation2 [shape = 'f32[1,1]{1,0:T(1,128)S(1)}', space=vmem, size = 0x200, scoped, tag = 'scoped memory for forward.1']
  %s0 = inlined_call_operand.smem [shape: u32[37], index: -1, kind: input, shape index: {}]
  %s1 = sld [smem:[%s0]]
  %s2 = scalar_lea.smem %s0, 1
  %s3 = sld [smem:[%s2]]
  %s4 = scalar_lea.smem %s0, 2
  %s5 = sld [smem:[%s4]]
  %s6 = scalar_lea.smem %s0, 3
  %s7 = sld [smem:[%s6]]
  %s8 = scalar_lea.smem %s0, 4
  %s9 = sld [smem:[%s8]]
  %s10 = scalar_lea.smem %s0, 5
  %s11 = sld [smem:[%s10]]
  %s12 = scalar_lea.smem %s0, 6
  %s13 = sld [smem:[%s12]]
  %s14 = scalar_lea.smem %s0, 7
  %s15 = sld [smem:[%s14]]
  %s16 = scalar_lea.smem %s0, 8
  %s17 = sld [smem:[%s16]]
  %s18 = scalar_lea.smem %s0, 9
  %s19 = sld [smem:[%s18]]
  %s20 = scalar_lea.smem %s0, 10
  %s21 = sld [smem:[%s20]]
  %s22 = scalar_lea.smem %s0, 11
  %s23 = sld [smem:[%s22]]
  %s24 = scalar_lea.smem %s0, 12
  %s25 = sld [smem:[%s24]]
  %s26 = scalar_lea.smem %s0, 13
  %s27 = sld [smem:[%s26]]
  %s28 = scalar_lea.smem %s0, 14
  %s29 = sld [smem:[%s28]]
  %s30 = scalar_lea.smem %s0, 15
  %s31 = sld [smem:[%s30]]
  %s32 = scalar_lea.smem %s0, 16
  %s33 = sld [smem:[%s32]]
  %s34 = scalar_lea.smem %s0, 17
  %s35 = sld [smem:[%s34]]
  %s36 = scalar_lea.smem %s0, 18
  %s37 = sld [smem:[%s36]]
  %s38 = scalar_lea.smem %s0, 19
  %s39 = sld [smem:[%s38]]
  %s40 = scalar_lea.smem %s0, 20
  %s41 = sld [smem:[%s40]]
  %s42 = scalar_lea.smem %s0, 21
  %s43 = sld [smem:[%s42]]
  %s44 = scalar_lea.smem %s0, 22
  %s45 = sld [smem:[%s44]]
  %s46 = scalar_lea.smem %s0, 23
  %s47 = sld [smem:[%s46]]
  %s48 = scalar_lea.smem %s0, 24
  %s49 = sld [smem:[%s48]]
  %s50 = scalar_lea.smem %s0, 25
  %s51 = sld [smem:[%s50]]
  %s52 = scalar_lea.smem %s0, 26
  %s53 = sld [smem:[%s52]]
  %s54 = scalar_lea.smem %s0, 27
  %s55 = sld [smem:[%s54]]
  %s56 = scalar_lea.smem %s0, 28
  %s57 = sld [smem:[%s56]]
  %s58 = scalar_lea.smem %s0, 29
  %s59 = sld [smem:[%s58]]
  %s60 = scalar_lea.smem %s0, 30
  %s61 = sld [smem:[%s60]]
  %s62 = scalar_lea.smem %s0, 31
  %s63 = sld [smem:[%s62]]
  %s64 = scalar_lea.smem %s0, 32
  %s65 = sld [smem:[%s64]]
  %s66 = scalar_lea.smem %s0, 33
  %s67 = sld [smem:[%s66]]
  %s68 = scalar_lea.smem %s0, 34
  %s69 = sld [smem:[%s68]]
  %s70 = scalar_lea.smem %s0, 35
  %s71 = sld [smem:[%s70]]
  %s72 = scalar_lea.smem %s0, 36
  %s73 = sld [smem:[%s72]]
  %s74 = sld [smem:[#allocation0]]
  $region214: #{forward.1} parent=0
    _
  %s76 = ssub.s32 1, %s74
  %s77 = scalar_select 0, %s76, %s74
  %v78 = vstv %s71
  %79 = vst [vmem:[#allocation2] sm:$0x1] %v78
  $region1: #{forward.1} parent=0
    #allocation3 [shape = 'u8[512]{0}', space=smem, size = 0x200, scoped, tag = 'input window, operand 2, single buffered']
    #allocation4 [shape = 's32[1]{0}', space=sflag, size = 0x4, scoped, tag = 'scoped memory for forward.1']
    #allocation5 [shape = 's32[1]{0}', space=sflag, size = 0x4, scoped, tag = 'scoped memory for forward.1']
    #allocation6 [shape = 'u8[512]{0}', space=smem, size = 0x200, scoped, tag = 'input window, operand 3, single buffered']
    #allocation7 [shape = 's32[1]{0}', space=sflag, size = 0x4, scoped, tag = 'scoped memory for forward.1']
    #allocation8 [shape = 'u8[512]{0}', space=vmem, size = 0x400, scoped, tag = 'input window, operand 5, single buffered']
    #allocation9 [shape = 'u8[4096]{0}', space=vmem, size = 0x1000, scoped, tag = 'input window, operand 6, single buffered']
    #allocation10 [shape = 's32[1]{0}', space=sflag, size = 0x4, scoped, tag = 'scoped memory for forward.1']
    #allocation11 [shape = 'u8[512]{0}', space=vmem, size = 0x400, scoped, tag = 'input window, operand 7, single buffered']
    #allocation12 [shape = 'u8[98304]{0}', space=vmem, size = 0x18000, scoped, tag = 'input window, operand 8, single buffered']
    #allocation13 [shape = 's32[1]{0}', space=sflag, size = 0x4, scoped, tag = 'scoped memory for forward.1']
    #allocation14 [shape = 'u8[2048]{0}', space=vmem, size = 0x800, scoped, tag = 'input window, operand 9, single buffered']
    #allocation15 [shape = 'u8[524288]{0}', space=vmem, size = 0x80000, scoped, tag = 'input window, operand 10, single buffered']
    #allocation16 [shape = 's32[1]{0}', space=sflag, size = 0x4, scoped, tag = 'scoped memory for forward.1']
    #allocation17 [shape = 'u8[1024]{0}', space=vmem, size = 0x400, scoped, tag = 'input window, operand 13, single buffered']
    #allocation18 [shape = 'u8[512]{0}', space=vmem, size = 0x400, scoped, tag = 'input window, operand 19, single buffered']
    #allocation19 [shape = 's32[1]{0}', space=sflag, size = 0x4, scoped, tag = 'scoped memory for forward.1']
    #allocation20 [shape = 'u8[512]{0}', space=vmem, size = 0x400, scoped, tag = 'input window, operand 21, single buffered']
    #allocation21 [shape = 'u8[98304]{0}', space=vmem, size = 0x18000, scoped, tag = 'input window, operand 22, single buffered']
    #allocation22 [shape = 's32[1]{0}', space=sflag, size = 0x4, scoped, tag = 'scoped memory for forward.1']
    #allocation23 [shape = 'u8[524288]{0}', space=vmem, size = 0x80000, scoped, tag = 'input window, operand 24, single buffered']
    #allocation24 [shape = 'u8[262144]{0}', space=vmem, size = 0x40000, scoped, tag = 'input window, operand 26, single buffered']
    #allocation25 [shape = 's32[1]{0}', space=sflag, size = 0x4, scoped, tag = 'scoped memory for forward.1']
    #allocation26 [shape = 'u8[512]{0}', space=vmem, size = 0x400, scoped, tag = 'input window, operand 33, single buffered']
    %80 = vsyncpa [#allocation5], 0
    %81 = vsyncpa [#allocation7], 0
    %82 = vsyncpa [#allocation4], 0
    %83 = vsyncpa [#allocation10], 0
    %84 = vsyncpa [#allocation13], 0
    %85 = vsyncpa [#allocation16], 0
    %86 = vsyncpa [#allocation19], 0
    %87 = vsyncpa [#allocation22], 0
    %88 = vsyncpa [#allocation25], 0
    // Predicated region
    $region2: #{forward.1} parent=1 // pred_check
      _
    $region3: #{forward.1} parent=1 // pred_check_branch
      %90 = sbr.rel (0) target = $region5
    $region4: #{forward.1} parent=1 // pred_region
      _
    $region5: #{forward.1} parent=1 // pred_fallthru
      _
    // Predicated region
    $region6: #{forward.1} parent=1 // pred_check
      _
    $region7: #{forward.1} parent=1 // pred_check_branch
      %92 = sbr.rel (0) target = $region9
    $region8: #{forward.1} parent=1 // pred_region
      _
    $region9: #{forward.1} parent=1 // pred_fallthru
      _
    // Predicated region
    $region10: #{forward.1} parent=1 // pred_check
      _
    $region11: #{forward.1} parent=1 // pred_check_branch
      %94 = sbr.rel (0) target = $region13
    $region12: #{forward.1} parent=1 // pred_region
      %s96 = ssub.s32 16, 16
      %97 = vsyncadd [#allocation5], %s96
      %s99 = sshll.u32 %s5, 4
      %s100 = int_to_ptr.vmem [resolvable:$true] %s99
      %102 = dma.vmem_to_smem %s100, 16, [#allocation3], [#allocation5]
    $region13: #{forward.1} parent=1 // pred_fallthru
      _
    // Predicated region
    $region14: #{forward.1} parent=1 // pred_check
      _
    $region15: #{forward.1} parent=1 // pred_check_branch
      %104 = sbr.rel (0) target = $region17
    $region16: #{forward.1} parent=1 // pred_region
      %s106 = ssub.s32 16, 16
      %107 = vsyncadd [#allocation7], %s106
      %s109 = sshll.u32 %s7, 4
      %s110 = int_to_ptr.vmem [resolvable:$true] %s109
      %112 = dma.vmem_to_smem %s110, 16, [#allocation6], [#allocation7]
    $region17: #{forward.1} parent=1 // pred_fallthru
      _
    // Predicated region
    $region18: #{forward.1} parent=1 // pred_check
      _
    $region19: #{forward.1} parent=1 // pred_check_branch
      %114 = sbr.rel (0) target = $region21
    $region20: #{forward.1} parent=1 // pred_region
      _
    $region21: #{forward.1} parent=1 // pred_fallthru
      _
    // Predicated region
    $region22: #{forward.1} parent=1 // pred_check
      _
    $region23: #{forward.1} parent=1 // pred_check_branch
      %116 = sbr.rel (0) target = $region25
    $region24: #{forward.1} parent=1 // pred_region
      %s118 = ssub.s32 16, 16
      %119 = vsyncadd [#allocation4], %s118
      %s121 = sshll.u32 [#allocation8], 4
      %s122 = int_to_ptr.vmem [resolvable:$true] %s121
      %124 = dma.hbm_to_vmem [thread:$0]  %s11, 16, %s122, [#allocation4]
    $region25: #{forward.1} parent=1 // pred_fallthru
      _
    // Predicated region
    $region26: #{forward.1} parent=1 // pred_check
      _
    $region27: #{forward.1} parent=1 // pred_check_branch
      %126 = sbr.rel (0) target = $region29
    $region28: #{forward.1} parent=1 // pred_region
      %s128 = ssub.s32 128, 128
      %129 = vsyncadd [#allocation10], %s128
      %s131 = sshll.u32 [#allocation9], 4
      %s132 = int_to_ptr.vmem [resolvable:$true] %s131
      %134 = dma.hbm_to_vmem [thread:$0]  %s13, 128, %s132, [#allocation10]
    $region29: #{forward.1} parent=1 // pred_fallthru
      _
    // Predicated region
    $region30: #{forward.1} parent=1 // pred_check
      _
    $region31: #{forward.1} parent=1 // pred_check_branch
      %136 = sbr.rel (0) target = $region33
    $region32: #{forward.1} parent=1 // pred_region
      %s138 = ssub.s32 16, 16
      %139 = vsyncadd [#allocation10], %s138
      %s141 = sshll.u32 [#allocation11], 4
      %s142 = int_to_ptr.vmem [resolvable:$true] %s141
      %144 = dma.hbm_to_vmem [thread:$0]  %s15, 16, %s142, [#allocation10]
    $region33: #{forward.1} parent=1 // pred_fallthru
      _
    // Predicated region
    $region34: #{forward.1} parent=1 // pred_check
      _
    $region35: #{forward.1} parent=1 // pred_check_branch
      %146 = sbr.rel (0) target = $region37
    $region36: #{forward.1} parent=1 // pred_region
      %s148 = ssub.s32 3072, 3072
      %149 = vsyncadd [#allocation13], %s148
      %s150 = sshll.u32 [#allocation12], 4
      %s151 = int_to_ptr.vmem [resolvable:$true] %s150
      %156 = dma.hbm_to_vmem [thread:$0]  %s17, 3072, %s151, [#allocation13], 512, 512, 32
    $region37: #{forward.1} parent=1 // pred_fallthru
      _
    // Predicated region
    $region38: #{forward.1} parent=1 // pred_check
      _
    $region39: #{forward.1} parent=1 // pred_check_branch
      %158 = sbr.rel (0) target = $region41
    $region40: #{forward.1} parent=1 // pred_region
      %s160 = ssub.s32 64, 64
      %161 = vsyncadd [#allocation13], %s160
      %s163 = sshll.u32 [#allocation14], 4
      %s164 = int_to_ptr.vmem [resolvable:$true] %s163
      %166 = dma.hbm_to_vmem [thread:$0]  %s19, 64, %s164, [#allocation13]
    $region41: #{forward.1} parent=1 // pred_fallthru
      _
    // Predicated region
    $region42: #{forward.1} parent=1 // pred_check
      _
    $region43: #{forward.1} parent=1 // pred_check_branch
      %168 = sbr.rel (0) target = $region45
    $region44: #{forward.1} parent=1 // pred_region
      %s170 = ssub.s32 16384, 16384
      %171 = vsyncadd [#allocation16], %s170
      %s172 = sshll.u32 [#allocation15], 4
      %s173 = int_to_ptr.vmem [resolvable:$true] %s172
      %178 = dma.hbm_to_vmem [thread:$0]  %s21, 16384, %s173, [#allocation16], 512, 512, 32
    $region45: #{forward.1} parent=1 // pred_fallthru
      _
    // Predicated region
    $region46: #{forward.1} parent=1 // pred_check
      _
    $region47: #{forward.1} parent=1 // pred_check_branch
      %180 = sbr.rel (0) target = $region49
    $region48: #{forward.1} parent=1 // pred_region
      _
    $region49: #{forward.1} parent=1 // pred_fallthru
      _
    // Predicated region
    $region50: #{forward.1} parent=1 // pred_check
      _
    $region51: #{forward.1} parent=1 // pred_check_branch
      %182 = sbr.rel (0) target = $region53
    $region52: #{forward.1} parent=1 // pred_region
      _
    $region53: #{forward.1} parent=1 // pred_fallthru
      _
    // Predicated region
    $region54: #{forward.1} parent=1 // pred_check
      _
    $region55: #{forward.1} parent=1 // pred_check_branch
      %184 = sbr.rel (0) target = $region57
    $region56: #{forward.1} parent=1 // pred_region
      %s186 = ssub.s32 32, 32
      %187 = vsyncadd [#allocation16], %s186
      %s189 = sshll.u32 [#allocation17], 4
      %s190 = int_to_ptr.vmem [resolvable:$true] %s189
      %192 = dma.hbm_to_vmem [thread:$0]  %s27, 32, %s190, [#allocation16]
    $region57: #{forward.1} parent=1 // pred_fallthru
      _
    // Predicated region
    $region58: #{forward.1} parent=1 // pred_check
      _
    $region59: #{forward.1} parent=1 // pred_check_branch
      %194 = sbr.rel (0) target = $region61
    $region60: #{forward.1} parent=1 // pred_region
      _
    $region61: #{forward.1} parent=1 // pred_fallthru
      _
    // Predicated region
    $region62: #{forward.1} parent=1 // pred_check
      _
    $region63: #{forward.1} parent=1 // pred_check_branch
      %196 = sbr.rel (0) target = $region65
    $region64: #{forward.1} parent=1 // pred_region
      _
    $region65: #{forward.1} parent=1 // pred_fallthru
      _
    // Predicated region
    $region66: #{forward.1} parent=1 // pred_check
      _
    $region67: #{forward.1} parent=1 // pred_check_branch
      %198 = sbr.rel (0) target = $region69
    $region68: #{forward.1} parent=1 // pred_region
      _
    $region69: #{forward.1} parent=1 // pred_fallthru
      _
    // Predicated region
    $region70: #{forward.1} parent=1 // pred_check
      _
    $region71: #{forward.1} parent=1 // pred_check_branch
      %200 = sbr.rel (0) target = $region73
    $region72: #{forward.1} parent=1 // pred_region
      _
    $region73: #{forward.1} parent=1 // pred_fallthru
      _
    // Predicated region
    $region74: #{forward.1} parent=1 // pred_check
      _
    $region75: #{forward.1} parent=1 // pred_check_branch
      %202 = sbr.rel (0) target = $region77
    $region76: #{forward.1} parent=1 // pred_region
      _
    $region77: #{forward.1} parent=1 // pred_fallthru
      _
    // Predicated region
    $region78: #{forward.1} parent=1 // pred_check
      _
    $region79: #{forward.1} parent=1 // pred_check_branch
      %204 = sbr.rel (0) target = $region81
    $region80: #{forward.1} parent=1 // pred_region
      %s206 = ssub.s32 16, 16
      %207 = vsyncadd [#allocation19], %s206
      %s209 = sshll.u32 [#allocation18], 4
      %s210 = int_to_ptr.vmem [resolvable:$true] %s209
      %212 = dma.hbm_to_vmem [thread:$0]  %s39, 16, %s210, [#allocation19]
    $region81: #{forward.1} parent=1 // pred_fallthru
      _
    // Predicated region
    $region82: #{forward.1} parent=1 // pred_check
      _
    $region83: #{forward.1} parent=1 // pred_check_branch
      %214 = sbr.rel (0) target = $region85
    $region84: #{forward.1} parent=1 // pred_region
      _
    $region85: #{forward.1} parent=1 // pred_fallthru
      _
    // Predicated region
    $region86: #{forward.1} parent=1 // pred_check
      _
    $region87: #{forward.1} parent=1 // pred_check_branch
      %216 = sbr.rel (0) target = $region89
    $region88: #{forward.1} parent=1 // pred_region
      %s218 = ssub.s32 16, 16
      %219 = vsyncadd [#allocation19], %s218
      %s221 = sshll.u32 [#allocation20], 4
      %s222 = int_to_ptr.vmem [resolvable:$true] %s221
      %224 = dma.hbm_to_vmem [thread:$0]  %s43, 16, %s222, [#allocation19]
    $region89: #{forward.1} parent=1 // pred_fallthru
      _
    // Predicated region
    $region90: #{forward.1} parent=1 // pred_check
      _
    $region91: #{forward.1} parent=1 // pred_check_branch
      %226 = sbr.rel (0) target = $region93
    $region92: #{forward.1} parent=1 // pred_region
      %s228 = ssub.s32 3072, 3072
      %229 = vsyncadd [#allocation22], %s228
      %s230 = sshll.u32 [#allocation21], 4
      %s231 = int_to_ptr.vmem [resolvable:$true] %s230
      %236 = dma.hbm_to_vmem [thread:$0]  %s45, 3072, %s231, [#allocation22], 512, 512, 32
    $region93: #{forward.1} parent=1 // pred_fallthru
      _
    // Predicated region
    $region94: #{forward.1} parent=1 // pred_check
      _
    $region95: #{forward.1} parent=1 // pred_check_branch
      %238 = sbr.rel (0) target = $region97
    $region96: #{forward.1} parent=1 // pred_region
      _
    $region97: #{forward.1} parent=1 // pred_fallthru
      _
    // Predicated region
    $region98: #{forward.1} parent=1 // pred_check
      _
    $region99: #{forward.1} parent=1 // pred_check_branch
      %240 = sbr.rel (0) target = $region101
    $region100: #{forward.1} parent=1 // pred_region
      %s242 = ssub.s32 16384, 16384
      %243 = vsyncadd [#allocation22], %s242
      %s244 = sshll.u32 [#allocation23], 4
      %s245 = int_to_ptr.vmem [resolvable:$true] %s244
      %250 = dma.hbm_to_vmem [thread:$0]  %s49, 16384, %s245, [#allocation22], 512, 512, 32
    $region101: #{forward.1} parent=1 // pred_fallthru
      _
    // Predicated region
    $region102: #{forward.1} parent=1 // pred_check
      _
    $region103: #{forward.1} parent=1 // pred_check_branch
      %252 = sbr.rel (0) target = $region105
    $region104: #{forward.1} parent=1 // pred_region
      _
    $region105: #{forward.1} parent=1 // pred_fallthru
      _
    // Predicated region
    $region106: #{forward.1} parent=1 // pred_check
      _
    $region107: #{forward.1} parent=1 // pred_check_branch
      %254 = sbr.rel (0) target = $region109
    $region108: #{forward.1} parent=1 // pred_region
      %s256 = ssub.s32 8192, 8192
      %257 = vsyncadd [#allocation25], %s256
      %s258 = sshll.u32 [#allocation24], 4
      %s259 = int_to_ptr.vmem [resolvable:$true] %s258
      %264 = dma.hbm_to_vmem [thread:$0]  %s53, 8192, %s259, [#allocation25], 256, 256, 16
    $region109: #{forward.1} parent=1 // pred_fallthru
      _
    // Predicated region
    $region110: #{forward.1} parent=1 // pred_check
      _
    $region111: #{forward.1} parent=1 // pred_check_branch
      %266 = sbr.rel (0) target = $region113
    $region112: #{forward.1} parent=1 // pred_region
      _
    $region113: #{forward.1} parent=1 // pred_fallthru
      _
    // Predicated region
    $region114: #{forward.1} parent=1 // pred_check
      _
    $region115: #{forward.1} parent=1 // pred_check_branch
      %268 = sbr.rel (0) target = $region117
    $region116: #{forward.1} parent=1 // pred_region
      _
    $region117: #{forward.1} parent=1 // pred_fallthru
      _
    // Predicated region
    $region118: #{forward.1} parent=1 // pred_check
      _
    $region119: #{forward.1} parent=1 // pred_check_branch
      %270 = sbr.rel (0) target = $region121
    $region120: #{forward.1} parent=1 // pred_region
      _
    $region121: #{forward.1} parent=1 // pred_fallthru
      _
    // Predicated region
    $region122: #{forward.1} parent=1 // pred_check
      _
    $region123: #{forward.1} parent=1 // pred_check_branch
      %272 = sbr.rel (0) target = $region125
    $region124: #{forward.1} parent=1 // pred_region
      _
    $region125: #{forward.1} parent=1 // pred_fallthru
      _
    // Predicated region
    $region126: #{forward.1} parent=1 // pred_check
      _
    $region127: #{forward.1} parent=1 // pred_check_branch
      %274 = sbr.rel (0) target = $region129
    $region128: #{forward.1} parent=1 // pred_region
      _
    $region129: #{forward.1} parent=1 // pred_fallthru
      _
    // Predicated region
    $region130: #{forward.1} parent=1 // pred_check
      _
    $region131: #{forward.1} parent=1 // pred_check_branch
      %276 = sbr.rel (0) target = $region133
    $region132: #{forward.1} parent=1 // pred_region
      _
    $region133: #{forward.1} parent=1 // pred_fallthru
      _
    // Predicated region
    $region134: #{forward.1} parent=1 // pred_check
      _
    $region135: #{forward.1} parent=1 // pred_check_branch
      %278 = sbr.rel (0) target = $region137
    $region136: #{forward.1} parent=1 // pred_region
      %s280 = ssub.s32 16, 16
      %281 = vsyncadd [#allocation25], %s280
      %s283 = sshll.u32 [#allocation26], 4
      %s284 = int_to_ptr.vmem [resolvable:$true] %s283
      %286 = dma.hbm_to_vmem [thread:$0]  %s67, 16, %s284, [#allocation25]
    $region137: #{forward.1} parent=1 // pred_fallthru
      _
    // Predicated region
    $region138: #{forward.1} parent=1 // pred_check
      _
    $region139: #{forward.1} parent=1 // pred_check_branch
      %288 = sbr.rel (0) target = $region141
    $region140: #{forward.1} parent=1 // pred_region
      _
    $region141: #{forward.1} parent=1 // pred_fallthru
      _
    // Predicated region
    $region142: #{forward.1} parent=1 // pred_check
      _
    $region143: #{forward.1} parent=1 // pred_check_branch
      %290 = sbr.rel (0) target = $region145
    $region144: #{forward.1} parent=1 // pred_region
      _
    $region145: #{forward.1} parent=1 // pred_fallthru
      _
    // Predicated region
    $region146: #{forward.1} parent=1 // pred_check
      _
    $region147: #{forward.1} parent=1 // pred_check_branch
      %292 = sbr.rel (0) target = $region149
    $region148: #{forward.1} parent=1 // pred_region
      %293 = dma.done [#allocation5], 16
    $region149: #{forward.1} parent=1 // pred_fallthru
      _
    // Predicated region
    $region150: #{forward.1} parent=1 // pred_check
      _
    $region151: #{forward.1} parent=1 // pred_check_branch
      %295 = sbr.rel (0) target = $region153
    $region152: #{forward.1} parent=1 // pred_region
      %296 = dma.done [#allocation7], 16
    $region153: #{forward.1} parent=1 // pred_fallthru
      _
    // Predicated region
    $region154: #{forward.1} parent=1 // pred_check
      _
    $region155: #{forward.1} parent=1 // pred_check_branch
      %298 = sbr.rel (0) target = $region157
    $region156: #{forward.1} parent=1 // pred_region
      %299 = dma.done [#allocation4], 16
    $region157: #{forward.1} parent=1 // pred_fallthru
      _
    // Predicated region
    $region158: #{forward.1} parent=1 // pred_check
      _
    $region159: #{forward.1} parent=1 // pred_check_branch
      %301 = sbr.rel (0) target = $region161
    $region160: #{forward.1} parent=1 // pred_region
      %302 = dma.done [#allocation10], 128
    $region161: #{forward.1} parent=1 // pred_fallthru
      _
    // Predicated region
    $region162: #{forward.1} parent=1 // pred_check
      _
    $region163: #{forward.1} parent=1 // pred_check_branch
      %304 = sbr.rel (0) target = $region165
    $region164: #{forward.1} parent=1 // pred_region
      %305 = dma.done [#allocation10], 16
    $region165: #{forward.1} parent=1 // pred_fallthru
      _
    // Predicated region
    $region166: #{forward.1} parent=1 // pred_check
      _
    $region167: #{forward.1} parent=1 // pred_check_branch
      %307 = sbr.rel (0) target = $region169
    $region168: #{forward.1} parent=1 // pred_region
      %308 = dma.done [#allocation13], 3072
    $region169: #{forward.1} parent=1 // pred_fallthru
      _
    // Predicated region
    $region170: #{forward.1} parent=1 // pred_check
      _
    $region171: #{forward.1} parent=1 // pred_check_branch
      %310 = sbr.rel (0) target = $region173
    $region172: #{forward.1} parent=1 // pred_region
      %311 = dma.done [#allocation13], 64
    $region173: #{forward.1} parent=1 // pred_fallthru
      _
    // Predicated region
    $region174: #{forward.1} parent=1 // pred_check
      _
    $region175: #{forward.1} parent=1 // pred_check_branch
      %313 = sbr.rel (0) target = $region177
    $region176: #{forward.1} parent=1 // pred_region
      %314 = dma.done [#allocation16], 16384
    $region177: #{forward.1} parent=1 // pred_fallthru
      _
    // Predicated region
    $region178: #{forward.1} parent=1 // pred_check
      _
    $region179: #{forward.1} parent=1 // pred_check_branch
      %316 = sbr.rel (0) target = $region181
    $region180: #{forward.1} parent=1 // pred_region
      %317 = dma.done [#allocation16], 32
    $region181: #{forward.1} parent=1 // pred_fallthru
      _
    // Predicated region
    $region182: #{forward.1} parent=1 // pred_check
      _
    $region183: #{forward.1} parent=1 // pred_check_branch
      %319 = sbr.rel (0) target = $region185
    $region184: #{forward.1} parent=1 // pred_region
      %320 = dma.done [#allocation19], 16
    $region185: #{forward.1} parent=1 // pred_fallthru
      _
    // Predicated region
    $region186: #{forward.1} parent=1 // pred_check
      _
    $region187: #{forward.1} parent=1 // pred_check_branch
      %322 = sbr.rel (0) target = $region189
    $region188: #{forward.1} parent=1 // pred_region
      %323 = dma.done [#allocation19], 16
    $region189: #{forward.1} parent=1 // pred_fallthru
      _
    // Predicated region
    $region190: #{forward.1} parent=1 // pred_check
      _
    $region191: #{forward.1} parent=1 // pred_check_branch
      %325 = sbr.rel (0) target = $region193
    $region192: #{forward.1} parent=1 // pred_region
      %326 = dma.done [#allocation22], 3072
    $region193: #{forward.1} parent=1 // pred_fallthru
      _
    // Predicated region
    $region194: #{forward.1} parent=1 // pred_check
      _
    $region195: #{forward.1} parent=1 // pred_check_branch
      %328 = sbr.rel (0) target = $region197
    $region196: #{forward.1} parent=1 // pred_region
      %329 = dma.done [#allocation22], 16384
    $region197: #{forward.1} parent=1 // pred_fallthru
      _
    // Predicated region
    $region198: #{forward.1} parent=1 // pred_check
      _
    $region199: #{forward.1} parent=1 // pred_check_branch
      %331 = sbr.rel (0) target = $region201
    $region200: #{forward.1} parent=1 // pred_region
      %332 = dma.done [#allocation25], 8192
    $region201: #{forward.1} parent=1 // pred_fallthru
      _
    // Predicated region
    $region202: #{forward.1} parent=1 // pred_check
      _
    $region203: #{forward.1} parent=1 // pred_check_branch
      %334 = sbr.rel (0) target = $region205
    $region204: #{forward.1} parent=1 // pred_region
      %335 = dma.done [#allocation25], 16
    $region205: #{forward.1} parent=1 // pred_fallthru
      _
    %336 = sfence
    %v337 = vld [vmem:[%s1] sm:$0xff]
    %v338 = vld [vmem:[%s1 + $0x8] sm:$0xff]
    %v339 = vld [vmem:[%s9] sm:$0xff]
    %v340 = vld [vmem:[%s9 + $0x8] sm:$0xff]
    %v341 = vld [vmem:[#allocation8] sm:$0x1]
    %v343 = vlaneseq
    %v344 = vshrl.u32 %v343, 7
    %v345 = vsub.s32 0, %v344
    %v346 = vrot.slane %v341, %v345
    %vm348 = vcmask 130048
    %v350 = vsel %vm348, %v337, 0
    %v353 = vsel %vm348, %v338, 0
    %355 = vmatprep.subr.mxu0 0.0
    %356 = vmatpush1.msra.mxu0 %v339
    %357 = vmatprep.subr.mxu0 0.0
    %358 = vmatpush1.msra.mxu0 %v340
    %359 = vmatprep.subr.mxu0 0.0
    %360 = vmatpush1.msra.mxu0 0.0
    %361 = vmatprep.subr.mxu0 0.0
    %362 = vmatpush1.msra.mxu0 0.0
    %363 = vmatprep.subr.mxu0 0.0
    %364 = vmatpush1.msra.mxu0 0.0
    %365 = vmatprep.subr.mxu0 0.0
    %366 = vmatpush1.msra.mxu0 0.0
    %367 = vmatprep.subr.mxu0 0.0
    %368 = vmatpush1.msra.mxu0 0.0
    %369 = vmatprep.subr.mxu0 0.0
    %370 = vmatpush1.msra.mxu0 0.0
    %371 = vmatprep.subr.mxu0 0.0
    %372 = vmatpush1.msra.mxu0 0.0
    %373 = vmatprep.subr.mxu0 0.0
    %374 = vmatpush1.msra.mxu0 0.0
    %375 = vmatprep.subr.mxu0 0.0
    %376 = vmatpush1.msra.mxu0 0.0
    %377 = vmatprep.subr.mxu0 0.0
    %378 = vmatpush1.msra.mxu0 0.0
    %379 = vmatprep.subr.mxu0 0.0
    %380 = vmatpush1.msra.mxu0 0.0
    %381 = vmatprep.subr.mxu0 0.0
    %382 = vmatpush1.msra.mxu0 0.0
    %383 = vmatprep.subr.mxu0 0.0
    %384 = vmatpush1.msra.mxu0 0.0
    %385 = vmatprep.subr.mxu0 0.0
    %386 = vmatpush1.msra.mxu0 0.0
    %387 = vmatprep.subr.mxu0 0.0
    %388 = vmatpush1.msra.mxu0 0.0
    %389 = vmatprep.subr.mxu0 0.0
    %390 = vmatpush1.msra.mxu0 0.0
    %391 = vmatprep.subr.mxu0 0.0
    %392 = vmatpush1.msra.mxu0 0.0
    %393 = vmatprep.subr.mxu0 0.0
    %394 = vmatpush1.msra.mxu0 0.0
    %395 = vmatprep.subr.mxu0 0.0
    %396 = vmatpush1.msra.mxu0 0.0
    %397 = vmatprep.subr.mxu0 0.0
    %398 = vmatpush1.msra.mxu0 0.0
    %399 = vmatprep.subr.mxu0 0.0
    %400 = vmatpush1.msra.mxu0 0.0
    %401 = vmatprep.subr.mxu0 0.0
    %402 = vmatpush1.msra.mxu0 0.0
    %403 = vmatprep.subr.mxu0 0.0
    %404 = vmatpush1.msra.mxu0 0.0
    %405 = vmatprep.subr.mxu0 0.0
    %406 = vmatpush1.msra.mxu0 0.0
    %407 = vmatprep.subr.mxu0 0.0
    %408 = vmatpush1.msra.mxu0 0.0
    %409 = vmatprep.subr.mxu0 0.0
    %410 = vmatpush1.msra.mxu0 0.0
    %411 = vmatprep.subr.mxu0 0.0
    %412 = vmatpush1.msra.mxu0 0.0
    %413 = vmatprep.subr.mxu0 0.0
    %414 = vmatpush1.msra.mxu0 0.0
    %415 = vmatprep.subr.mxu0 0.0
    %416 = vmatpush1.msra.mxu0 0.0
    %417 = vmatprep.subr.mxu0 0.0
    %418 = vmatpush1.msra.mxu0 0.0
    %419 = vmatprep.mubr.f32.mxu0 0.0
    %420 = vmatmul.mubr.f32.gmra.mrb[0].mxu0 %v350
    %v421 = vpop.f32.mrb[0].mxu0
    %v422 = vadd.f32 %v346, %v421
    %v423 = vpop.f32.mrb[0].mxu0
    %424 = vmatprep.mubr.f32.mxu0 0.0
    %425 = vmatmul.mubr.f32.gmra.mrb[0].mxu0 %v353
    %v426 = vpop.f32.mrb[0].mxu0
    %v427 = vadd.f32 %v346, %v426
    %v428 = vpop.f32.mrb[0].mxu0
    %429 = vdwg.mxu0
    %v430 = vld [vmem:[#allocation9] sm:$0xff]
    %v431 = vld [vmem:[#allocation11] sm:$0x1]
    %v432 = vlaneseq
    %v433 = vshrl.u32 %v432, 7
    %v434 = vsub.s32 0, %v433
    %v435 = vrot.slane %v430, %v434
    %v436 = vmul.f32 %v435, 0.0
    %v437 = vlaneseq
    %v438 = vshrl.u32 %v437, 7
    %v439 = vsub.s32 1, %v438
    %v440 = vrot.slane %v430, %v439
    %v441 = vmul.f32 %v440, 0.0
    %v442 = vlaneseq
    %v443 = vshrl.u32 %v442, 7
    %v444 = vsub.s32 2, %v443
    %v445 = vrot.slane %v430, %v444
    %v446 = vmul.f32 %v445, 0.0
    %v447 = vlaneseq
    %v448 = vshrl.u32 %v447, 7
    %v449 = vsub.s32 3, %v448
    %v450 = vrot.slane %v430, %v449
    %v451 = vmul.f32 %v450, 0.0
    %v452 = vlaneseq
    %v453 = vshrl.u32 %v452, 7
    %v454 = vsub.s32 4, %v453
    %v455 = vrot.slane %v430, %v454
    %v456 = vmul.f32 %v455, 0.0
    %v457 = vlaneseq
    %v458 = vshrl.u32 %v457, 7
    %v459 = vsub.s32 5, %v458
    %v460 = vrot.slane %v430, %v459
    %v461 = vmul.f32 %v460, 0.0
    %v462 = vlaneseq
    %v463 = vshrl.u32 %v462, 7
    %v464 = vsub.s32 6, %v463
    %v465 = vrot.slane %v430, %v464
    %v466 = vmul.f32 %v465, 0.0
    %v467 = vlaneseq
    %v468 = vshrl.u32 %v467, 7
    %v469 = vsub.s32 7, %v468
    %v470 = vrot.slane %v430, %v469
    %v471 = vmul.f32 %v470, 0.0
    %v472 = vadd.f32 %v436, %v441
    %v473 = vadd.f32 %v446, %v451
    %v474 = vadd.f32 %v456, %v461
    %v475 = vadd.f32 %v466, %v471
    %v476 = vadd.f32 %v472, %v473
    %v477 = vadd.f32 %v474, %v475
    %v478 = vadd.f32 %v476, %v477
    %v480 = vlaneseq
    %v481 = vshrl.u32 %v480, 7
    %v482 = vsub.s32 0, %v481
    %v483 = vrot.slane %v431, %v482
    %v485 = vadd.f32 %v483, %v478
    %v486 = vadd.f32 %v422, %v485
    %v487 = vxor.u32 %v486, 2147483648
    %v488 = vmul.f32 %v487, 1.442695
    %v489 = vpow.pop %v488
    %v490 = vadd.f32 %v489, 1.0
    %v491 = vrcp.pop %v490
    %v492 = vmul.f32 1.0, %v491
    %494 = vrot.lane.b32.xlu0 %v485, 112
    %v495 = vpop.permute.xlu0 %494
    %v497 = vmul.f32 %v492, %v495
    %499 = vrot.lane.b32.xlu0 %v497, 16
    %v500 = vpop.permute.xlu0 %499
    %v502 = vadd.f32 %v422, %v500
    %v503 = vtanh.pop %v502
    %v504 = vsub.f32 1.0, %v492
    %506 = vrot.lane.b32.xlu0 %v503, 120
    %v507 = vpop.permute.xlu0 %506
    %v509 = vmul.f32 %v504, %v507
    %v510 = vmul.f32 %v492, 0.0
    %v511 = vadd.f32 %v509, %v510
    %s512 = sld [smem:[#allocation3]]
    %v513 = vstv %s512
    %v514 = vmul.f32 %v513, %v511
    %v515 = vadd.f32 %v514, 0.0
    %s516 = sld [smem:[#allocation6]]
    %v517 = vstv %s516
    %v518 = vmul.f32 %v517, %v511
    %v519 = vadd.f32 %v518, 0.0
    %521 = vset.pattern.permute.xlu0 8
    %522 = vperm.xlu0 %521, %v511
    %v523 = vpop.permute.xlu0 %522
    %v525 = vmul.f32 %v523, %v435
    %526 = vset.pattern.permute.xlu0 9
    %527 = vperm.xlu0 %526, %v511
    %v528 = vpop.permute.xlu0 %527
    %v530 = vmul.f32 %v528, %v440
    %531 = vset.pattern.permute.xlu0 10
    %532 = vperm.xlu0 %531, %v511
    %v533 = vpop.permute.xlu0 %532
    %v535 = vmul.f32 %v533, %v445
    %536 = vset.pattern.permute.xlu0 11
    %537 = vperm.xlu0 %536, %v511
    %v538 = vpop.permute.xlu0 %537
    %v540 = vmul.f32 %v538, %v450
    %541 = vset.pattern.permute.xlu0 12
    %542 = vperm.xlu0 %541, %v511
    %v543 = vpop.permute.xlu0 %542
    %v545 = vmul.f32 %v543, %v455
    %546 = vset.pattern.permute.xlu0 13
    %547 = vperm.xlu0 %546, %v511
    %v548 = vpop.permute.xlu0 %547
    %v550 = vmul.f32 %v548, %v460
    %551 = vset.pattern.permute.xlu0 14
    %552 = vperm.xlu0 %551, %v511
    %v553 = vpop.permute.xlu0 %552
    %v555 = vmul.f32 %v553, %v465
    %556 = vset.pattern.permute.xlu0 15
    %557 = vperm.xlu0 %556, %v511
    %v558 = vpop.permute.xlu0 %557
    %v560 = vmul.f32 %v558, %v470
    %v561 = vadd.f32 %v525, %v530
    %v562 = vadd.f32 %v535, %v540
    %v563 = vadd.f32 %v545, %v550
    %v564 = vadd.f32 %v555, %v560
    %v565 = vadd.f32 %v561, %v562
    %v566 = vadd.f32 %v563, %v564
    %v567 = vadd.f32 %v565, %v566
    %v568 = vadd.f32 %v483, %v567
    %v570 = vrot.slane %v568, 6
    %v572 = vadd.f32 %v422, %v570
    %v573 = vxor.u32 %v572, 2147483648
    %v574 = vmul.f32 %v573, 1.442695
    %v575 = vpow.pop %v574
    %v576 = vadd.f32 %v575, 1.0
    %v577 = vrcp.pop %v576
    %v578 = vmul.f32 1.0, %v577
    %579 = vrot.lane.b32.xlu0 %v570, 112
    %v580 = vpop.permute.xlu0 %579
    %v582 = vmul.f32 %v578, %v580
    %584 = vrot.lane.b32.xlu0 %v582, 16
    %v585 = vpop.permute.xlu0 %584
    %v587 = vadd.f32 %v422, %v585
    %v588 = vtanh.pop %v587
    %v589 = vsub.f32 1.0, %v578
    %591 = vrot.lane.b32.xlu0 %v588, 120
    %v592 = vpop.permute.xlu0 %591
    %v594 = vmul.f32 %v589, %v592
    %v595 = vrot.slane %v511, 6
    %v597 = vmul.f32 %v578, %v595
    %v598 = vadd.f32 %v594, %v597
    %s599 = sld [smem:[#allocation3 + $0x1]]
    %v600 = vstv %s599
    %v601 = vmul.f32 %v600, %v598
    %v603 = vrot.slane %v601, 2
    %v605 = vadd.f32 %v515, %v603
    %s606 = sld [smem:[#allocation6 + $0x1]]
    %v607 = vstv %s606
    %v608 = vmul.f32 %v607, %v598
    %v610 = vrot.slane %v608, 2
    %v612 = vadd.f32 %v519, %v610
    %614 = vset.pattern.permute.xlu0 8
    %615 = vperm.xlu0 %614, %v598
    %v616 = vpop.permute.xlu0 %615
    %v618 = vmul.f32 %v616, %v435
    %619 = vset.pattern.permute.xlu0 9
    %620 = vperm.xlu0 %619, %v598
    %v621 = vpop.permute.xlu0 %620
    %v623 = vmul.f32 %v621, %v440
    %624 = vset.pattern.permute.xlu0 10
    %625 = vperm.xlu0 %624, %v598
    %v626 = vpop.permute.xlu0 %625
    %v628 = vmul.f32 %v626, %v445
    %629 = vset.pattern.permute.xlu0 11
    %630 = vperm.xlu0 %629, %v598
    %v631 = vpop.permute.xlu0 %630
    %v633 = vmul.f32 %v631, %v450
    %634 = vset.pattern.permute.xlu0 12
    %635 = vperm.xlu0 %634, %v598
    %v636 = vpop.permute.xlu0 %635
    %v638 = vmul.f32 %v636, %v455
    %639 = vset.pattern.permute.xlu0 13
    %640 = vperm.xlu0 %639, %v598
    %v641 = vpop.permute.xlu0 %640
    %v643 = vmul.f32 %v641, %v460
    %644 = vset.pattern.permute.xlu0 14
    %645 = vperm.xlu0 %644, %v598
    %v646 = vpop.permute.xlu0 %645
    %v648 = vmul.f32 %v646, %v465
    %649 = vset.pattern.permute.xlu0 15
    %650 = vperm.xlu0 %649, %v598
    %v651 = vpop.permute.xlu0 %650
    %v653 = vmul.f32 %v651, %v470
    %v654 = vadd.f32 %v618, %v623
    %v655 = vadd.f32 %v628, %v633
    %v656 = vadd.f32 %v638, %v643
    %v657 = vadd.f32 %v648, %v653
    %v658 = vadd.f32 %v654, %v655
    %v659 = vadd.f32 %v656, %v657
    %v660 = vadd.f32 %v658, %v659
    %v661 = vadd.f32 %v483, %v660
    %v663 = vrot.slane %v661, 6
    %v665 = vadd.f32 %v422, %v663
    %v666 = vxor.u32 %v665, 2147483648
    %v667 = vmul.f32 %v666, 1.442695
    %v668 = vpow.pop %v667
    %v669 = vadd.f32 %v668, 1.0
    %v670 = vrcp.pop %v669
    %v671 = vmul.f32 1.0, %v670
    %672 = vrot.lane.b32.xlu0 %v663, 112
    %v673 = vpop.permute.xlu0 %672
    %v675 = vmul.f32 %v671, %v673
    %677 = vrot.lane.b32.xlu0 %v675, 16
    %v678 = vpop.permute.xlu0 %677
    %v680 = vadd.f32 %v422, %v678
    %v681 = vtanh.pop %v680
    %v682 = vsub.f32 1.0, %v671
    %684 = vrot.lane.b32.xlu0 %v681, 120
    %v685 = vpop.permute.xlu0 %684
    %v687 = vmul.f32 %v682, %v685
    %v688 = vrot.slane %v598, 6
    %v690 = vmul.f32 %v671, %v688
    %v691 = vadd.f32 %v687, %v690
    %s692 = sld [smem:[#allocation3 + $0x2]]
    %v693 = vstv %s692
    %v694 = vmul.f32 %v693, %v691
    %v696 = vrot.slane %v694, 4
    %v698 = vadd.f32 %v605, %v696
    %s699 = sld [smem:[#allocation6 + $0x2]]
    %v700 = vstv %s699
    %v701 = vmul.f32 %v700, %v691
    %v703 = vrot.slane %v701, 4
    %v705 = vadd.f32 %v612, %v703
    %707 = vset.pattern.permute.xlu0 8
    %708 = vperm.xlu0 %707, %v691
    %v709 = vpop.permute.xlu0 %708
    %v711 = vmul.f32 %v709, %v435
    %712 = vset.pattern.permute.xlu0 9
    %713 = vperm.xlu0 %712, %v691
    %v714 = vpop.permute.xlu0 %713
    %v716 = vmul.f32 %v714, %v440
    %717 = vset.pattern.permute.xlu0 10
    %718 = vperm.xlu0 %717, %v691
    %v719 = vpop.permute.xlu0 %718
    %v721 = vmul.f32 %v719, %v445
    %722 = vset.pattern.permute.xlu0 11
    %723 = vperm.xlu0 %722, %v691
    %v724 = vpop.permute.xlu0 %723
    %v726 = vmul.f32 %v724, %v450
    %727 = vset.pattern.permute.xlu0 12
    %728 = vperm.xlu0 %727, %v691
    %v729 = vpop.permute.xlu0 %728
    %v731 = vmul.f32 %v729, %v455
    %732 = vset.pattern.permute.xlu0 13
    %733 = vperm.xlu0 %732, %v691
    %v734 = vpop.permute.xlu0 %733
    %v736 = vmul.f32 %v734, %v460
    %737 = vset.pattern.permute.xlu0 14
    %738 = vperm.xlu0 %737, %v691
    %v739 = vpop.permute.xlu0 %738
    %v741 = vmul.f32 %v739, %v465
    %742 = vset.pattern.permute.xlu0 15
    %743 = vperm.xlu0 %742, %v691
    %v744 = vpop.permute.xlu0 %743
    %v746 = vmul.f32 %v744, %v470
    %v747 = vadd.f32 %v711, %v716
    %v748 = vadd.f32 %v721, %v726
    %v749 = vadd.f32 %v731, %v736
    %v750 = vadd.f32 %v741, %v746
    %v751 = vadd.f32 %v747, %v748
    %v752 = vadd.f32 %v749, %v750
    %v753 = vadd.f32 %v751, %v752
    %v754 = vadd.f32 %v483, %v753
    %v756 = vrot.slane %v754, 6
    %v758 = vadd.f32 %v422, %v756
    %v759 = vxor.u32 %v758, 2147483648
    %v760 = vmul.f32 %v759, 1.442695
    %v761 = vpow.pop %v760
    %v762 = vadd.f32 %v761, 1.0
    %v763 = vrcp.pop %v762
    %v764 = vmul.f32 1.0, %v763
    %765 = vrot.lane.b32.xlu0 %v756, 112
    %v766 = vpop.permute.xlu0 %765
    %v768 = vmul.f32 %v764, %v766
    %770 = vrot.lane.b32.xlu0 %v768, 16
    %v771 = vpop.permute.xlu0 %770
    %v773 = vadd.f32 %v422, %v771
    %v774 = vtanh.pop %v773
    %v775 = vsub.f32 1.0, %v764
    %777 = vrot.lane.b32.xlu0 %v774, 120
    %v778 = vpop.permute.xlu0 %777
    %v780 = vmul.f32 %v775, %v778
    %v781 = vrot.slane %v691, 6
    %v783 = vmul.f32 %v764, %v781
    %v784 = vadd.f32 %v780, %v783
    %s785 = sld [smem:[#allocation3 + $0x3]]
    %v786 = vstv %s785
    %v787 = vmul.f32 %v786, %v784
    %v789 = vrot.slane %v787, 6
    %v791 = vadd.f32 %v698, %v789
    %s792 = sld [smem:[#allocation6 + $0x3]]
    %v793 = vstv %s792
    %v794 = vmul.f32 %v793, %v784
    %v796 = vrot.slane %v794, 6
    %v798 = vadd.f32 %v705, %v796
    %800 = vset.pattern.permute.xlu0 8
    %801 = vperm.xlu0 %800, %v784
    %v802 = vpop.permute.xlu0 %801
    %v804 = vmul.f32 %v802, %v435
    %805 = vset.pattern.permute.xlu0 9
    %806 = vperm.xlu0 %805, %v784
    %v807 = vpop.permute.xlu0 %806
    %v809 = vmul.f32 %v807, %v440
    %810 = vset.pattern.permute.xlu0 10
    %811 = vperm.xlu0 %810, %v784
    %v812 = vpop.permute.xlu0 %811
    %v814 = vmul.f32 %v812, %v445
    %815 = vset.pattern.permute.xlu0 11
    %816 = vperm.xlu0 %815, %v784
    %v817 = vpop.permute.xlu0 %816
    %v819 = vmul.f32 %v817, %v450
    %820 = vset.pattern.permute.xlu0 12
    %821 = vperm.xlu0 %820, %v784
    %v822 = vpop.permute.xlu0 %821
    %v824 = vmul.f32 %v822, %v455
    %825 = vset.pattern.permute.xlu0 13
    %826 = vperm.xlu0 %825, %v784
    %v827 = vpop.permute.xlu0 %826
    %v829 = vmul.f32 %v827, %v460
    %830 = vset.pattern.permute.xlu0 14
    %831 = vperm.xlu0 %830, %v784
    %v832 = vpop.permute.xlu0 %831
    %v834 = vmul.f32 %v832, %v465
    %835 = vset.pattern.permute.xlu0 15
    %836 = vperm.xlu0 %835, %v784
    %v837 = vpop.permute.xlu0 %836
    %v839 = vmul.f32 %v837, %v470
    %v840 = vadd.f32 %v804, %v809
    %v841 = vadd.f32 %v814, %v819
    %v842 = vadd.f32 %v824, %v829
    %v843 = vadd.f32 %v834, %v839
    %v844 = vadd.f32 %v840, %v841
    %v845 = vadd.f32 %v842, %v843
    %v846 = vadd.f32 %v844, %v845
    %v847 = vadd.f32 %v483, %v846
    %v849 = vrot.slane %v847, 6
    %v851 = vadd.f32 %v427, %v849
    %v852 = vxor.u32 %v851, 2147483648
    %v853 = vmul.f32 %v852, 1.442695
    %v854 = vpow.pop %v853
    %v855 = vadd.f32 %v854, 1.0
    %v856 = vrcp.pop %v855
    %v857 = vmul.f32 1.0, %v856
    %858 = vrot.lane.b32.xlu0 %v849, 112
    %v859 = vpop.permute.xlu0 %858
    %v861 = vmul.f32 %v857, %v859
    %863 = vrot.lane.b32.xlu0 %v861, 16
    %v864 = vpop.permute.xlu0 %863
    %v866 = vadd.f32 %v427, %v864
    %v867 = vtanh.pop %v866
    %v868 = vsub.f32 1.0, %v857
    %870 = vrot.lane.b32.xlu0 %v867, 120
    %v871 = vpop.permute.xlu0 %870
    %v873 = vmul.f32 %v868, %v871
    %v874 = vrot.slane %v784, 6
    %v876 = vmul.f32 %v857, %v874
    %v877 = vadd.f32 %v873, %v876
    %s878 = sld [smem:[#allocation3 + $0x4]]
    %v879 = vstv %s878
    %v880 = vmul.f32 %v879, %v877
    %v881 = vadd.f32 %v791, %v880
    %s882 = sld [smem:[#allocation6 + $0x4]]
    %v883 = vstv %s882
    %v884 = vmul.f32 %v883, %v877
    %v885 = vadd.f32 %v798, %v884
    %887 = vset.pattern.permute.xlu0 8
    %888 = vperm.xlu0 %887, %v877
    %v889 = vpop.permute.xlu0 %888
    %v891 = vmul.f32 %v889, %v435
    %892 = vset.pattern.permute.xlu0 9
    %893 = vperm.xlu0 %892, %v877
    %v894 = vpop.permute.xlu0 %893
    %v896 = vmul.f32 %v894, %v440
    %897 = vset.pattern.permute.xlu0 10
    %898 = vperm.xlu0 %897, %v877
    %v899 = vpop.permute.xlu0 %898
    %v901 = vmul.f32 %v899, %v445
    %902 = vset.pattern.permute.xlu0 11
    %903 = vperm.xlu0 %902, %v877
    %v904 = vpop.permute.xlu0 %903
    %v906 = vmul.f32 %v904, %v450
    %907 = vset.pattern.permute.xlu0 12
    %908 = vperm.xlu0 %907, %v877
    %v909 = vpop.permute.xlu0 %908
    %v911 = vmul.f32 %v909, %v455
    %912 = vset.pattern.permute.xlu0 13
    %913 = vperm.xlu0 %912, %v877
    %v914 = vpop.permute.xlu0 %913
    %v916 = vmul.f32 %v914, %v460
    %917 = vset.pattern.permute.xlu0 14
    %918 = vperm.xlu0 %917, %v877
    %v919 = vpop.permute.xlu0 %918
    %v921 = vmul.f32 %v919, %v465
    %922 = vset.pattern.permute.xlu0 15
    %923 = vperm.xlu0 %922, %v877
    %v924 = vpop.permute.xlu0 %923
    %v926 = vmul.f32 %v924, %v470
    %v927 = vadd.f32 %v891, %v896
    %v928 = vadd.f32 %v901, %v906
    %v929 = vadd.f32 %v911, %v916
    %v930 = vadd.f32 %v921, %v926
    %v931 = vadd.f32 %v927, %v928
    %v932 = vadd.f32 %v929, %v930
    %v933 = vadd.f32 %v931, %v932
    %v934 = vadd.f32 %v483, %v933
    %v936 = vrot.slane %v934, 6
    %v938 = vadd.f32 %v427, %v936
    %v939 = vxor.u32 %v938, 2147483648
    %v940 = vmul.f32 %v939, 1.442695
    %v941 = vpow.pop %v940
    %v942 = vadd.f32 %v941, 1.0
    %v943 = vrcp.pop %v942
    %v944 = vmul.f32 1.0, %v943
    %945 = vrot.lane.b32.xlu0 %v936, 112
    %v946 = vpop.permute.xlu0 %945
    %v948 = vmul.f32 %v944, %v946
    %950 = vrot.lane.b32.xlu0 %v948, 16
    %v951 = vpop.permute.xlu0 %950
    %v953 = vadd.f32 %v427, %v951
    %v954 = vtanh.pop %v953
    %v955 = vsub.f32 1.0, %v944
    %957 = vrot.lane.b32.xlu0 %v954, 120
    %v958 = vpop.permute.xlu0 %957
    %v960 = vmul.f32 %v955, %v958
    %v961 = vrot.slane %v877, 6
    %v963 = vmul.f32 %v944, %v961
    %v964 = vadd.f32 %v960, %v963
    %s965 = sld [smem:[#allocation3 + $0x5]]
    %v966 = vstv %s965
    %v967 = vmul.f32 %v966, %v964
    %v969 = vrot.slane %v967, 2
    %v971 = vadd.f32 %v881, %v969
    %s972 = sld [smem:[#allocation6 + $0x5]]
    %v973 = vstv %s972
    %v974 = vmul.f32 %v973, %v964
    %v976 = vrot.slane %v974, 2
    %v978 = vadd.f32 %v885, %v976
    %980 = vset.pattern.permute.xlu0 8
    %981 = vperm.xlu0 %980, %v964
    %v982 = vpop.permute.xlu0 %981
    %v984 = vmul.f32 %v982, %v435
    %985 = vset.pattern.permute.xlu0 9
    %986 = vperm.xlu0 %985, %v964
    %v987 = vpop.permute.xlu0 %986
    %v989 = vmul.f32 %v987, %v440
    %990 = vset.pattern.permute.xlu0 10
    %991 = vperm.xlu0 %990, %v964
    %v992 = vpop.permute.xlu0 %991
    %v994 = vmul.f32 %v992, %v445
    %995 = vset.pattern.permute.xlu0 11
    %996 = vperm.xlu0 %995, %v964
    %v997 = vpop.permute.xlu0 %996
    %v999 = vmul.f32 %v997, %v450
    %1000 = vset.pattern.permute.xlu0 12
    %1001 = vperm.xlu0 %1000, %v964
    %v1002 = vpop.permute.xlu0 %1001
    %v1004 = vmul.f32 %v1002, %v455
    %1005 = vset.pattern.permute.xlu0 13
    %1006 = vperm.xlu0 %1005, %v964
    %v1007 = vpop.permute.xlu0 %1006
    %v1009 = vmul.f32 %v1007, %v460
    %1010 = vset.pattern.permute.xlu0 14
    %1011 = vperm.xlu0 %1010, %v964
    %v1012 = vpop.permute.xlu0 %1011
    %v1014 = vmul.f32 %v1012, %v465
    %1015 = vset.pattern.permute.xlu0 15
    %1016 = vperm.xlu0 %1015, %v964
    %v1017 = vpop.permute.xlu0 %1016
    %v1019 = vmul.f32 %v1017, %v470
    %v1020 = vadd.f32 %v984, %v989
    %v1021 = vadd.f32 %v994, %v999
    %v1022 = vadd.f32 %v1004, %v1009
    %v1023 = vadd.f32 %v1014, %v1019
    %v1024 = vadd.f32 %v1020, %v1021
    %v1025 = vadd.f32 %v1022, %v1023
    %v1026 = vadd.f32 %v1024, %v1025
    %v1027 = vadd.f32 %v483, %v1026
    %v1029 = vrot.slane %v1027, 6
    %v1031 = vadd.f32 %v427, %v1029
    %v1032 = vxor.u32 %v1031, 2147483648
    %v1033 = vmul.f32 %v1032, 1.442695
    %v1034 = vpow.pop %v1033
    %v1035 = vadd.f32 %v1034, 1.0
    %v1036 = vrcp.pop %v1035
    %v1037 = vmul.f32 1.0, %v1036
    %1038 = vrot.lane.b32.xlu0 %v1029, 112
    %v1039 = vpop.permute.xlu0 %1038
    %v1041 = vmul.f32 %v1037, %v1039
    %1043 = vrot.lane.b32.xlu0 %v1041, 16
    %v1044 = vpop.permute.xlu0 %1043
    %v1046 = vadd.f32 %v427, %v1044
    %v1047 = vtanh.pop %v1046
    %v1048 = vsub.f32 1.0, %v1037
    %1050 = vrot.lane.b32.xlu0 %v1047, 120
    %v1051 = vpop.permute.xlu0 %1050
    %v1053 = vmul.f32 %v1048, %v1051
    %v1054 = vrot.slane %v964, 6
    %v1056 = vmul.f32 %v1037, %v1054
    %v1057 = vadd.f32 %v1053, %v1056
    %s1058 = sld [smem:[#allocation3 + $0x6]]
    %v1059 = vstv %s1058
    %v1060 = vmul.f32 %v1059, %v1057
    %v1062 = vrot.slane %v1060, 4
    %v1064 = vadd.f32 %v971, %v1062
    %s1065 = sld [smem:[#allocation6 + $0x6]]
    %v1066 = vstv %s1065
    %v1067 = vmul.f32 %v1066, %v1057
    %v1069 = vrot.slane %v1067, 4
    %v1071 = vadd.f32 %v978, %v1069
    %1073 = vset.pattern.permute.xlu0 8
    %1074 = vperm.xlu0 %1073, %v1057
    %v1075 = vpop.permute.xlu0 %1074
    %v1077 = vmul.f32 %v1075, %v435
    %1078 = vset.pattern.permute.xlu0 9
    %1079 = vperm.xlu0 %1078, %v1057
    %v1080 = vpop.permute.xlu0 %1079
    %v1082 = vmul.f32 %v1080, %v440
    %1083 = vset.pattern.permute.xlu0 10
    %1084 = vperm.xlu0 %1083, %v1057
    %v1085 = vpop.permute.xlu0 %1084
    %v1087 = vmul.f32 %v1085, %v445
    %1088 = vset.pattern.permute.xlu0 11
    %1089 = vperm.xlu0 %1088, %v1057
    %v1090 = vpop.permute.xlu0 %1089
    %v1092 = vmul.f32 %v1090, %v450
    %1093 = vset.pattern.permute.xlu0 12
    %1094 = vperm.xlu0 %1093, %v1057
    %v1095 = vpop.permute.xlu0 %1094
    %v1097 = vmul.f32 %v1095, %v455
    %1098 = vset.pattern.permute.xlu0 13
    %1099 = vperm.xlu0 %1098, %v1057
    %v1100 = vpop.permute.xlu0 %1099
    %v1102 = vmul.f32 %v1100, %v460
    %1103 = vset.pattern.permute.xlu0 14
    %1104 = vperm.xlu0 %1103, %v1057
    %v1105 = vpop.permute.xlu0 %1104
    %v1107 = vmul.f32 %v1105, %v465
    %1108 = vset.pattern.permute.xlu0 15
    %1109 = vperm.xlu0 %1108, %v1057
    %v1110 = vpop.permute.xlu0 %1109
    %v1112 = vmul.f32 %v1110, %v470
    %v1113 = vadd.f32 %v1077, %v1082
    %v1114 = vadd.f32 %v1087, %v1092
    %v1115 = vadd.f32 %v1097, %v1102
    %v1116 = vadd.f32 %v1107, %v1112
    %v1117 = vadd.f32 %v1113, %v1114
    %v1118 = vadd.f32 %v1115, %v1116
    %v1119 = vadd.f32 %v1117, %v1118
    %v1120 = vadd.f32 %v483, %v1119
    %v1122 = vrot.slane %v1120, 6
    %v1124 = vadd.f32 %v427, %v1122
    %v1125 = vxor.u32 %v1124, 2147483648
    %v1126 = vmul.f32 %v1125, 1.442695
    %v1127 = vpow.pop %v1126
    %v1128 = vadd.f32 %v1127, 1.0
    %v1129 = vrcp.pop %v1128
    %v1130 = vmul.f32 1.0, %v1129
    %1131 = vrot.lane.b32.xlu0 %v1122, 112
    %v1132 = vpop.permute.xlu0 %1131
    %v1134 = vmul.f32 %v1130, %v1132
    %1136 = vrot.lane.b32.xlu0 %v1134, 16
    %v1137 = vpop.permute.xlu0 %1136
    %v1139 = vadd.f32 %v427, %v1137
    %v1140 = vtanh.pop %v1139
    %v1141 = vsub.f32 1.0, %v1130
    %1143 = vrot.lane.b32.xlu0 %v1140, 120
    %v1144 = vpop.permute.xlu0 %1143
    %v1146 = vmul.f32 %v1141, %v1144
    %v1147 = vrot.slane %v1057, 6
    %v1149 = vmul.f32 %v1130, %v1147
    %v1150 = vadd.f32 %v1146, %v1149
    %s1151 = sld [smem:[#allocation3 + $0x7]]
    %v1152 = vstv %s1151
    %v1153 = vmul.f32 %v1152, %v1150
    %v1155 = vrot.slane %v1153, 6
    %v1157 = vadd.f32 %v1064, %v1155
    %s1158 = sld [smem:[#allocation6 + $0x7]]
    %v1159 = vstv %s1158
    %v1160 = vmul.f32 %v1159, %v1150
    %v1162 = vrot.slane %v1160, 6
    %v1164 = vadd.f32 %v1071, %v1162
    %v1165 = vlaneseq
    %v1166 = vshrl.u32 %v1165, 7
    %v1167 = vlaneseq
    %v1168 = vand.u32 %v1167, 127
    %vm1169 = vcmp.eq.s32.totalorder %v1166, %v1168
    %v1170 = vsel %vm1169, 1, 0
    %v1171 = vcvt.s32.f32 %v1170
    %v1172 = vlaneseq
    %v1173 = vshrl.u32 %v1172, 7
    %v1174 = vsub.s32 0, %v1173
    %v1175 = vrot.slane %v1157, %v1174
    %1177 = vrot.lane.b32.xlu0 %v1171, 8
    %v1178 = vpop.permute.xlu0 %1177
    %v1180 = vmul.f32 %v1175, %v1178
    %1182 = vrot.lane.b32.xlu0 %v1180, 120
    %v1183 = vpop.permute.xlu0 %1182
    %vm1185 = vcmask 64512
    %v1186 = vsel %vm1185, %v1183, 0.0
    %1187 = vadd.xlane.f32.xlu0 %v1186
    %v1188 = vpop.xlane.xlu0 %1187
    %v1189 = vlaneseq
    %v1190 = vshrl.u32 %v1189, 7
    %v1191 = vsub.s32 0, %v1190
    %v1192 = vrot.slane %v1164, %v1191
    %v1193 = vmul.f32 %v1192, %v1178
    %1195 = vrot.lane.b32.xlu0 %v1193, 120
    %v1196 = vpop.permute.xlu0 %1195
    %v1198 = vsel %vm1185, %v1196, 0.0
    %1199 = vadd.xlane.f32.xlu0 %v1198
    %v1200 = vpop.xlane.xlu0 %1199
    %v1201 = vadd.f32 %v1188, %v1192
    %vm1202 = vcmp.gt.f32.partialorder %v1201, 0.0
    %v1203 = vmul.f32 %v1201, 0.2
    %v1204 = vsel %vm1202, %v1201, %v1203
    %vm1205 = vcmask 130112
    %v1206 = vsel %vm1205, %v1204, -inf
    %1207 = vmax.xlane.f32.xlu0 %v1206
    %v1208 = vpop.xlane.xlu0 %1207
    %v1209 = vsub.f32 %v1204, %v1208
    %v1210 = vmul.f32 %v1209, 1.442695
    %v1211 = vpow.pop %v1210
    %1213 = vrot.lane.b32.xlu0 %v1211, 120
    %v1214 = vpop.permute.xlu0 %1213
    %v1216 = vsel %vm1185, %v1214, 0.0
    %1217 = vadd.xlane.f32.xlu0 %v1216
    %v1218 = vpop.xlane.xlu0 %1217
    %v1219 = vrcp.pop %v1218
    %v1220 = vmul.f32 %v1211, %v1219
    %v1221 = vadd.f32 %v1220, 0.0
    %v1222 = vadd.f32 %v1200, %v1175
    %vm1223 = vcmp.gt.f32.partialorder %v1222, 0.0
    %v1224 = vmul.f32 %v1222, 0.2
    %v1225 = vsel %vm1223, %v1222, %v1224
    %v1226 = vsel %vm1205, %v1225, -inf
    %v1227 = vrot.slane %v1226, 4
    %v1228 = vmax.f32 %v1226, %v1227
    %v1229 = vrot.slane %v1228, 2
    %v1230 = vmax.f32 %v1228, %v1229
    %v1231 = vrot.slane %v1230, 1
    %v1232 = vmax.f32 %v1230, %v1231
    %v1233 = vsub.f32 %v1225, %v1232
    %v1234 = vmul.f32 %v1233, 1.442695
    %v1235 = vpow.pop %v1234
    %v1236 = vsel %vm1205, %v1235, 0.0
    %v1237 = vrot.slane %v1236, 4
    %v1238 = vadd.f32 %v1236, %v1237
    %v1239 = vrot.slane %v1238, 2
    %v1240 = vadd.f32 %v1238, %v1239
    %v1241 = vrot.slane %v1240, 1
    %v1242 = vadd.f32 %v1240, %v1241
    %v1243 = vrcp.pop %v1242
    %v1244 = vmul.f32 %v1235, %v1243
    %v1245 = vadd.f32 %v1244, 0.0
    %v1246 = vlaneseq
    %v1247 = vshrl.u32 %v1246, 7
    %v1248 = vsub.s32 1, %v1247
    %v1249 = vrot.slane %v1157, %v1248
    %v1250 = vmul.f32 %v1249, %v1178
    %1252 = vrot.lane.b32.xlu0 %v1250, 120
    %v1253 = vpop.permute.xlu0 %1252
    %v1255 = vsel %vm1185, %v1253, 0.0
    %1256 = vadd.xlane.f32.xlu0 %v1255
    %v1257 = vpop.xlane.xlu0 %1256
    %v1258 = vlaneseq
    %v1259 = vshrl.u32 %v1258, 7
    %v1260 = vsub.s32 1, %v1259
    %v1261 = vrot.slane %v1164, %v1260
    %v1262 = vmul.f32 %v1261, %v1178
    %1264 = vrot.lane.b32.xlu0 %v1262, 120
    %v1265 = vpop.permute.xlu0 %1264
    %v1267 = vsel %vm1185, %v1265, 0.0
    %1268 = vadd.xlane.f32.xlu0 %v1267
    %v1269 = vpop.xlane.xlu0 %1268
    %v1270 = vadd.f32 %v1257, %v1261
    %vm1271 = vcmp.gt.f32.partialorder %v1270, 0.0
    %v1272 = vmul.f32 %v1270, 0.2
    %v1273 = vsel %vm1271, %v1270, %v1272
    %v1274 = vsel %vm1205, %v1273, -inf
    %1275 = vmax.xlane.f32.xlu0 %v1274
    %v1276 = vpop.xlane.xlu0 %1275
    %v1277 = vsub.f32 %v1273, %v1276
    %v1278 = vmul.f32 %v1277, 1.442695
    %v1279 = vpow.pop %v1278
    %1281 = vrot.lane.b32.xlu0 %v1279, 120
    %v1282 = vpop.permute.xlu0 %1281
    %v1284 = vsel %vm1185, %v1282, 0.0
    %1285 = vadd.xlane.f32.xlu0 %v1284
    %v1286 = vpop.xlane.xlu0 %1285
    %v1287 = vrcp.pop %v1286
    %v1288 = vmul.f32 %v1279, %v1287
    %v1289 = vadd.f32 %v1221, %v1288
    %v1290 = vadd.f32 %v1269, %v1249
    %vm1291 = vcmp.gt.f32.partialorder %v1290, 0.0
    %v1292 = vmul.f32 %v1290, 0.2
    %v1293 = vsel %vm1291, %v1290, %v1292
    %v1294 = vsel %vm1205, %v1293, -inf
    %v1295 = vrot.slane %v1294, 4
    %v1296 = vmax.f32 %v1294, %v1295
    %v1297 = vrot.slane %v1296, 2
    %v1298 = vmax.f32 %v1296, %v1297
    %v1299 = vrot.slane %v1298, 1
    %v1300 = vmax.f32 %v1298, %v1299
    %v1301 = vsub.f32 %v1293, %v1300
    %v1302 = vmul.f32 %v1301, 1.442695
    %v1303 = vpow.pop %v1302
    %v1304 = vsel %vm1205, %v1303, 0.0
    %v1305 = vrot.slane %v1304, 4
    %v1306 = vadd.f32 %v1304, %v1305
    %v1307 = vrot.slane %v1306, 2
    %v1308 = vadd.f32 %v1306, %v1307
    %v1309 = vrot.slane %v1308, 1
    %v1310 = vadd.f32 %v1308, %v1309
    %v1311 = vrcp.pop %v1310
    %v1312 = vmul.f32 %v1303, %v1311
    %v1313 = vadd.f32 %v1245, %v1312
    %v1314 = vmul.f32 %v1289, 0.5
    %v1315 = vmul.f32 %v1313, 0.5
    %1317 = vrot.lane.b32.xlu0 %v1314, 120
    %v1318 = vpop.permute.xlu0 %1317
    %v1320 = vsel %vm1185, %v1318, 0.0
    %1321 = vadd.xlane.f32.xlu0 %v1320
    %v1322 = vpop.xlane.xlu0 %1321
    %v1323 = vadd.f32 %v1314, %v1315
    %v1324 = vmul.f32 %v1323, 0.5
    %v1325 = vrsqrt.pop %v1322
    %v1326 = vmul.f32 %v1322, %v1325
    %vm1327 = vcmp.eq.f32.partialorder %v1322, inf
    %v1328 = vsel %vm1327, %v1322, %v1326
    %vm1329 = vcmp.eq.f32.partialorder %v1322, 0.0
    %v1330 = vand.u32 %v1322, 2147483648
    %v1331 = vsel %vm1329, %v1330, %v1328
    %v1332 = vadd.f32 %v1331, 1e-07
    %v1333 = vrcp.pop %v1332
    %v1334 = vmul.f32 1.0, %v1333
    %v1335 = vmul.f32 %v1334, %v1171
    %v1336 = vsel %vm1185, %v1335, 0.0
    %v1337 = vrot.slane %v1336, 4
    %v1338 = vadd.f32 %v1336, %v1337
    %v1339 = vrot.slane %v1338, 2
    %v1340 = vadd.f32 %v1338, %v1339
    %v1341 = vrot.slane %v1340, 1
    %v1342 = vadd.f32 %v1340, %v1341
    %v1343 = vmul.f32 %v1322, %v1171
    %1345 = vrot.lane.b32.xlu0 %v1324, 120
    %v1346 = vpop.permute.xlu0 %1345
    %v1348 = vsub.f32 %v1343, %v1346
    %v1349 = vmul.f32 %v1334, %v1348
    %v1350 = vmul.f32 %v1349, %v1342
    %v1352 = vsel %vm1185, %v1350, 0
    %1354 = vmatprep.subr.mxu0 0.0
    %1355 = vmatpush1.msra.mxu0 %v1350
    %1356 = vmatprep.subr.mxu0 0.0
    %1357 = vmatpush1.msra.mxu0 0.0
    %1358 = vmatprep.subr.mxu0 0.0
    %1359 = vmatpush1.msra.mxu0 0.0
    %1360 = vmatprep.subr.mxu0 0.0
    %1361 = vmatpush1.msra.mxu0 0.0
    %1362 = vmatprep.subr.mxu0 0.0
    %1363 = vmatpush1.msra.mxu0 0.0
    %1364 = vmatprep.subr.mxu0 0.0
    %1365 = vmatpush1.msra.mxu0 0.0
    %1366 = vmatprep.subr.mxu0 0.0
    %1367 = vmatpush1.msra.mxu0 0.0
    %1368 = vmatprep.subr.mxu0 0.0
    %1369 = vmatpush1.msra.mxu0 0.0
    %1370 = vmatprep.subr.mxu0 0.0
    %1371 = vmatpush1.msra.mxu0 0.0
    %1372 = vmatprep.subr.mxu0 0.0
    %1373 = vmatpush1.msra.mxu0 0.0
    %1374 = vmatprep.subr.mxu0 0.0
    %1375 = vmatpush1.msra.mxu0 0.0
    %1376 = vmatprep.subr.mxu0 0.0
    %1377 = vmatpush1.msra.mxu0 0.0
    %1378 = vmatprep.subr.mxu0 0.0
    %1379 = vmatpush1.msra.mxu0 0.0
    %1380 = vmatprep.subr.mxu0 0.0
    %1381 = vmatpush1.msra.mxu0 0.0
    %1382 = vmatprep.subr.mxu0 0.0
    %1383 = vmatpush1.msra.mxu0 0.0
    %1384 = vmatprep.subr.mxu0 0.0
    %1385 = vmatpush1.msra.mxu0 0.0
    %1386 = vmatprep.subr.mxu0 0.0
    %1387 = vmatpush1.msra.mxu0 0.0
    %1388 = vmatprep.subr.mxu0 0.0
    %1389 = vmatpush1.msra.mxu0 0.0
    %1390 = vmatprep.subr.mxu0 0.0
    %1391 = vmatpush1.msra.mxu0 0.0
    %1392 = vmatprep.subr.mxu0 0.0
    %1393 = vmatpush1.msra.mxu0 0.0
    %1394 = vmatprep.subr.mxu0 0.0
    %1395 = vmatpush1.msra.mxu0 0.0
    %1396 = vmatprep.subr.mxu0 0.0
    %1397 = vmatpush1.msra.mxu0 0.0
    %1398 = vmatprep.subr.mxu0 0.0
    %1399 = vmatpush1.msra.mxu0 0.0
    %1400 = vmatprep.subr.mxu0 0.0
    %1401 = vmatpush1.msra.mxu0 0.0
    %1402 = vmatprep.subr.mxu0 0.0
    %1403 = vmatpush1.msra.mxu0 0.0
    %1404 = vmatprep.subr.mxu0 0.0
    %1405 = vmatpush1.msra.mxu0 0.0
    %1406 = vmatprep.subr.mxu0 0.0
    %1407 = vmatpush1.msra.mxu0 0.0
    %1408 = vmatprep.subr.mxu0 0.0
    %1409 = vmatpush1.msra.mxu0 0.0
    %1410 = vmatprep.subr.mxu0 0.0
    %1411 = vmatpush1.msra.mxu0 0.0
    %1412 = vmatprep.subr.mxu0 0.0
    %1413 = vmatpush1.msra.mxu0 0.0
    %1414 = vmatprep.subr.mxu0 0.0
    %1415 = vmatpush1.msra.mxu0 0.0
    %1416 = vmatprep.subr.mxu0 0.0
    %1417 = vmatpush1.msra.mxu0 0.0
    %1418 = vmatprep.mubr.f32.mxu0 0.0
    %1419 = vmatmul.mubr.f32.gmra.mrb[0].mxu0 %v1352
    %v1420 = vpop.f32.mrb[0].mxu0
    %v1421 = vadd.f32 0.0, %v1420
    %v1422 = vpop.f32.mrb[0].mxu0
    %1423 = vdwg.mxu0
    %v1424 = vmul.f32 %v1421, 2.0
    %1425 = vmatprep.subr.mxu0 0.0
    %1426 = vmatpush1.msra.mxu0 %v1424
    %1427 = vmatprep.subr.mxu0 0.0
    %1428 = vmatpush1.msra.mxu0 0.0
    %1429 = vmatprep.subr.mxu0 0.0
    %1430 = vmatpush1.msra.mxu0 0.0
    %1431 = vmatprep.subr.mxu0 0.0
    %1432 = vmatpush1.msra.mxu0 0.0
    %1433 = vmatprep.subr.mxu0 0.0
    %1434 = vmatpush1.msra.mxu0 0.0
    %1435 = vmatprep.subr.mxu0 0.0
    %1436 = vmatpush1.msra.mxu0 0.0
    %1437 = vmatprep.subr.mxu0 0.0
    %1438 = vmatpush1.msra.mxu0 0.0
    %1439 = vmatprep.subr.mxu0 0.0
    %1440 = vmatpush1.msra.mxu0 0.0
    %1441 = vmatprep.subr.mxu0 0.0
    %1442 = vmatpush1.msra.mxu0 0.0
    %1443 = vmatprep.subr.mxu0 0.0
    %1444 = vmatpush1.msra.mxu0 0.0
    %1445 = vmatprep.subr.mxu0 0.0
    %1446 = vmatpush1.msra.mxu0 0.0
    %1447 = vmatprep.subr.mxu0 0.0
    %1448 = vmatpush1.msra.mxu0 0.0
    %1449 = vmatprep.subr.mxu0 0.0
    %1450 = vmatpush1.msra.mxu0 0.0
    %1451 = vmatprep.subr.mxu0 0.0
    %1452 = vmatpush1.msra.mxu0 0.0
    %1453 = vmatprep.subr.mxu0 0.0
    %1454 = vmatpush1.msra.mxu0 0.0
    %1455 = vmatprep.subr.mxu0 0.0
    %1456 = vmatpush1.msra.mxu0 0.0
    %1457 = vmatprep.subr.mxu0 0.0
    %1458 = vmatpush1.msra.mxu0 0.0
    %1459 = vmatprep.subr.mxu0 0.0
    %1460 = vmatpush1.msra.mxu0 0.0
    %1461 = vmatprep.subr.mxu0 0.0
    %1462 = vmatpush1.msra.mxu0 0.0
    %1463 = vmatprep.subr.mxu0 0.0
    %1464 = vmatpush1.msra.mxu0 0.0
    %1465 = vmatprep.subr.mxu0 0.0
    %1466 = vmatpush1.msra.mxu0 0.0
    %1467 = vmatprep.subr.mxu0 0.0
    %1468 = vmatpush1.msra.mxu0 0.0
    %1469 = vmatprep.subr.mxu0 0.0
    %1470 = vmatpush1.msra.mxu0 0.0
    %1471 = vmatprep.subr.mxu0 0.0
    %1472 = vmatpush1.msra.mxu0 0.0
    %1473 = vmatprep.subr.mxu0 0.0
    %1474 = vmatpush1.msra.mxu0 0.0
    %1475 = vmatprep.subr.mxu0 0.0
    %1476 = vmatpush1.msra.mxu0 0.0
    %1477 = vmatprep.subr.mxu0 0.0
    %1478 = vmatpush1.msra.mxu0 0.0
    %1479 = vmatprep.subr.mxu0 0.0
    %1480 = vmatpush1.msra.mxu0 0.0
    %1481 = vmatprep.subr.mxu0 0.0
    %1482 = vmatpush1.msra.mxu0 0.0
    %1483 = vmatprep.subr.mxu0 0.0
    %1484 = vmatpush1.msra.mxu0 0.0
    %1485 = vmatprep.subr.mxu0 0.0
    %1486 = vmatpush1.msra.mxu0 0.0
    %1487 = vmatprep.subr.mxu0 0.0
    %1488 = vmatpush1.msra.mxu0 0.0
    %1489 = vmatprep.mubr.f32.mxu0 0.0
    %1490 = vmatmul.mubr.f32.gmra.mrb[0].mxu0 %v1352
    %v1491 = vpop.f32.mrb[0].mxu0
    %v1492 = vadd.f32 0.0, %v1491
    %v1493 = vpop.f32.mrb[0].mxu0
    %1494 = vdwg.mxu0
    %v1495 = vmul.f32 %v1492, 2.0
    %v1496 = vsub.f32 %v1495, %v1350
    %v1497 = vld [vmem:[%s3] sm:$0xff]
    %v1498 = vld [vmem:[%s3 + $0x8] sm:$0xff]
    %v1500 = vsel %vm1185, %v1424, 0
    %v1503 = vsel %vm1185, %v1496, 0
    %1505 = vmatprep.subr.mxu0 0.0
    %1506 = vmatpush1.msra.mxu0 %v1497
    %1507 = vmatprep.subr.mxu0 0.0
    %1508 = vmatpush1.msra.mxu0 0.0
    %1509 = vmatprep.subr.mxu0 0.0
    %1510 = vmatpush1.msra.mxu0 0.0
    %1511 = vmatprep.subr.mxu0 0.0
    %1512 = vmatpush1.msra.mxu0 0.0
    %1513 = vmatprep.subr.mxu0 0.0
    %1514 = vmatpush1.msra.mxu0 0.0
    %1515 = vmatprep.subr.mxu0 0.0
    %1516 = vmatpush1.msra.mxu0 0.0
    %1517 = vmatprep.subr.mxu0 0.0
    %1518 = vmatpush1.msra.mxu0 0.0
    %1519 = vmatprep.subr.mxu0 0.0
    %1520 = vmatpush1.msra.mxu0 0.0
    %1521 = vmatprep.subr.mxu0 0.0
    %1522 = vmatpush1.msra.mxu0 0.0
    %1523 = vmatprep.subr.mxu0 0.0
    %1524 = vmatpush1.msra.mxu0 0.0
    %1525 = vmatprep.subr.mxu0 0.0
    %1526 = vmatpush1.msra.mxu0 0.0
    %1527 = vmatprep.subr.mxu0 0.0
    %1528 = vmatpush1.msra.mxu0 0.0
    %1529 = vmatprep.subr.mxu0 0.0
    %1530 = vmatpush1.msra.mxu0 0.0
    %1531 = vmatprep.subr.mxu0 0.0
    %1532 = vmatpush1.msra.mxu0 0.0
    %1533 = vmatprep.subr.mxu0 0.0
    %1534 = vmatpush1.msra.mxu0 0.0
    %1535 = vmatprep.subr.mxu0 0.0
    %1536 = vmatpush1.msra.mxu0 0.0
    %1537 = vmatprep.subr.mxu0 0.0
    %1538 = vmatpush1.msra.mxu0 0.0
    %1539 = vmatprep.subr.mxu0 0.0
    %1540 = vmatpush1.msra.mxu0 0.0
    %1541 = vmatprep.subr.mxu0 0.0
    %1542 = vmatpush1.msra.mxu0 0.0
    %1543 = vmatprep.subr.mxu0 0.0
    %1544 = vmatpush1.msra.mxu0 0.0
    %1545 = vmatprep.subr.mxu0 0.0
    %1546 = vmatpush1.msra.mxu0 0.0
    %1547 = vmatprep.subr.mxu0 0.0
    %1548 = vmatpush1.msra.mxu0 0.0
    %1549 = vmatprep.subr.mxu0 0.0
    %1550 = vmatpush1.msra.mxu0 0.0
    %1551 = vmatprep.subr.mxu0 0.0
    %1552 = vmatpush1.msra.mxu0 0.0
    %1553 = vmatprep.subr.mxu0 0.0
    %1554 = vmatpush1.msra.mxu0 0.0
    %1555 = vmatprep.subr.mxu0 0.0
    %1556 = vmatpush1.msra.mxu0 0.0
    %1557 = vmatprep.subr.mxu0 0.0
    %1558 = vmatpush1.msra.mxu0 0.0
    %1559 = vmatprep.subr.mxu0 0.0
    %1560 = vmatpush1.msra.mxu0 0.0
    %1561 = vmatprep.subr.mxu0 0.0
    %1562 = vmatpush1.msra.mxu0 0.0
    %1563 = vmatprep.subr.mxu0 0.0
    %1564 = vmatpush1.msra.mxu0 0.0
    %1565 = vmatprep.subr.mxu0 0.0
    %1566 = vmatpush1.msra.mxu0 0.0
    %1567 = vmatprep.subr.mxu0 0.0
    %1568 = vmatpush1.msra.mxu0 0.0
    %1569 = vmatprep.mubr.f32.mxu0 0.0
    %1570 = vmatmul.mubr.f32.gmra.mrb[0].mxu0 %v1352
    %v1571 = vpop.f32.mrb[0].mxu0
    %v1572 = vadd.f32 0.0, %v1571
    %v1573 = vpop.f32.mrb[0].mxu0
    %1574 = vmatprep.mubr.f32.mxu0 0.0
    %1575 = vmatmul.mubr.f32.gmra.mrb[0].mxu0 %v1500
    %v1576 = vpop.f32.mrb[0].mxu0
    %v1577 = vadd.f32 0.0, %v1576
    %v1578 = vpop.f32.mrb[0].mxu0
    %1579 = vmatprep.mubr.f32.mxu0 0.0
    %1580 = vmatmul.mubr.f32.gmra.mrb[0].mxu0 %v1503
    %v1581 = vpop.f32.mrb[0].mxu0
    %v1582 = vadd.f32 0.0, %v1581
    %v1583 = vpop.f32.mrb[0].mxu0
    %1584 = vdwg.mxu0
    %1586 = vrot.lane.b32.xlu0 %v1577, 16
    %v1587 = vpop.permute.xlu0 %1586
    %1590 = vrot.lane.b32.xlu0 %v1582, 32
    %v1591 = vpop.permute.xlu0 %1590
    %v1593 = vsel %vm348, %v1572, %v1587
    %vm1594 = vcmask 261120
    %v1595 = vsel %vm1594, %v1593, %v1591
    %1596 = vmatprep.subr.mxu0 0.0
    %1597 = vmatpush1.msra.mxu0 %v1498
    %1598 = vmatprep.subr.mxu0 0.0
    %1599 = vmatpush1.msra.mxu0 0.0
    %1600 = vmatprep.subr.mxu0 0.0
    %1601 = vmatpush1.msra.mxu0 0.0
    %1602 = vmatprep.subr.mxu0 0.0
    %1603 = vmatpush1.msra.mxu0 0.0
    %1604 = vmatprep.subr.mxu0 0.0
    %1605 = vmatpush1.msra.mxu0 0.0
    %1606 = vmatprep.subr.mxu0 0.0
    %1607 = vmatpush1.msra.mxu0 0.0
    %1608 = vmatprep.subr.mxu0 0.0
    %1609 = vmatpush1.msra.mxu0 0.0
    %1610 = vmatprep.subr.mxu0 0.0
    %1611 = vmatpush1.msra.mxu0 0.0
    %1612 = vmatprep.subr.mxu0 0.0
    %1613 = vmatpush1.msra.mxu0 0.0
    %1614 = vmatprep.subr.mxu0 0.0
    %1615 = vmatpush1.msra.mxu0 0.0
    %1616 = vmatprep.subr.mxu0 0.0
    %1617 = vmatpush1.msra.mxu0 0.0
    %1618 = vmatprep.subr.mxu0 0.0
    %1619 = vmatpush1.msra.mxu0 0.0
    %1620 = vmatprep.subr.mxu0 0.0
    %1621 = vmatpush1.msra.mxu0 0.0
    %1622 = vmatprep.subr.mxu0 0.0
    %1623 = vmatpush1.msra.mxu0 0.0
    %1624 = vmatprep.subr.mxu0 0.0
    %1625 = vmatpush1.msra.mxu0 0.0
    %1626 = vmatprep.subr.mxu0 0.0
    %1627 = vmatpush1.msra.mxu0 0.0
    %1628 = vmatprep.subr.mxu0 0.0
    %1629 = vmatpush1.msra.mxu0 0.0
    %1630 = vmatprep.subr.mxu0 0.0
    %1631 = vmatpush1.msra.mxu0 0.0
    %1632 = vmatprep.subr.mxu0 0.0
    %1633 = vmatpush1.msra.mxu0 0.0
    %1634 = vmatprep.subr.mxu0 0.0
    %1635 = vmatpush1.msra.mxu0 0.0
    %1636 = vmatprep.subr.mxu0 0.0
    %1637 = vmatpush1.msra.mxu0 0.0
    %1638 = vmatprep.subr.mxu0 0.0
    %1639 = vmatpush1.msra.mxu0 0.0
    %1640 = vmatprep.subr.mxu0 0.0
    %1641 = vmatpush1.msra.mxu0 0.0
    %1642 = vmatprep.subr.mxu0 0.0
    %1643 = vmatpush1.msra.mxu0 0.0
    %1644 = vmatprep.subr.mxu0 0.0
    %1645 = vmatpush1.msra.mxu0 0.0
    %1646 = vmatprep.subr.mxu0 0.0
    %1647 = vmatpush1.msra.mxu0 0.0
    %1648 = vmatprep.subr.mxu0 0.0
    %1649 = vmatpush1.msra.mxu0 0.0
    %1650 = vmatprep.subr.mxu0 0.0
    %1651 = vmatpush1.msra.mxu0 0.0
    %1652 = vmatprep.subr.mxu0 0.0
    %1653 = vmatpush1.msra.mxu0 0.0
    %1654 = vmatprep.subr.mxu0 0.0
    %1655 = vmatpush1.msra.mxu0 0.0
    %1656 = vmatprep.subr.mxu0 0.0
    %1657 = vmatpush1.msra.mxu0 0.0
    %1658 = vmatprep.subr.mxu0 0.0
    %1659 = vmatpush1.msra.mxu0 0.0
    %1660 = vmatprep.mubr.f32.mxu0 0.0
    %1661 = vmatmul.mubr.f32.gmra.mrb[0].mxu0 %v1352
    %v1662 = vpop.f32.mrb[0].mxu0
    %v1663 = vadd.f32 0.0, %v1662
    %v1664 = vpop.f32.mrb[0].mxu0
    %1665 = vmatprep.mubr.f32.mxu0 0.0
    %1666 = vmatmul.mubr.f32.gmra.mrb[0].mxu0 %v1500
    %v1667 = vpop.f32.mrb[0].mxu0
    %v1668 = vadd.f32 0.0, %v1667
    %v1669 = vpop.f32.mrb[0].mxu0
    %1670 = vmatprep.mubr.f32.mxu0 0.0
    %1671 = vmatmul.mubr.f32.gmra.mrb[0].mxu0 %v1503
    %v1672 = vpop.f32.mrb[0].mxu0
    %v1673 = vadd.f32 0.0, %v1672
    %v1674 = vpop.f32.mrb[0].mxu0
    %1675 = vdwg.mxu0
    %1677 = vrot.lane.b32.xlu0 %v1668, 16
    %v1678 = vpop.permute.xlu0 %1677
    %1681 = vrot.lane.b32.xlu0 %v1673, 32
    %v1682 = vpop.permute.xlu0 %1681
    %v1684 = vsel %vm348, %v1663, %v1678
    %v1685 = vsel %vm1594, %v1684, %v1682
    %v1686 = vld [vmem:[#allocation12] sm:$0xff]
    %v1687 = vld [vmem:[#allocation12 + $0x8] sm:$0xff]
    %v1688 = vld [vmem:[#allocation12 + $0x10] sm:$0xff]
    %v1689 = vld [vmem:[#allocation12 + $0x18] sm:$0xff]
    %v1690 = vld [vmem:[#allocation12 + $0x20] sm:$0xff]
    %v1691 = vld [vmem:[#allocation12 + $0x28] sm:$0xff]
    %v1692 = vld [vmem:[#allocation12 + $0x30] sm:$0xff]
    %v1693 = vld [vmem:[#allocation12 + $0x38] sm:$0xff]
    %v1694 = vld [vmem:[#allocation12 + $0x40] sm:$0xff]
    %v1695 = vld [vmem:[#allocation12 + $0x48] sm:$0xff]
    %v1696 = vld [vmem:[#allocation12 + $0x50] sm:$0xff]
    %v1697 = vld [vmem:[#allocation12 + $0x58] sm:$0xff]
    %v1698 = vld [vmem:[#allocation12 + $0x60] sm:$0xff]
    %v1699 = vld [vmem:[#allocation12 + $0x68] sm:$0xff]
    %v1700 = vld [vmem:[#allocation12 + $0x70] sm:$0xff]
    %v1701 = vld [vmem:[#allocation12 + $0x78] sm:$0xff]
    %v1702 = vld [vmem:[#allocation12 + $0x80] sm:$0xff]
    %v1703 = vld [vmem:[#allocation12 + $0x88] sm:$0xff]
    %v1704 = vld [vmem:[#allocation12 + $0x90] sm:$0xff]
    %v1705 = vld [vmem:[#allocation12 + $0x98] sm:$0xff]
    %v1706 = vld [vmem:[#allocation12 + $0xa0] sm:$0xff]
    %v1707 = vld [vmem:[#allocation12 + $0xa8] sm:$0xff]
    %v1708 = vld [vmem:[#allocation12 + $0xb0] sm:$0xff]
    %v1709 = vld [vmem:[#allocation12 + $0xb8] sm:$0xff]
    %v1710 = vld [vmem:[#allocation14] sm:$0xf]
    %v1712 = vlaneseq
    %v1713 = vshrl.u32 %v1712, 7
    %v1714 = vsub.s32 0, %v1713
    %v1715 = vrot.slane %v1710, %v1714
    %v1716 = vlaneseq
    %v1717 = vshrl.u32 %v1716, 7
    %v1718 = vsub.s32 1, %v1717
    %v1719 = vrot.slane %v1710, %v1718
    %v1720 = vlaneseq
    %v1721 = vshrl.u32 %v1720, 7
    %v1722 = vsub.s32 2, %v1721
    %v1723 = vrot.slane %v1710, %v1722
    %v1724 = vlaneseq
    %v1725 = vshrl.u32 %v1724, 7
    %v1726 = vsub.s32 3, %v1725
    %v1727 = vrot.slane %v1710, %v1726
    %vm1732 = vcmask 392192
    %v1734 = vsel %vm1732, %v1595, 0
    %v1737 = vsel %vm1732, %v1685, 0
    %1739 = vmatprep.subr.mxu0 %v1687
    %1740 = vmatpush1.msra.mxu0 %v1686
    %1741 = vmatprep.subr.mxu0 %v1691
    %1742 = vmatpush1.msra.mxu0 %v1690
    %1743 = vmatprep.subr.mxu0 %v1695
    %1744 = vmatpush1.msra.mxu0 %v1694
    %1745 = vmatprep.subr.mxu0 %v1699
    %1746 = vmatpush1.msra.mxu0 %v1698
    %1747 = vmatprep.subr.mxu0 %v1703
    %1748 = vmatpush1.msra.mxu0 %v1702
    %1749 = vmatprep.subr.mxu0 %v1707
    %1750 = vmatpush1.msra.mxu0 %v1706
    %1751 = vmatprep.subr.mxu0 0.0
    %1752 = vmatpush1.msra.mxu0 0.0
    %1753 = vmatprep.subr.mxu0 0.0
    %1754 = vmatpush1.msra.mxu0 0.0
    %1755 = vmatprep.subr.mxu0 0.0
    %1756 = vmatpush1.msra.mxu0 0.0
    %1757 = vmatprep.subr.mxu0 0.0
    %1758 = vmatpush1.msra.mxu0 0.0
    %1759 = vmatprep.subr.mxu0 0.0
    %1760 = vmatpush1.msra.mxu0 0.0
    %1761 = vmatprep.subr.mxu0 0.0
    %1762 = vmatpush1.msra.mxu0 0.0
    %1763 = vmatprep.subr.mxu0 0.0
    %1764 = vmatpush1.msra.mxu0 0.0
    %1765 = vmatprep.subr.mxu0 0.0
    %1766 = vmatpush1.msra.mxu0 0.0
    %1767 = vmatprep.subr.mxu0 0.0
    %1768 = vmatpush1.msra.mxu0 0.0
    %1769 = vmatprep.subr.mxu0 0.0
    %1770 = vmatpush1.msra.mxu0 0.0
    %1771 = vmatprep.subr.mxu0 0.0
    %1772 = vmatpush1.msra.mxu0 0.0
    %1773 = vmatprep.subr.mxu0 0.0
    %1774 = vmatpush1.msra.mxu0 0.0
    %1775 = vmatprep.subr.mxu0 0.0
    %1776 = vmatpush1.msra.mxu0 0.0
    %1777 = vmatprep.subr.mxu0 0.0
    %1778 = vmatpush1.msra.mxu0 0.0
    %1779 = vmatprep.subr.mxu0 0.0
    %1780 = vmatpush1.msra.mxu0 0.0
    %1781 = vmatprep.subr.mxu0 0.0
    %1782 = vmatpush1.msra.mxu0 0.0
    %1783 = vmatprep.subr.mxu0 0.0
    %1784 = vmatpush1.msra.mxu0 0.0
    %1785 = vmatprep.subr.mxu0 0.0
    %1786 = vmatpush1.msra.mxu0 0.0
    %1787 = vmatprep.subr.mxu0 0.0
    %1788 = vmatpush1.msra.mxu0 0.0
    %1789 = vmatprep.subr.mxu0 0.0
    %1790 = vmatpush1.msra.mxu0 0.0
    %1791 = vmatprep.subr.mxu0 0.0
    %1792 = vmatpush1.msra.mxu0 0.0
    %1793 = vmatprep.subr.mxu0 0.0
    %1794 = vmatpush1.msra.mxu0 0.0
    %1795 = vmatprep.subr.mxu0 0.0
    %1796 = vmatpush1.msra.mxu0 0.0
    %1797 = vmatprep.subr.mxu0 0.0
    %1798 = vmatpush1.msra.mxu0 0.0
    %1799 = vmatprep.subr.mxu0 0.0
    %1800 = vmatpush1.msra.mxu0 0.0
    %1801 = vmatprep.subr.mxu0 0.0
    %1802 = vmatpush1.msra.mxu0 0.0
    %1803 = vmatprep.mubr.f32.mxu0 0.0
    %1804 = vmatmul.mubr.f32.gmra.mrb[0].mxu0 %v1734
    %v1805 = vpop.f32.mrb[0].mxu0
    %v1806 = vadd.f32 %v1715, %v1805
    %v1807 = vpop.f32.mrb[0].mxu0
    %v1808 = vadd.f32 %v1719, %v1807
    %1809 = vmatprep.mubr.f32.mxu0 0.0
    %1810 = vmatmul.mubr.f32.gmra.mrb[0].mxu0 %v1737
    %v1811 = vpop.f32.mrb[0].mxu0
    %v1812 = vadd.f32 %v1715, %v1811
    %v1813 = vpop.f32.mrb[0].mxu0
    %v1814 = vadd.f32 %v1719, %v1813
    %1815 = vdwg.mxu0
    %1816 = vmatprep.subr.mxu0 %v1689
    %1817 = vmatpush1.msra.mxu0 %v1688
    %1818 = vmatprep.subr.mxu0 %v1693
    %1819 = vmatpush1.msra.mxu0 %v1692
    %1820 = vmatprep.subr.mxu0 %v1697
    %1821 = vmatpush1.msra.mxu0 %v1696
    %1822 = vmatprep.subr.mxu0 %v1701
    %1823 = vmatpush1.msra.mxu0 %v1700
    %1824 = vmatprep.subr.mxu0 %v1705
    %1825 = vmatpush1.msra.mxu0 %v1704
    %1826 = vmatprep.subr.mxu0 %v1709
    %1827 = vmatpush1.msra.mxu0 %v1708
    %1828 = vmatprep.subr.mxu0 0.0
    %1829 = vmatpush1.msra.mxu0 0.0
    %1830 = vmatprep.subr.mxu0 0.0
    %1831 = vmatpush1.msra.mxu0 0.0
    %1832 = vmatprep.subr.mxu0 0.0
    %1833 = vmatpush1.msra.mxu0 0.0
    %1834 = vmatprep.subr.mxu0 0.0
    %1835 = vmatpush1.msra.mxu0 0.0
    %1836 = vmatprep.subr.mxu0 0.0
    %1837 = vmatpush1.msra.mxu0 0.0
    %1838 = vmatprep.subr.mxu0 0.0
    %1839 = vmatpush1.msra.mxu0 0.0
    %1840 = vmatprep.subr.mxu0 0.0
    %1841 = vmatpush1.msra.mxu0 0.0
    %1842 = vmatprep.subr.mxu0 0.0
    %1843 = vmatpush1.msra.mxu0 0.0
    %1844 = vmatprep.subr.mxu0 0.0
    %1845 = vmatpush1.msra.mxu0 0.0
    %1846 = vmatprep.subr.mxu0 0.0
    %1847 = vmatpush1.msra.mxu0 0.0
    %1848 = vmatprep.subr.mxu0 0.0
    %1849 = vmatpush1.msra.mxu0 0.0
    %1850 = vmatprep.subr.mxu0 0.0
    %1851 = vmatpush1.msra.mxu0 0.0
    %1852 = vmatprep.subr.mxu0 0.0
    %1853 = vmatpush1.msra.mxu0 0.0
    %1854 = vmatprep.subr.mxu0 0.0
    %1855 = vmatpush1.msra.mxu0 0.0
    %1856 = vmatprep.subr.mxu0 0.0
    %1857 = vmatpush1.msra.mxu0 0.0
    %1858 = vmatprep.subr.mxu0 0.0
    %1859 = vmatpush1.msra.mxu0 0.0
    %1860 = vmatprep.subr.mxu0 0.0
    %1861 = vmatpush1.msra.mxu0 0.0
    %1862 = vmatprep.subr.mxu0 0.0
    %1863 = vmatpush1.msra.mxu0 0.0
    %1864 = vmatprep.subr.mxu0 0.0
    %1865 = vmatpush1.msra.mxu0 0.0
    %1866 = vmatprep.subr.mxu0 0.0
    %1867 = vmatpush1.msra.mxu0 0.0
    %1868 = vmatprep.subr.mxu0 0.0
    %1869 = vmatpush1.msra.mxu0 0.0
    %1870 = vmatprep.subr.mxu0 0.0
    %1871 = vmatpush1.msra.mxu0 0.0
    %1872 = vmatprep.subr.mxu0 0.0
    %1873 = vmatpush1.msra.mxu0 0.0
    %1874 = vmatprep.subr.mxu0 0.0
    %1875 = vmatpush1.msra.mxu0 0.0
    %1876 = vmatprep.subr.mxu0 0.0
    %1877 = vmatpush1.msra.mxu0 0.0
    %1878 = vmatprep.subr.mxu0 0.0
    %1879 = vmatpush1.msra.mxu0 0.0
    %1880 = vmatprep.mubr.f32.mxu0 0.0
    %1881 = vmatmul.mubr.f32.gmra.mrb[0].mxu0 %v1734
    %v1882 = vpop.f32.mrb[0].mxu0
    %v1883 = vadd.f32 %v1723, %v1882
    %v1884 = vpop.f32.mrb[0].mxu0
    %v1885 = vadd.f32 %v1727, %v1884
    %1886 = vmatprep.mubr.f32.mxu0 0.0
    %1887 = vmatmul.mubr.f32.gmra.mrb[0].mxu0 %v1737
    %v1888 = vpop.f32.mrb[0].mxu0
    %v1889 = vadd.f32 %v1723, %v1888
    %v1890 = vpop.f32.mrb[0].mxu0
    %v1891 = vadd.f32 %v1727, %v1890
    %1892 = vdwg.mxu0
    %v1893 = vxor.u32 %v1808, 2147483648
    %v1894 = vxor.u32 %v1814, 2147483648
    %v1895 = vmul.f32 %v1893, 1.442695
    %v1896 = vpow.pop %v1895
    %v1897 = vmul.f32 %v1894, 1.442695
    %v1898 = vpow.pop %v1897
    %v1899 = vadd.f32 %v1896, 1.0
    %v1900 = vadd.f32 %v1898, 1.0
    %v1901 = vrcp.pop %v1899
    %v1902 = vmul.f32 1.0, %v1901
    %v1903 = vrcp.pop %v1900
    %v1904 = vmul.f32 1.0, %v1903
    %v1905 = vmul.f32 %v1806, %v1902
    %v1906 = vmul.f32 %v1812, %v1904
    %v1907 = vxor.u32 %v1885, 2147483648
    %v1908 = vxor.u32 %v1891, 2147483648
    %v1909 = vmul.f32 %v1907, 1.442695
    %v1910 = vpow.pop %v1909
    %v1911 = vmul.f32 %v1908, 1.442695
    %v1912 = vpow.pop %v1911
    %v1913 = vadd.f32 %v1910, 1.0
    %v1914 = vadd.f32 %v1912, 1.0
    %v1915 = vrcp.pop %v1913
    %v1916 = vmul.f32 1.0, %v1915
    %v1917 = vrcp.pop %v1914
    %v1918 = vmul.f32 1.0, %v1917
    %v1919 = vmul.f32 %v1883, %v1916
    %v1920 = vmul.f32 %v1889, %v1918
    %v1921 = vld [vmem:[#allocation15] sm:$0xff]
    %v1922 = vld [vmem:[#allocation15 + $0x8] sm:$0xff]
    %v1923 = vld [vmem:[#allocation15 + $0x10] sm:$0xff]
    %v1924 = vld [vmem:[#allocation15 + $0x18] sm:$0xff]
    %v1925 = vld [vmem:[#allocation15 + $0x20] sm:$0xff]
    %v1926 = vld [vmem:[#allocation15 + $0x28] sm:$0xff]
    %v1927 = vld [vmem:[#allocation15 + $0x30] sm:$0xff]
    %v1928 = vld [vmem:[#allocation15 + $0x38] sm:$0xff]
    %v1929 = vld [vmem:[#allocation15 + $0x40] sm:$0xff]
    %v1930 = vld [vmem:[#allocation15 + $0x48] sm:$0xff]
    %v1931 = vld [vmem:[#allocation15 + $0x50] sm:$0xff]
    %v1932 = vld [vmem:[#allocation15 + $0x58] sm:$0xff]
    %v1933 = vld [vmem:[#allocation15 + $0x60] sm:$0xff]
    %v1934 = vld [vmem:[#allocation15 + $0x68] sm:$0xff]
    %v1935 = vld [vmem:[#allocation15 + $0x70] sm:$0xff]
    %v1936 = vld [vmem:[#allocation15 + $0x78] sm:$0xff]
    %v1937 = vld [vmem:[#allocation15 + $0x80] sm:$0xff]
    %v1938 = vld [vmem:[#allocation15 + $0x88] sm:$0xff]
    %v1939 = vld [vmem:[#allocation15 + $0x90] sm:$0xff]
    %v1940 = vld [vmem:[#allocation15 + $0x98] sm:$0xff]
    %v1941 = vld [vmem:[#allocation15 + $0xa0] sm:$0xff]
    %v1942 = vld [vmem:[#allocation15 + $0xa8] sm:$0xff]
    %v1943 = vld [vmem:[#allocation15 + $0xb0] sm:$0xff]
    %v1944 = vld [vmem:[#allocation15 + $0xb8] sm:$0xff]
    %v1945 = vld [vmem:[#allocation15 + $0xc0] sm:$0xff]
    %v1946 = vld [vmem:[#allocation15 + $0xc8] sm:$0xff]
    %v1947 = vld [vmem:[#allocation15 + $0xd0] sm:$0xff]
    %v1948 = vld [vmem:[#allocation15 + $0xd8] sm:$0xff]
    %v1949 = vld [vmem:[#allocation15 + $0xe0] sm:$0xff]
    %v1950 = vld [vmem:[#allocation15 + $0xe8] sm:$0xff]
    %v1951 = vld [vmem:[#allocation15 + $0xf0] sm:$0xff]
    %v1952 = vld [vmem:[#allocation15 + $0xf8] sm:$0xff]
    %v1953 = vld [vmem:[#allocation15 + $0x100] sm:$0xff]
    %v1954 = vld [vmem:[#allocation15 + $0x108] sm:$0xff]
    %v1955 = vld [vmem:[#allocation15 + $0x110] sm:$0xff]
    %v1956 = vld [vmem:[#allocation15 + $0x118] sm:$0xff]
    %v1957 = vld [vmem:[#allocation15 + $0x120] sm:$0xff]
    %v1958 = vld [vmem:[#allocation15 + $0x128] sm:$0xff]
    %v1959 = vld [vmem:[#allocation15 + $0x130] sm:$0xff]
    %v1960 = vld [vmem:[#allocation15 + $0x138] sm:$0xff]
    %v1961 = vld [vmem:[#allocation15 + $0x140] sm:$0xff]
    %v1962 = vld [vmem:[#allocation15 + $0x148] sm:$0xff]
    %v1963 = vld [vmem:[#allocation15 + $0x150] sm:$0xff]
    %v1964 = vld [vmem:[#allocation15 + $0x158] sm:$0xff]
    %v1965 = vld [vmem:[#allocation15 + $0x160] sm:$0xff]
    %v1966 = vld [vmem:[#allocation15 + $0x168] sm:$0xff]
    %v1967 = vld [vmem:[#allocation15 + $0x170] sm:$0xff]
    %v1968 = vld [vmem:[#allocation15 + $0x178] sm:$0xff]
    %v1969 = vld [vmem:[#allocation15 + $0x180] sm:$0xff]
    %v1970 = vld [vmem:[#allocation15 + $0x188] sm:$0xff]
    %v1971 = vld [vmem:[#allocation15 + $0x190] sm:$0xff]
    %v1972 = vld [vmem:[#allocation15 + $0x198] sm:$0xff]
    %v1973 = vld [vmem:[#allocation15 + $0x1a0] sm:$0xff]
    %v1974 = vld [vmem:[#allocation15 + $0x1a8] sm:$0xff]
    %v1975 = vld [vmem:[#allocation15 + $0x1b0] sm:$0xff]
    %v1976 = vld [vmem:[#allocation15 + $0x1b8] sm:$0xff]
    %v1977 = vld [vmem:[#allocation15 + $0x1c0] sm:$0xff]
    %v1978 = vld [vmem:[#allocation15 + $0x1c8] sm:$0xff]
    %v1979 = vld [vmem:[#allocation15 + $0x1d0] sm:$0xff]
    %v1980 = vld [vmem:[#allocation15 + $0x1d8] sm:$0xff]
    %v1981 = vld [vmem:[#allocation15 + $0x1e0] sm:$0xff]
    %v1982 = vld [vmem:[#allocation15 + $0x1e8] sm:$0xff]
    %v1983 = vld [vmem:[#allocation15 + $0x1f0] sm:$0xff]
    %v1984 = vld [vmem:[#allocation15 + $0x1f8] sm:$0xff]
    %v1985 = vld [vmem:[#allocation15 + $0x200] sm:$0xff]
    %v1986 = vld [vmem:[#allocation15 + $0x208] sm:$0xff]
    %v1987 = vld [vmem:[#allocation15 + $0x210] sm:$0xff]
    %v1988 = vld [vmem:[#allocation15 + $0x218] sm:$0xff]
    %v1989 = vld [vmem:[#allocation15 + $0x220] sm:$0xff]
    %v1990 = vld [vmem:[#allocation15 + $0x228] sm:$0xff]
    %v1991 = vld [vmem:[#allocation15 + $0x230] sm:$0xff]
    %v1992 = vld [vmem:[#allocation15 + $0x238] sm:$0xff]
    %v1993 = vld [vmem:[#allocation15 + $0x240] sm:$0xff]
    %v1994 = vld [vmem:[#allocation15 + $0x248] sm:$0xff]
    %v1995 = vld [vmem:[#allocation15 + $0x250] sm:$0xff]
    %v1996 = vld [vmem:[#allocation15 + $0x258] sm:$0xff]
    %v1997 = vld [vmem:[#allocation15 + $0x260] sm:$0xff]
    %v1998 = vld [vmem:[#allocation15 + $0x268] sm:$0xff]
    %v1999 = vld [vmem:[#allocation15 + $0x270] sm:$0xff]
    %v2000 = vld [vmem:[#allocation15 + $0x278] sm:$0xff]
    %v2001 = vld [vmem:[#allocation15 + $0x280] sm:$0xff]
    %v2002 = vld [vmem:[#allocation15 + $0x288] sm:$0xff]
    %v2003 = vld [vmem:[#allocation15 + $0x290] sm:$0xff]
    %v2004 = vld [vmem:[#allocation15 + $0x298] sm:$0xff]
    %v2005 = vld [vmem:[#allocation15 + $0x2a0] sm:$0xff]
    %v2006 = vld [vmem:[#allocation15 + $0x2a8] sm:$0xff]
    %v2007 = vld [vmem:[#allocation15 + $0x2b0] sm:$0xff]
    %v2008 = vld [vmem:[#allocation15 + $0x2b8] sm:$0xff]
    %v2009 = vld [vmem:[#allocation15 + $0x2c0] sm:$0xff]
    %v2010 = vld [vmem:[#allocation15 + $0x2c8] sm:$0xff]
    %v2011 = vld [vmem:[#allocation15 + $0x2d0] sm:$0xff]
    %v2012 = vld [vmem:[#allocation15 + $0x2d8] sm:$0xff]
    %v2013 = vld [vmem:[#allocation15 + $0x2e0] sm:$0xff]
    %v2014 = vld [vmem:[#allocation15 + $0x2e8] sm:$0xff]
    %v2015 = vld [vmem:[#allocation15 + $0x2f0] sm:$0xff]
    %v2016 = vld [vmem:[#allocation15 + $0x2f8] sm:$0xff]
    %v2017 = vld [vmem:[#allocation15 + $0x300] sm:$0xff]
    %v2018 = vld [vmem:[#allocation15 + $0x308] sm:$0xff]
    %v2019 = vld [vmem:[#allocation15 + $0x310] sm:$0xff]
    %v2020 = vld [vmem:[#allocation15 + $0x318] sm:$0xff]
    %v2021 = vld [vmem:[#allocation15 + $0x320] sm:$0xff]
    %v2022 = vld [vmem:[#allocation15 + $0x328] sm:$0xff]
    %v2023 = vld [vmem:[#allocation15 + $0x330] sm:$0xff]
    %v2024 = vld [vmem:[#allocation15 + $0x338] sm:$0xff]
    %v2025 = vld [vmem:[#allocation15 + $0x340] sm:$0xff]
    %v2026 = vld [vmem:[#allocation15 + $0x348] sm:$0xff]
    %v2027 = vld [vmem:[#allocation15 + $0x350] sm:$0xff]
    %v2028 = vld [vmem:[#allocation15 + $0x358] sm:$0xff]
    %v2029 = vld [vmem:[#allocation15 + $0x360] sm:$0xff]
    %v2030 = vld [vmem:[#allocation15 + $0x368] sm:$0xff]
    %v2031 = vld [vmem:[#allocation15 + $0x370] sm:$0xff]
    %v2032 = vld [vmem:[#allocation15 + $0x378] sm:$0xff]
    %v2033 = vld [vmem:[#allocation15 + $0x380] sm:$0xff]
    %v2034 = vld [vmem:[#allocation15 + $0x388] sm:$0xff]
    %v2035 = vld [vmem:[#allocation15 + $0x390] sm:$0xff]
    %v2036 = vld [vmem:[#allocation15 + $0x398] sm:$0xff]
    %v2037 = vld [vmem:[#allocation15 + $0x3a0] sm:$0xff]
    %v2038 = vld [vmem:[#allocation15 + $0x3a8] sm:$0xff]
    %v2039 = vld [vmem:[#allocation15 + $0x3b0] sm:$0xff]
    %v2040 = vld [vmem:[#allocation15 + $0x3b8] sm:$0xff]
    %v2041 = vld [vmem:[#allocation15 + $0x3c0] sm:$0xff]
    %v2042 = vld [vmem:[#allocation15 + $0x3c8] sm:$0xff]
    %v2043 = vld [vmem:[#allocation15 + $0x3d0] sm:$0xff]
    %v2044 = vld [vmem:[#allocation15 + $0x3d8] sm:$0xff]
    %v2045 = vld [vmem:[#allocation15 + $0x3e0] sm:$0xff]
    %v2046 = vld [vmem:[#allocation15 + $0x3e8] sm:$0xff]
    %v2047 = vld [vmem:[#allocation15 + $0x3f0] sm:$0xff]
    %v2048 = vld [vmem:[#allocation15 + $0x3f8] sm:$0xff]
    %v2049 = vld [vmem:[%s23] sm:$0xf]
    %v2051 = vlaneseq
    %v2052 = vshrl.u32 %v2051, 7
    %v2053 = vsub.s32 0, %v2052
    %v2054 = vrot.slane %v2049, %v2053
    %v2055 = vlaneseq
    %v2056 = vshrl.u32 %v2055, 7
    %v2057 = vsub.s32 1, %v2056
    %v2058 = vrot.slane %v2049, %v2057
    %v2059 = vlaneseq
    %v2060 = vshrl.u32 %v2059, 7
    %v2061 = vsub.s32 2, %v2060
    %v2062 = vrot.slane %v2049, %v2061
    %v2063 = vlaneseq
    %v2064 = vshrl.u32 %v2063, 7
    %v2065 = vsub.s32 3, %v2064
    %v2066 = vrot.slane %v2049, %v2065
    %2071 = vmatprep.subr.mxu0 %v1922
    %2072 = vmatpush1.msra.mxu0 %v1921
    %2073 = vmatprep.subr.mxu0 %v1926
    %2074 = vmatpush1.msra.mxu0 %v1925
    %2075 = vmatprep.subr.mxu0 %v1930
    %2076 = vmatpush1.msra.mxu0 %v1929
    %2077 = vmatprep.subr.mxu0 %v1934
    %2078 = vmatpush1.msra.mxu0 %v1933
    %2079 = vmatprep.subr.mxu0 %v1938
    %2080 = vmatpush1.msra.mxu0 %v1937
    %2081 = vmatprep.subr.mxu0 %v1942
    %2082 = vmatpush1.msra.mxu0 %v1941
    %2083 = vmatprep.subr.mxu0 %v1946
    %2084 = vmatpush1.msra.mxu0 %v1945
    %2085 = vmatprep.subr.mxu0 %v1950
    %2086 = vmatpush1.msra.mxu0 %v1949
    %2087 = vmatprep.subr.mxu0 %v1954
    %2088 = vmatpush1.msra.mxu0 %v1953
    %2089 = vmatprep.subr.mxu0 %v1958
    %2090 = vmatpush1.msra.mxu0 %v1957
    %2091 = vmatprep.subr.mxu0 %v1962
    %2092 = vmatpush1.msra.mxu0 %v1961
    %2093 = vmatprep.subr.mxu0 %v1966
    %2094 = vmatpush1.msra.mxu0 %v1965
    %2095 = vmatprep.subr.mxu0 %v1970
    %2096 = vmatpush1.msra.mxu0 %v1969
    %2097 = vmatprep.subr.mxu0 %v1974
    %2098 = vmatpush1.msra.mxu0 %v1973
    %2099 = vmatprep.subr.mxu0 %v1978
    %2100 = vmatpush1.msra.mxu0 %v1977
    %2101 = vmatprep.subr.mxu0 %v1982
    %2102 = vmatpush1.msra.mxu0 %v1981
    %2103 = vmatprep.subr.mxu0 %v1986
    %2104 = vmatpush1.msra.mxu0 %v1985
    %2105 = vmatprep.subr.mxu0 %v1990
    %2106 = vmatpush1.msra.mxu0 %v1989
    %2107 = vmatprep.subr.mxu0 %v1994
    %2108 = vmatpush1.msra.mxu0 %v1993
    %2109 = vmatprep.subr.mxu0 %v1998
    %2110 = vmatpush1.msra.mxu0 %v1997
    %2111 = vmatprep.subr.mxu0 %v2002
    %2112 = vmatpush1.msra.mxu0 %v2001
    %2113 = vmatprep.subr.mxu0 %v2006
    %2114 = vmatpush1.msra.mxu0 %v2005
    %2115 = vmatprep.subr.mxu0 %v2010
    %2116 = vmatpush1.msra.mxu0 %v2009
    %2117 = vmatprep.subr.mxu0 %v2014
    %2118 = vmatpush1.msra.mxu0 %v2013
    %2119 = vmatprep.subr.mxu0 %v2018
    %2120 = vmatpush1.msra.mxu0 %v2017
    %2121 = vmatprep.subr.mxu0 %v2022
    %2122 = vmatpush1.msra.mxu0 %v2021
    %2123 = vmatprep.subr.mxu0 %v2026
    %2124 = vmatpush1.msra.mxu0 %v2025
    %2125 = vmatprep.subr.mxu0 %v2030
    %2126 = vmatpush1.msra.mxu0 %v2029
    %2127 = vmatprep.subr.mxu0 %v2034
    %2128 = vmatpush1.msra.mxu0 %v2033
    %2129 = vmatprep.subr.mxu0 %v2038
    %2130 = vmatpush1.msra.mxu0 %v2037
    %2131 = vmatprep.subr.mxu0 %v2042
    %2132 = vmatpush1.msra.mxu0 %v2041
    %2133 = vmatprep.subr.mxu0 %v2046
    %2134 = vmatpush1.msra.mxu0 %v2045
    %2135 = vmatprep.mubr.f32.mxu0 %v1919
    %2136 = vmatmul.mubr.f32.gmra.mrb[0].mxu0 %v1905
    %v2137 = vpop.f32.mrb[0].mxu0
    %v2138 = vadd.f32 %v2054, %v2137
    %v2139 = vpop.f32.mrb[0].mxu0
    %v2140 = vadd.f32 %v2058, %v2139
    %2141 = vmatprep.mubr.f32.mxu0 %v1920
    %2142 = vmatmul.mubr.f32.gmra.mrb[0].mxu0 %v1906
    %v2143 = vpop.f32.mrb[0].mxu0
    %v2144 = vadd.f32 %v2054, %v2143
    %v2145 = vpop.f32.mrb[0].mxu0
    %v2146 = vadd.f32 %v2058, %v2145
    %2147 = vdwg.mxu0
    %2148 = vmatprep.subr.mxu0 %v1924
    %2149 = vmatpush1.msra.mxu0 %v1923
    %2150 = vmatprep.subr.mxu0 %v1928
    %2151 = vmatpush1.msra.mxu0 %v1927
    %2152 = vmatprep.subr.mxu0 %v1932
    %2153 = vmatpush1.msra.mxu0 %v1931
    %2154 = vmatprep.subr.mxu0 %v1936
    %2155 = vmatpush1.msra.mxu0 %v1935
    %2156 = vmatprep.subr.mxu0 %v1940
    %2157 = vmatpush1.msra.mxu0 %v1939
    %2158 = vmatprep.subr.mxu0 %v1944
    %2159 = vmatpush1.msra.mxu0 %v1943
    %2160 = vmatprep.subr.mxu0 %v1948
    %2161 = vmatpush1.msra.mxu0 %v1947
    %2162 = vmatprep.subr.mxu0 %v1952
    %2163 = vmatpush1.msra.mxu0 %v1951
    %2164 = vmatprep.subr.mxu0 %v1956
    %2165 = vmatpush1.msra.mxu0 %v1955
    %2166 = vmatprep.subr.mxu0 %v1960
    %2167 = vmatpush1.msra.mxu0 %v1959
    %2168 = vmatprep.subr.mxu0 %v1964
    %2169 = vmatpush1.msra.mxu0 %v1963
    %2170 = vmatprep.subr.mxu0 %v1968
    %2171 = vmatpush1.msra.mxu0 %v1967
    %2172 = vmatprep.subr.mxu0 %v1972
    %2173 = vmatpush1.msra.mxu0 %v1971
    %2174 = vmatprep.subr.mxu0 %v1976
    %2175 = vmatpush1.msra.mxu0 %v1975
    %2176 = vmatprep.subr.mxu0 %v1980
    %2177 = vmatpush1.msra.mxu0 %v1979
    %2178 = vmatprep.subr.mxu0 %v1984
    %2179 = vmatpush1.msra.mxu0 %v1983
    %2180 = vmatprep.subr.mxu0 %v1988
    %2181 = vmatpush1.msra.mxu0 %v1987
    %2182 = vmatprep.subr.mxu0 %v1992
    %2183 = vmatpush1.msra.mxu0 %v1991
    %2184 = vmatprep.subr.mxu0 %v1996
    %2185 = vmatpush1.msra.mxu0 %v1995
    %2186 = vmatprep.subr.mxu0 %v2000
    %2187 = vmatpush1.msra.mxu0 %v1999
    %2188 = vmatprep.subr.mxu0 %v2004
    %2189 = vmatpush1.msra.mxu0 %v2003
    %2190 = vmatprep.subr.mxu0 %v2008
    %2191 = vmatpush1.msra.mxu0 %v2007
    %2192 = vmatprep.subr.mxu0 %v2012
    %2193 = vmatpush1.msra.mxu0 %v2011
    %2194 = vmatprep.subr.mxu0 %v2016
    %2195 = vmatpush1.msra.mxu0 %v2015
    %2196 = vmatprep.subr.mxu0 %v2020
    %2197 = vmatpush1.msra.mxu0 %v2019
    %2198 = vmatprep.subr.mxu0 %v2024
    %2199 = vmatpush1.msra.mxu0 %v2023
    %2200 = vmatprep.subr.mxu0 %v2028
    %2201 = vmatpush1.msra.mxu0 %v2027
    %2202 = vmatprep.subr.mxu0 %v2032
    %2203 = vmatpush1.msra.mxu0 %v2031
    %2204 = vmatprep.subr.mxu0 %v2036
    %2205 = vmatpush1.msra.mxu0 %v2035
    %2206 = vmatprep.subr.mxu0 %v2040
    %2207 = vmatpush1.msra.mxu0 %v2039
    %2208 = vmatprep.subr.mxu0 %v2044
    %2209 = vmatpush1.msra.mxu0 %v2043
    %2210 = vmatprep.subr.mxu0 %v2048
    %2211 = vmatpush1.msra.mxu0 %v2047
    %2212 = vmatprep.mubr.f32.mxu0 %v1919
    %2213 = vmatmul.mubr.f32.gmra.mrb[0].mxu0 %v1905
    %v2214 = vpop.f32.mrb[0].mxu0
    %v2215 = vadd.f32 %v2062, %v2214
    %v2216 = vpop.f32.mrb[0].mxu0
    %v2217 = vadd.f32 %v2066, %v2216
    %2218 = vmatprep.mubr.f32.mxu0 %v1920
    %2219 = vmatmul.mubr.f32.gmra.mrb[0].mxu0 %v1906
    %v2220 = vpop.f32.mrb[0].mxu0
    %v2221 = vadd.f32 %v2062, %v2220
    %v2222 = vpop.f32.mrb[0].mxu0
    %v2223 = vadd.f32 %v2066, %v2222
    %2224 = vdwg.mxu0
    %v2225 = vxor.u32 %v2140, 2147483648
    %v2226 = vxor.u32 %v2146, 2147483648
    %v2227 = vmul.f32 %v2225, 1.442695
    %v2228 = vpow.pop %v2227
    %v2229 = vmul.f32 %v2226, 1.442695
    %v2230 = vpow.pop %v2229
    %v2231 = vadd.f32 %v2228, 1.0
    %v2232 = vadd.f32 %v2230, 1.0
    %v2233 = vrcp.pop %v2231
    %v2234 = vmul.f32 1.0, %v2233
    %v2235 = vrcp.pop %v2232
    %v2236 = vmul.f32 1.0, %v2235
    %v2237 = vmul.f32 %v2138, %v2234
    %v2238 = vmul.f32 %v2144, %v2236
    %v2239 = vxor.u32 %v2217, 2147483648
    %v2240 = vxor.u32 %v2223, 2147483648
    %v2241 = vmul.f32 %v2239, 1.442695
    %v2242 = vpow.pop %v2241
    %v2243 = vmul.f32 %v2240, 1.442695
    %v2244 = vpow.pop %v2243
    %v2245 = vadd.f32 %v2242, 1.0
    %v2246 = vadd.f32 %v2244, 1.0
    %v2247 = vrcp.pop %v2245
    %v2248 = vmul.f32 1.0, %v2247
    %v2249 = vrcp.pop %v2246
    %v2250 = vmul.f32 1.0, %v2249
    %v2251 = vmul.f32 %v2215, %v2248
    %v2252 = vmul.f32 %v2221, %v2250
    %v2253 = vld [vmem:[%s25] sm:$0xff]
    %v2254 = vld [vmem:[%s25 + $0x8] sm:$0xff]
    %v2255 = vld [vmem:[%s25 + $0x10] sm:$0xff]
    %v2256 = vld [vmem:[%s25 + $0x18] sm:$0xff]
    %v2257 = vld [vmem:[%s25 + $0x20] sm:$0xff]
    %v2258 = vld [vmem:[%s25 + $0x28] sm:$0xff]
    %v2259 = vld [vmem:[%s25 + $0x30] sm:$0xff]
    %v2260 = vld [vmem:[%s25 + $0x38] sm:$0xff]
    %v2261 = vld [vmem:[%s25 + $0x40] sm:$0xff]
    %v2262 = vld [vmem:[%s25 + $0x48] sm:$0xff]
    %v2263 = vld [vmem:[%s25 + $0x50] sm:$0xff]
    %v2264 = vld [vmem:[%s25 + $0x58] sm:$0xff]
    %v2265 = vld [vmem:[%s25 + $0x60] sm:$0xff]
    %v2266 = vld [vmem:[%s25 + $0x68] sm:$0xff]
    %v2267 = vld [vmem:[%s25 + $0x70] sm:$0xff]
    %v2268 = vld [vmem:[%s25 + $0x78] sm:$0xff]
    %v2269 = vld [vmem:[%s25 + $0x80] sm:$0xff]
    %v2270 = vld [vmem:[%s25 + $0x88] sm:$0xff]
    %v2271 = vld [vmem:[%s25 + $0x90] sm:$0xff]
    %v2272 = vld [vmem:[%s25 + $0x98] sm:$0xff]
    %v2273 = vld [vmem:[%s25 + $0xa0] sm:$0xff]
    %v2274 = vld [vmem:[%s25 + $0xa8] sm:$0xff]
    %v2275 = vld [vmem:[%s25 + $0xb0] sm:$0xff]
    %v2276 = vld [vmem:[%s25 + $0xb8] sm:$0xff]
    %v2277 = vld [vmem:[%s25 + $0xc0] sm:$0xff]
    %v2278 = vld [vmem:[%s25 + $0xc8] sm:$0xff]
    %v2279 = vld [vmem:[%s25 + $0xd0] sm:$0xff]
    %v2280 = vld [vmem:[%s25 + $0xd8] sm:$0xff]
    %v2281 = vld [vmem:[%s25 + $0xe0] sm:$0xff]
    %v2282 = vld [vmem:[%s25 + $0xe8] sm:$0xff]
    %v2283 = vld [vmem:[%s25 + $0xf0] sm:$0xff]
    %v2284 = vld [vmem:[%s25 + $0xf8] sm:$0xff]
    %v2285 = vld [vmem:[%s25 + $0x100] sm:$0xff]
    %v2286 = vld [vmem:[%s25 + $0x108] sm:$0xff]
    %v2287 = vld [vmem:[%s25 + $0x110] sm:$0xff]
    %v2288 = vld [vmem:[%s25 + $0x118] sm:$0xff]
    %v2289 = vld [vmem:[%s25 + $0x120] sm:$0xff]
    %v2290 = vld [vmem:[%s25 + $0x128] sm:$0xff]
    %v2291 = vld [vmem:[%s25 + $0x130] sm:$0xff]
    %v2292 = vld [vmem:[%s25 + $0x138] sm:$0xff]
    %v2293 = vld [vmem:[%s25 + $0x140] sm:$0xff]
    %v2294 = vld [vmem:[%s25 + $0x148] sm:$0xff]
    %v2295 = vld [vmem:[%s25 + $0x150] sm:$0xff]
    %v2296 = vld [vmem:[%s25 + $0x158] sm:$0xff]
    %v2297 = vld [vmem:[%s25 + $0x160] sm:$0xff]
    %v2298 = vld [vmem:[%s25 + $0x168] sm:$0xff]
    %v2299 = vld [vmem:[%s25 + $0x170] sm:$0xff]
    %v2300 = vld [vmem:[%s25 + $0x178] sm:$0xff]
    %v2301 = vld [vmem:[%s25 + $0x180] sm:$0xff]
    %v2302 = vld [vmem:[%s25 + $0x188] sm:$0xff]
    %v2303 = vld [vmem:[%s25 + $0x190] sm:$0xff]
    %v2304 = vld [vmem:[%s25 + $0x198] sm:$0xff]
    %v2305 = vld [vmem:[%s25 + $0x1a0] sm:$0xff]
    %v2306 = vld [vmem:[%s25 + $0x1a8] sm:$0xff]
    %v2307 = vld [vmem:[%s25 + $0x1b0] sm:$0xff]
    %v2308 = vld [vmem:[%s25 + $0x1b8] sm:$0xff]
    %v2309 = vld [vmem:[%s25 + $0x1c0] sm:$0xff]
    %v2310 = vld [vmem:[%s25 + $0x1c8] sm:$0xff]
    %v2311 = vld [vmem:[%s25 + $0x1d0] sm:$0xff]
    %v2312 = vld [vmem:[%s25 + $0x1d8] sm:$0xff]
    %v2313 = vld [vmem:[%s25 + $0x1e0] sm:$0xff]
    %v2314 = vld [vmem:[%s25 + $0x1e8] sm:$0xff]
    %v2315 = vld [vmem:[%s25 + $0x1f0] sm:$0xff]
    %v2316 = vld [vmem:[%s25 + $0x1f8] sm:$0xff]
    %v2317 = vld [vmem:[#allocation17] sm:$0x3]
    %v2319 = vlaneseq
    %v2320 = vshrl.u32 %v2319, 7
    %v2321 = vsub.s32 0, %v2320
    %v2322 = vrot.slane %v2317, %v2321
    %v2323 = vlaneseq
    %v2324 = vshrl.u32 %v2323, 7
    %v2325 = vsub.s32 1, %v2324
    %v2326 = vrot.slane %v2317, %v2325
    %2329 = vmatprep.subr.mxu0 %v2254
    %2330 = vmatpush1.msra.mxu0 %v2253
    %2331 = vmatprep.subr.mxu0 %v2256
    %2332 = vmatpush1.msra.mxu0 %v2255
    %2333 = vmatprep.subr.mxu0 %v2258
    %2334 = vmatpush1.msra.mxu0 %v2257
    %2335 = vmatprep.subr.mxu0 %v2260
    %2336 = vmatpush1.msra.mxu0 %v2259
    %2337 = vmatprep.subr.mxu0 %v2262
    %2338 = vmatpush1.msra.mxu0 %v2261
    %2339 = vmatprep.subr.mxu0 %v2264
    %2340 = vmatpush1.msra.mxu0 %v2263
    %2341 = vmatprep.subr.mxu0 %v2266
    %2342 = vmatpush1.msra.mxu0 %v2265
    %2343 = vmatprep.subr.mxu0 %v2268
    %2344 = vmatpush1.msra.mxu0 %v2267
    %2345 = vmatprep.subr.mxu0 %v2270
    %2346 = vmatpush1.msra.mxu0 %v2269
    %2347 = vmatprep.subr.mxu0 %v2272
    %2348 = vmatpush1.msra.mxu0 %v2271
    %2349 = vmatprep.subr.mxu0 %v2274
    %2350 = vmatpush1.msra.mxu0 %v2273
    %2351 = vmatprep.subr.mxu0 %v2276
    %2352 = vmatpush1.msra.mxu0 %v2275
    %2353 = vmatprep.subr.mxu0 %v2278
    %2354 = vmatpush1.msra.mxu0 %v2277
    %2355 = vmatprep.subr.mxu0 %v2280
    %2356 = vmatpush1.msra.mxu0 %v2279
    %2357 = vmatprep.subr.mxu0 %v2282
    %2358 = vmatpush1.msra.mxu0 %v2281
    %2359 = vmatprep.subr.mxu0 %v2284
    %2360 = vmatpush1.msra.mxu0 %v2283
    %2361 = vmatprep.subr.mxu0 %v2286
    %2362 = vmatpush1.msra.mxu0 %v2285
    %2363 = vmatprep.subr.mxu0 %v2288
    %2364 = vmatpush1.msra.mxu0 %v2287
    %2365 = vmatprep.subr.mxu0 %v2290
    %2366 = vmatpush1.msra.mxu0 %v2289
    %2367 = vmatprep.subr.mxu0 %v2292
    %2368 = vmatpush1.msra.mxu0 %v2291
    %2369 = vmatprep.subr.mxu0 %v2294
    %2370 = vmatpush1.msra.mxu0 %v2293
    %2371 = vmatprep.subr.mxu0 %v2296
    %2372 = vmatpush1.msra.mxu0 %v2295
    %2373 = vmatprep.subr.mxu0 %v2298
    %2374 = vmatpush1.msra.mxu0 %v2297
    %2375 = vmatprep.subr.mxu0 %v2300
    %2376 = vmatpush1.msra.mxu0 %v2299
    %2377 = vmatprep.subr.mxu0 %v2302
    %2378 = vmatpush1.msra.mxu0 %v2301
    %2379 = vmatprep.subr.mxu0 %v2304
    %2380 = vmatpush1.msra.mxu0 %v2303
    %2381 = vmatprep.subr.mxu0 %v2306
    %2382 = vmatpush1.msra.mxu0 %v2305
    %2383 = vmatprep.subr.mxu0 %v2308
    %2384 = vmatpush1.msra.mxu0 %v2307
    %2385 = vmatprep.subr.mxu0 %v2310
    %2386 = vmatpush1.msra.mxu0 %v2309
    %2387 = vmatprep.subr.mxu0 %v2312
    %2388 = vmatpush1.msra.mxu0 %v2311
    %2389 = vmatprep.subr.mxu0 %v2314
    %2390 = vmatpush1.msra.mxu0 %v2313
    %2391 = vmatprep.subr.mxu0 %v2316
    %2392 = vmatpush1.msra.mxu0 %v2315
    %2393 = vmatprep.mubr.f32.mxu0 %v2251
    %2394 = vmatmul.mubr.f32.gmra.mrb[0].mxu0 %v2237
    %v2395 = vpop.f32.mrb[0].mxu0
    %v2396 = vadd.f32 %v2322, %v2395
    %v2397 = vpop.f32.mrb[0].mxu0
    %v2398 = vadd.f32 %v2326, %v2397
    %2399 = vmatprep.mubr.f32.mxu0 %v2252
    %2400 = vmatmul.mubr.f32.gmra.mrb[0].mxu0 %v2238
    %v2401 = vpop.f32.mrb[0].mxu0
    %v2402 = vadd.f32 %v2322, %v2401
    %v2403 = vpop.f32.mrb[0].mxu0
    %v2404 = vadd.f32 %v2326, %v2403
    %2405 = vdwg.mxu0
    %v2406 = vxor.u32 %v2398, 2147483648
    %v2407 = vxor.u32 %v2404, 2147483648
    %v2408 = vmul.f32 %v2406, 1.442695
    %v2409 = vpow.pop %v2408
    %v2410 = vmul.f32 %v2407, 1.442695
    %v2411 = vpow.pop %v2410
    %v2412 = vadd.f32 %v2409, 1.0
    %v2413 = vadd.f32 %v2411, 1.0
    %v2414 = vrcp.pop %v2412
    %v2415 = vmul.f32 1.0, %v2414
    %v2416 = vrcp.pop %v2413
    %v2417 = vmul.f32 1.0, %v2416
    %v2418 = vmul.f32 %v2396, %v2415
    %v2419 = vmul.f32 %v2402, %v2417
    %v2420 = vld [vmem:[%s29] sm:$0xff]
    %v2421 = vld [vmem:[%s29 + $0x8] sm:$0xff]
    %v2422 = vld [vmem:[%s29 + $0x10] sm:$0xff]
    %v2423 = vld [vmem:[%s29 + $0x18] sm:$0xff]
    %v2424 = vld [vmem:[%s29 + $0x20] sm:$0xff]
    %v2425 = vld [vmem:[%s29 + $0x28] sm:$0xff]
    %v2426 = vld [vmem:[%s29 + $0x30] sm:$0xff]
    %v2427 = vld [vmem:[%s29 + $0x38] sm:$0xff]
    %v2428 = vld [vmem:[%s29 + $0x40] sm:$0xff]
    %v2429 = vld [vmem:[%s29 + $0x48] sm:$0xff]
    %v2430 = vld [vmem:[%s29 + $0x50] sm:$0xff]
    %v2431 = vld [vmem:[%s29 + $0x58] sm:$0xff]
    %v2432 = vld [vmem:[%s29 + $0x60] sm:$0xff]
    %v2433 = vld [vmem:[%s29 + $0x68] sm:$0xff]
    %v2434 = vld [vmem:[%s29 + $0x70] sm:$0xff]
    %v2435 = vld [vmem:[%s29 + $0x78] sm:$0xff]
    %v2436 = vld [vmem:[%s31] sm:$0x1]
    %v2438 = vlaneseq
    %v2439 = vshrl.u32 %v2438, 7
    %v2440 = vsub.s32 0, %v2439
    %v2441 = vrot.slane %v2436, %v2440
    %2443 = vmatprep.subr.mxu0 0.0
    %2444 = vmatpush1.msra.mxu0 %v2420
    %2445 = vmatprep.subr.mxu0 0.0
    %2446 = vmatpush1.msra.mxu0 %v2421
    %2447 = vmatprep.subr.mxu0 0.0
    %2448 = vmatpush1.msra.mxu0 %v2422
    %2449 = vmatprep.subr.mxu0 0.0
    %2450 = vmatpush1.msra.mxu0 %v2423
    %2451 = vmatprep.subr.mxu0 0.0
    %2452 = vmatpush1.msra.mxu0 %v2424
    %2453 = vmatprep.subr.mxu0 0.0
    %2454 = vmatpush1.msra.mxu0 %v2425
    %2455 = vmatprep.subr.mxu0 0.0
    %2456 = vmatpush1.msra.mxu0 %v2426
    %2457 = vmatprep.subr.mxu0 0.0
    %2458 = vmatpush1.msra.mxu0 %v2427
    %2459 = vmatprep.subr.mxu0 0.0
    %2460 = vmatpush1.msra.mxu0 %v2428
    %2461 = vmatprep.subr.mxu0 0.0
    %2462 = vmatpush1.msra.mxu0 %v2429
    %2463 = vmatprep.subr.mxu0 0.0
    %2464 = vmatpush1.msra.mxu0 %v2430
    %2465 = vmatprep.subr.mxu0 0.0
    %2466 = vmatpush1.msra.mxu0 %v2431
    %2467 = vmatprep.subr.mxu0 0.0
    %2468 = vmatpush1.msra.mxu0 %v2432
    %2469 = vmatprep.subr.mxu0 0.0
    %2470 = vmatpush1.msra.mxu0 %v2433
    %2471 = vmatprep.subr.mxu0 0.0
    %2472 = vmatpush1.msra.mxu0 %v2434
    %2473 = vmatprep.subr.mxu0 0.0
    %2474 = vmatpush1.msra.mxu0 %v2435
    %2475 = vmatprep.subr.mxu0 0.0
    %2476 = vmatpush1.msra.mxu0 0.0
    %2477 = vmatprep.subr.mxu0 0.0
    %2478 = vmatpush1.msra.mxu0 0.0
    %2479 = vmatprep.subr.mxu0 0.0
    %2480 = vmatpush1.msra.mxu0 0.0
    %2481 = vmatprep.subr.mxu0 0.0
    %2482 = vmatpush1.msra.mxu0 0.0
    %2483 = vmatprep.subr.mxu0 0.0
    %2484 = vmatpush1.msra.mxu0 0.0
    %2485 = vmatprep.subr.mxu0 0.0
    %2486 = vmatpush1.msra.mxu0 0.0
    %2487 = vmatprep.subr.mxu0 0.0
    %2488 = vmatpush1.msra.mxu0 0.0
    %2489 = vmatprep.subr.mxu0 0.0
    %2490 = vmatpush1.msra.mxu0 0.0
    %2491 = vmatprep.subr.mxu0 0.0
    %2492 = vmatpush1.msra.mxu0 0.0
    %2493 = vmatprep.subr.mxu0 0.0
    %2494 = vmatpush1.msra.mxu0 0.0
    %2495 = vmatprep.subr.mxu0 0.0
    %2496 = vmatpush1.msra.mxu0 0.0
    %2497 = vmatprep.subr.mxu0 0.0
    %2498 = vmatpush1.msra.mxu0 0.0
    %2499 = vmatprep.subr.mxu0 0.0
    %2500 = vmatpush1.msra.mxu0 0.0
    %2501 = vmatprep.subr.mxu0 0.0
    %2502 = vmatpush1.msra.mxu0 0.0
    %2503 = vmatprep.subr.mxu0 0.0
    %2504 = vmatpush1.msra.mxu0 0.0
    %2505 = vmatprep.subr.mxu0 0.0
    %2506 = vmatpush1.msra.mxu0 0.0
    %2507 = vmatprep.mubr.f32.mxu0 0.0
    %2508 = vmatmul.mubr.f32.gmra.mrb[0].mxu0 %v2418
    %v2509 = vpop.f32.mrb[0].mxu0
    %v2510 = vadd.f32 %v2441, %v2509
    %v2511 = vpop.f32.mrb[0].mxu0
    %2512 = vmatprep.mubr.f32.mxu0 0.0
    %2513 = vmatmul.mubr.f32.gmra.mrb[0].mxu0 %v2419
    %v2514 = vpop.f32.mrb[0].mxu0
    %v2515 = vadd.f32 %v2441, %v2514
    %v2516 = vpop.f32.mrb[0].mxu0
    %2517 = vdwg.mxu0
    %v2518 = vxor.u32 %v2510, 2147483648
    %v2519 = vxor.u32 %v2515, 2147483648
    %v2520 = vmul.f32 %v2518, 1.442695
    %v2521 = vpow.pop %v2520
    %v2522 = vmul.f32 %v2519, 1.442695
    %v2523 = vpow.pop %v2522
    %v2524 = vadd.f32 %v2521, 1.0
    %v2525 = vadd.f32 %v2523, 1.0
    %v2526 = vrcp.pop %v2524
    %v2527 = vmul.f32 1.0, %v2526
    %v2528 = vrcp.pop %v2525
    %v2529 = vmul.f32 1.0, %v2528
    %v2530 = vld [vmem:[%s33] sm:$0xff]
    %v2531 = vld [vmem:[%s33 + $0x8] sm:$0xff]
    %v2532 = vld [vmem:[%s33 + $0x10] sm:$0xff]
    %v2533 = vld [vmem:[%s33 + $0x18] sm:$0xff]
    %v2534 = vld [vmem:[%s35] sm:$0x1]
    %v2536 = vlaneseq
    %v2537 = vshrl.u32 %v2536, 7
    %v2538 = vsub.s32 0, %v2537
    %v2539 = vrot.slane %v2534, %v2538
    %v2542 = vsel %vm1594, %v2527, 0
    %v2545 = vsel %vm1594, %v2529, 0
    %2547 = vmatprep.subr.mxu0 0.0
    %2548 = vmatpush1.msra.mxu0 %v2530
    %2549 = vmatprep.subr.mxu0 0.0
    %2550 = vmatpush1.msra.mxu0 %v2531
    %2551 = vmatprep.subr.mxu0 0.0
    %2552 = vmatpush1.msra.mxu0 %v2532
    %2553 = vmatprep.subr.mxu0 0.0
    %2554 = vmatpush1.msra.mxu0 %v2533
    %2555 = vmatprep.subr.mxu0 0.0
    %2556 = vmatpush1.msra.mxu0 0.0
    %2557 = vmatprep.subr.mxu0 0.0
    %2558 = vmatpush1.msra.mxu0 0.0
    %2559 = vmatprep.subr.mxu0 0.0
    %2560 = vmatpush1.msra.mxu0 0.0
    %2561 = vmatprep.subr.mxu0 0.0
    %2562 = vmatpush1.msra.mxu0 0.0
    %2563 = vmatprep.subr.mxu0 0.0
    %2564 = vmatpush1.msra.mxu0 0.0
    %2565 = vmatprep.subr.mxu0 0.0
    %2566 = vmatpush1.msra.mxu0 0.0
    %2567 = vmatprep.subr.mxu0 0.0
    %2568 = vmatpush1.msra.mxu0 0.0
    %2569 = vmatprep.subr.mxu0 0.0
    %2570 = vmatpush1.msra.mxu0 0.0
    %2571 = vmatprep.subr.mxu0 0.0
    %2572 = vmatpush1.msra.mxu0 0.0
    %2573 = vmatprep.subr.mxu0 0.0
    %2574 = vmatpush1.msra.mxu0 0.0
    %2575 = vmatprep.subr.mxu0 0.0
    %2576 = vmatpush1.msra.mxu0 0.0
    %2577 = vmatprep.subr.mxu0 0.0
    %2578 = vmatpush1.msra.mxu0 0.0
    %2579 = vmatprep.subr.mxu0 0.0
    %2580 = vmatpush1.msra.mxu0 0.0
    %2581 = vmatprep.subr.mxu0 0.0
    %2582 = vmatpush1.msra.mxu0 0.0
    %2583 = vmatprep.subr.mxu0 0.0
    %2584 = vmatpush1.msra.mxu0 0.0
    %2585 = vmatprep.subr.mxu0 0.0
    %2586 = vmatpush1.msra.mxu0 0.0
    %2587 = vmatprep.subr.mxu0 0.0
    %2588 = vmatpush1.msra.mxu0 0.0
    %2589 = vmatprep.subr.mxu0 0.0
    %2590 = vmatpush1.msra.mxu0 0.0
    %2591 = vmatprep.subr.mxu0 0.0
    %2592 = vmatpush1.msra.mxu0 0.0
    %2593 = vmatprep.subr.mxu0 0.0
    %2594 = vmatpush1.msra.mxu0 0.0
    %2595 = vmatprep.subr.mxu0 0.0
    %2596 = vmatpush1.msra.mxu0 0.0
    %2597 = vmatprep.subr.mxu0 0.0
    %2598 = vmatpush1.msra.mxu0 0.0
    %2599 = vmatprep.subr.mxu0 0.0
    %2600 = vmatpush1.msra.mxu0 0.0
    %2601 = vmatprep.subr.mxu0 0.0
    %2602 = vmatpush1.msra.mxu0 0.0
    %2603 = vmatprep.subr.mxu0 0.0
    %2604 = vmatpush1.msra.mxu0 0.0
    %2605 = vmatprep.subr.mxu0 0.0
    %2606 = vmatpush1.msra.mxu0 0.0
    %2607 = vmatprep.subr.mxu0 0.0
    %2608 = vmatpush1.msra.mxu0 0.0
    %2609 = vmatprep.subr.mxu0 0.0
    %2610 = vmatpush1.msra.mxu0 0.0
    %2611 = vmatprep.mubr.f32.mxu0 0.0
    %2612 = vmatmul.mubr.f32.gmra.mrb[0].mxu0 %v2542
    %v2613 = vpop.f32.mrb[0].mxu0
    %v2614 = vadd.f32 %v2539, %v2613
    %v2615 = vpop.f32.mrb[0].mxu0
    %2616 = vmatprep.mubr.f32.mxu0 0.0
    %2617 = vmatmul.mubr.f32.gmra.mrb[0].mxu0 %v2545
    %v2618 = vpop.f32.mrb[0].mxu0
    %v2619 = vadd.f32 %v2539, %v2618
    %v2620 = vpop.f32.mrb[0].mxu0
    %2621 = vdwg.mxu0
    %v2622 = vld [vmem:[%s41] sm:$0xff]
    %v2623 = vld [vmem:[%s41 + $0x8] sm:$0xff]
    %v2624 = vld [vmem:[#allocation20] sm:$0x1]
    %v2626 = vlaneseq
    %v2627 = vshrl.u32 %v2626, 7
    %v2628 = vsub.s32 0, %v2627
    %v2629 = vrot.slane %v2624, %v2628
    %v2632 = vsel %vm348, %v1497, 0
    %v2635 = vsel %vm348, %v1498, 0
    %2637 = vmatprep.subr.mxu0 0.0
    %2638 = vmatpush1.msra.mxu0 %v2622
    %2639 = vmatprep.subr.mxu0 0.0
    %2640 = vmatpush1.msra.mxu0 %v2623
    %2641 = vmatprep.subr.mxu0 0.0
    %2642 = vmatpush1.msra.mxu0 0.0
    %2643 = vmatprep.subr.mxu0 0.0
    %2644 = vmatpush1.msra.mxu0 0.0
    %2645 = vmatprep.subr.mxu0 0.0
    %2646 = vmatpush1.msra.mxu0 0.0
    %2647 = vmatprep.subr.mxu0 0.0
    %2648 = vmatpush1.msra.mxu0 0.0
    %2649 = vmatprep.subr.mxu0 0.0
    %2650 = vmatpush1.msra.mxu0 0.0
    %2651 = vmatprep.subr.mxu0 0.0
    %2652 = vmatpush1.msra.mxu0 0.0
    %2653 = vmatprep.subr.mxu0 0.0
    %2654 = vmatpush1.msra.mxu0 0.0
    %2655 = vmatprep.subr.mxu0 0.0
    %2656 = vmatpush1.msra.mxu0 0.0
    %2657 = vmatprep.subr.mxu0 0.0
    %2658 = vmatpush1.msra.mxu0 0.0
    %2659 = vmatprep.subr.mxu0 0.0
    %2660 = vmatpush1.msra.mxu0 0.0
    %2661 = vmatprep.subr.mxu0 0.0
    %2662 = vmatpush1.msra.mxu0 0.0
    %2663 = vmatprep.subr.mxu0 0.0
    %2664 = vmatpush1.msra.mxu0 0.0
    %2665 = vmatprep.subr.mxu0 0.0
    %2666 = vmatpush1.msra.mxu0 0.0
    %2667 = vmatprep.subr.mxu0 0.0
    %2668 = vmatpush1.msra.mxu0 0.0
    %2669 = vmatprep.subr.mxu0 0.0
    %2670 = vmatpush1.msra.mxu0 0.0
    %2671 = vmatprep.subr.mxu0 0.0
    %2672 = vmatpush1.msra.mxu0 0.0
    %2673 = vmatprep.subr.mxu0 0.0
    %2674 = vmatpush1.msra.mxu0 0.0
    %2675 = vmatprep.subr.mxu0 0.0
    %2676 = vmatpush1.msra.mxu0 0.0
    %2677 = vmatprep.subr.mxu0 0.0
    %2678 = vmatpush1.msra.mxu0 0.0
    %2679 = vmatprep.subr.mxu0 0.0
    %2680 = vmatpush1.msra.mxu0 0.0
    %2681 = vmatprep.subr.mxu0 0.0
    %2682 = vmatpush1.msra.mxu0 0.0
    %2683 = vmatprep.subr.mxu0 0.0
    %2684 = vmatpush1.msra.mxu0 0.0
    %2685 = vmatprep.subr.mxu0 0.0
    %2686 = vmatpush1.msra.mxu0 0.0
    %2687 = vmatprep.subr.mxu0 0.0
    %2688 = vmatpush1.msra.mxu0 0.0
    %2689 = vmatprep.subr.mxu0 0.0
    %2690 = vmatpush1.msra.mxu0 0.0
    %2691 = vmatprep.subr.mxu0 0.0
    %2692 = vmatpush1.msra.mxu0 0.0
    %2693 = vmatprep.subr.mxu0 0.0
    %2694 = vmatpush1.msra.mxu0 0.0
    %2695 = vmatprep.subr.mxu0 0.0
    %2696 = vmatpush1.msra.mxu0 0.0
    %2697 = vmatprep.subr.mxu0 0.0
    %2698 = vmatpush1.msra.mxu0 0.0
    %2699 = vmatprep.subr.mxu0 0.0
    %2700 = vmatpush1.msra.mxu0 0.0
    %2701 = vmatprep.mubr.f32.mxu0 0.0
    %2702 = vmatmul.mubr.f32.gmra.mrb[0].mxu0 %v2632
    %v2703 = vpop.f32.mrb[0].mxu0
    %v2704 = vadd.f32 %v2629, %v2703
    %v2705 = vpop.f32.mrb[0].mxu0
    %2706 = vmatprep.mubr.f32.mxu0 0.0
    %2707 = vmatmul.mubr.f32.gmra.mrb[0].mxu0 %v2635
    %v2708 = vpop.f32.mrb[0].mxu0
    %v2709 = vadd.f32 %v2629, %v2708
    %v2710 = vpop.f32.mrb[0].mxu0
    %2711 = vdwg.mxu0
    %v2712 = vld [vmem:[%s37] sm:$0xff]
    %v2713 = vld [vmem:[%s37 + $0x8] sm:$0xff]
    %v2714 = vld [vmem:[%s37 + $0x10] sm:$0xff]
    %v2715 = vld [vmem:[%s37 + $0x18] sm:$0xff]
    %v2716 = vld [vmem:[%s37 + $0x20] sm:$0xff]
    %v2717 = vld [vmem:[%s37 + $0x28] sm:$0xff]
    %v2718 = vld [vmem:[%s37 + $0x30] sm:$0xff]
    %v2719 = vld [vmem:[%s37 + $0x38] sm:$0xff]
    %v2720 = vld [vmem:[%s37 + $0x40] sm:$0xff]
    %v2721 = vld [vmem:[%s37 + $0x48] sm:$0xff]
    %v2722 = vld [vmem:[%s37 + $0x50] sm:$0xff]
    %v2723 = vld [vmem:[%s37 + $0x58] sm:$0xff]
    %v2724 = vld [vmem:[%s37 + $0x60] sm:$0xff]
    %v2725 = vld [vmem:[%s37 + $0x68] sm:$0xff]
    %v2726 = vld [vmem:[%s37 + $0x70] sm:$0xff]
    %v2727 = vld [vmem:[%s37 + $0x78] sm:$0xff]
    %v2728 = vld [vmem:[#allocation18] sm:$0x1]
    %v2730 = vlaneseq
    %v2731 = vshrl.u32 %v2730, 7
    %v2732 = vsub.s32 0, %v2731
    %v2733 = vrot.slane %v2728, %v2732
    %2735 = vmatprep.subr.mxu0 0.0
    %2736 = vmatpush1.msra.mxu0 %v2712
    %2737 = vmatprep.subr.mxu0 0.0
    %2738 = vmatpush1.msra.mxu0 %v2713
    %2739 = vmatprep.subr.mxu0 0.0
    %2740 = vmatpush1.msra.mxu0 %v2714
    %2741 = vmatprep.subr.mxu0 0.0
    %2742 = vmatpush1.msra.mxu0 %v2715
    %2743 = vmatprep.subr.mxu0 0.0
    %2744 = vmatpush1.msra.mxu0 %v2716
    %2745 = vmatprep.subr.mxu0 0.0
    %2746 = vmatpush1.msra.mxu0 %v2717
    %2747 = vmatprep.subr.mxu0 0.0
    %2748 = vmatpush1.msra.mxu0 %v2718
    %2749 = vmatprep.subr.mxu0 0.0
    %2750 = vmatpush1.msra.mxu0 %v2719
    %2751 = vmatprep.subr.mxu0 0.0
    %2752 = vmatpush1.msra.mxu0 %v2720
    %2753 = vmatprep.subr.mxu0 0.0
    %2754 = vmatpush1.msra.mxu0 %v2721
    %2755 = vmatprep.subr.mxu0 0.0
    %2756 = vmatpush1.msra.mxu0 %v2722
    %2757 = vmatprep.subr.mxu0 0.0
    %2758 = vmatpush1.msra.mxu0 %v2723
    %2759 = vmatprep.subr.mxu0 0.0
    %2760 = vmatpush1.msra.mxu0 %v2724
    %2761 = vmatprep.subr.mxu0 0.0
    %2762 = vmatpush1.msra.mxu0 %v2725
    %2763 = vmatprep.subr.mxu0 0.0
    %2764 = vmatpush1.msra.mxu0 %v2726
    %2765 = vmatprep.subr.mxu0 0.0
    %2766 = vmatpush1.msra.mxu0 %v2727
    %2767 = vmatprep.subr.mxu0 0.0
    %2768 = vmatpush1.msra.mxu0 0.0
    %2769 = vmatprep.subr.mxu0 0.0
    %2770 = vmatpush1.msra.mxu0 0.0
    %2771 = vmatprep.subr.mxu0 0.0
    %2772 = vmatpush1.msra.mxu0 0.0
    %2773 = vmatprep.subr.mxu0 0.0
    %2774 = vmatpush1.msra.mxu0 0.0
    %2775 = vmatprep.subr.mxu0 0.0
    %2776 = vmatpush1.msra.mxu0 0.0
    %2777 = vmatprep.subr.mxu0 0.0
    %2778 = vmatpush1.msra.mxu0 0.0
    %2779 = vmatprep.subr.mxu0 0.0
    %2780 = vmatpush1.msra.mxu0 0.0
    %2781 = vmatprep.subr.mxu0 0.0
    %2782 = vmatpush1.msra.mxu0 0.0
    %2783 = vmatprep.subr.mxu0 0.0
    %2784 = vmatpush1.msra.mxu0 0.0
    %2785 = vmatprep.subr.mxu0 0.0
    %2786 = vmatpush1.msra.mxu0 0.0
    %2787 = vmatprep.subr.mxu0 0.0
    %2788 = vmatpush1.msra.mxu0 0.0
    %2789 = vmatprep.subr.mxu0 0.0
    %2790 = vmatpush1.msra.mxu0 0.0
    %2791 = vmatprep.subr.mxu0 0.0
    %2792 = vmatpush1.msra.mxu0 0.0
    %2793 = vmatprep.subr.mxu0 0.0
    %2794 = vmatpush1.msra.mxu0 0.0
    %2795 = vmatprep.subr.mxu0 0.0
    %2796 = vmatpush1.msra.mxu0 0.0
    %2797 = vmatprep.subr.mxu0 0.0
    %2798 = vmatpush1.msra.mxu0 0.0
    %2799 = vmatprep.mubr.f32.mxu0 0.0
    %2800 = vmatmul.mubr.f32.gmra.mrb[0].mxu0 %v2418
    %v2801 = vpop.f32.mrb[0].mxu0
    %v2802 = vadd.f32 %v2733, %v2801
    %v2803 = vpop.f32.mrb[0].mxu0
    %2804 = vmatprep.mubr.f32.mxu0 0.0
    %2805 = vmatmul.mubr.f32.gmra.mrb[0].mxu0 %v2419
    %v2806 = vpop.f32.mrb[0].mxu0
    %v2807 = vadd.f32 %v2733, %v2806
    %v2808 = vpop.f32.mrb[0].mxu0
    %2809 = vdwg.mxu0
    %v2810 = vsub.f32 %v2802, %v2704
    %v2811 = vsub.f32 %v2807, %v2709
    %v2812 = vxor.u32 %v2810, 2147483648
    %v2813 = vxor.u32 %v2811, 2147483648
    %v2814 = vmul.f32 %v2812, 1.442695
    %v2815 = vpow.pop %v2814
    %v2816 = vmul.f32 %v2813, 1.442695
    %v2817 = vpow.pop %v2816
    %v2818 = vadd.f32 %v2815, 1.0
    %v2819 = vadd.f32 %v2817, 1.0
    %v2820 = vrcp.pop %v2818
    %v2821 = vmul.f32 1.0, %v2820
    %v2822 = vrcp.pop %v2819
    %v2823 = vmul.f32 1.0, %v2822
    %2824 = vmatprep.subr.mxu0 0.0
    %2825 = vmatpush1.msra.mxu0 %v2821
    %2826 = vmatprep.subr.mxu0 0.0
    %2827 = vmatpush1.msra.mxu0 0.0
    %2828 = vmatprep.subr.mxu0 0.0
    %2829 = vmatpush1.msra.mxu0 0.0
    %2830 = vmatprep.subr.mxu0 0.0
    %2831 = vmatpush1.msra.mxu0 0.0
    %2832 = vmatprep.subr.mxu0 0.0
    %2833 = vmatpush1.msra.mxu0 0.0
    %2834 = vmatprep.subr.mxu0 0.0
    %2835 = vmatpush1.msra.mxu0 0.0
    %2836 = vmatprep.subr.mxu0 0.0
    %2837 = vmatpush1.msra.mxu0 0.0
    %2838 = vmatprep.subr.mxu0 0.0
    %2839 = vmatpush1.msra.mxu0 0.0
    %2840 = vmatprep.subr.mxu0 0.0
    %2841 = vmatpush1.msra.mxu0 0.0
    %2842 = vmatprep.subr.mxu0 0.0
    %2843 = vmatpush1.msra.mxu0 0.0
    %2844 = vmatprep.subr.mxu0 0.0
    %2845 = vmatpush1.msra.mxu0 0.0
    %2846 = vmatprep.subr.mxu0 0.0
    %2847 = vmatpush1.msra.mxu0 0.0
    %2848 = vmatprep.subr.mxu0 0.0
    %2849 = vmatpush1.msra.mxu0 0.0
    %2850 = vmatprep.subr.mxu0 0.0
    %2851 = vmatpush1.msra.mxu0 0.0
    %2852 = vmatprep.subr.mxu0 0.0
    %2853 = vmatpush1.msra.mxu0 0.0
    %2854 = vmatprep.subr.mxu0 0.0
    %2855 = vmatpush1.msra.mxu0 0.0
    %2856 = vmatprep.subr.mxu0 0.0
    %2857 = vmatpush1.msra.mxu0 0.0
    %2858 = vmatprep.subr.mxu0 0.0
    %2859 = vmatpush1.msra.mxu0 0.0
    %2860 = vmatprep.subr.mxu0 0.0
    %2861 = vmatpush1.msra.mxu0 0.0
    %2862 = vmatprep.subr.mxu0 0.0
    %2863 = vmatpush1.msra.mxu0 0.0
    %2864 = vmatprep.subr.mxu0 0.0
    %2865 = vmatpush1.msra.mxu0 0.0
    %2866 = vmatprep.subr.mxu0 0.0
    %2867 = vmatpush1.msra.mxu0 0.0
    %2868 = vmatprep.subr.mxu0 0.0
    %2869 = vmatpush1.msra.mxu0 0.0
    %2870 = vmatprep.subr.mxu0 0.0
    %2871 = vmatpush1.msra.mxu0 0.0
    %2872 = vmatprep.subr.mxu0 0.0
    %2873 = vmatpush1.msra.mxu0 0.0
    %2874 = vmatprep.subr.mxu0 0.0
    %2875 = vmatpush1.msra.mxu0 0.0
    %2876 = vmatprep.subr.mxu0 0.0
    %2877 = vmatpush1.msra.mxu0 0.0
    %2878 = vmatprep.subr.mxu0 0.0
    %2879 = vmatpush1.msra.mxu0 0.0
    %2880 = vmatprep.subr.mxu0 0.0
    %2881 = vmatpush1.msra.mxu0 0.0
    %2882 = vmatprep.subr.mxu0 0.0
    %2883 = vmatpush1.msra.mxu0 0.0
    %2884 = vmatprep.subr.mxu0 0.0
    %2885 = vmatpush1.msra.mxu0 0.0
    %2886 = vmatprep.subr.mxu0 0.0
    %2887 = vmatpush1.msra.mxu0 0.0
    %2888 = vmatprep.mubr.f32.mxu0 0.0
    %2889 = vmatmul.mubr.f32.gmra.mrb[0].mxu0 %v1352
    %v2890 = vpop.f32.mrb[0].mxu0
    %v2891 = vadd.f32 0.0, %v2890
    %v2892 = vpop.f32.mrb[0].mxu0
    %2893 = vmatprep.mubr.f32.mxu0 0.0
    %2894 = vmatmul.mubr.f32.gmra.mrb[0].mxu0 %v1500
    %v2895 = vpop.f32.mrb[0].mxu0
    %v2896 = vadd.f32 0.0, %v2895
    %v2897 = vpop.f32.mrb[0].mxu0
    %2898 = vmatprep.mubr.f32.mxu0 0.0
    %2899 = vmatmul.mubr.f32.gmra.mrb[0].mxu0 %v1503
    %v2900 = vpop.f32.mrb[0].mxu0
    %v2901 = vadd.f32 0.0, %v2900
    %v2902 = vpop.f32.mrb[0].mxu0
    %2903 = vdwg.mxu0
    %2905 = vrot.lane.b32.xlu0 %v2896, 16
    %v2906 = vpop.permute.xlu0 %2905
    %2909 = vrot.lane.b32.xlu0 %v2901, 32
    %v2910 = vpop.permute.xlu0 %2909
    %v2912 = vsel %vm348, %v2891, %v2906
    %v2913 = vsel %vm1594, %v2912, %v2910
    %2914 = vmatprep.subr.mxu0 0.0
    %2915 = vmatpush1.msra.mxu0 %v2823
    %2916 = vmatprep.subr.mxu0 0.0
    %2917 = vmatpush1.msra.mxu0 0.0
    %2918 = vmatprep.subr.mxu0 0.0
    %2919 = vmatpush1.msra.mxu0 0.0
    %2920 = vmatprep.subr.mxu0 0.0
    %2921 = vmatpush1.msra.mxu0 0.0
    %2922 = vmatprep.subr.mxu0 0.0
    %2923 = vmatpush1.msra.mxu0 0.0
    %2924 = vmatprep.subr.mxu0 0.0
    %2925 = vmatpush1.msra.mxu0 0.0
    %2926 = vmatprep.subr.mxu0 0.0
    %2927 = vmatpush1.msra.mxu0 0.0
    %2928 = vmatprep.subr.mxu0 0.0
    %2929 = vmatpush1.msra.mxu0 0.0
    %2930 = vmatprep.subr.mxu0 0.0
    %2931 = vmatpush1.msra.mxu0 0.0
    %2932 = vmatprep.subr.mxu0 0.0
    %2933 = vmatpush1.msra.mxu0 0.0
    %2934 = vmatprep.subr.mxu0 0.0
    %2935 = vmatpush1.msra.mxu0 0.0
    %2936 = vmatprep.subr.mxu0 0.0
    %2937 = vmatpush1.msra.mxu0 0.0
    %2938 = vmatprep.subr.mxu0 0.0
    %2939 = vmatpush1.msra.mxu0 0.0
    %2940 = vmatprep.subr.mxu0 0.0
    %2941 = vmatpush1.msra.mxu0 0.0
    %2942 = vmatprep.subr.mxu0 0.0
    %2943 = vmatpush1.msra.mxu0 0.0
    %2944 = vmatprep.subr.mxu0 0.0
    %2945 = vmatpush1.msra.mxu0 0.0
    %2946 = vmatprep.subr.mxu0 0.0
    %2947 = vmatpush1.msra.mxu0 0.0
    %2948 = vmatprep.subr.mxu0 0.0
    %2949 = vmatpush1.msra.mxu0 0.0
    %2950 = vmatprep.subr.mxu0 0.0
    %2951 = vmatpush1.msra.mxu0 0.0
    %2952 = vmatprep.subr.mxu0 0.0
    %2953 = vmatpush1.msra.mxu0 0.0
    %2954 = vmatprep.subr.mxu0 0.0
    %2955 = vmatpush1.msra.mxu0 0.0
    %2956 = vmatprep.subr.mxu0 0.0
    %2957 = vmatpush1.msra.mxu0 0.0
    %2958 = vmatprep.subr.mxu0 0.0
    %2959 = vmatpush1.msra.mxu0 0.0
    %2960 = vmatprep.subr.mxu0 0.0
    %2961 = vmatpush1.msra.mxu0 0.0
    %2962 = vmatprep.subr.mxu0 0.0
    %2963 = vmatpush1.msra.mxu0 0.0
    %2964 = vmatprep.subr.mxu0 0.0
    %2965 = vmatpush1.msra.mxu0 0.0
    %2966 = vmatprep.subr.mxu0 0.0
    %2967 = vmatpush1.msra.mxu0 0.0
    %2968 = vmatprep.subr.mxu0 0.0
    %2969 = vmatpush1.msra.mxu0 0.0
    %2970 = vmatprep.subr.mxu0 0.0
    %2971 = vmatpush1.msra.mxu0 0.0
    %2972 = vmatprep.subr.mxu0 0.0
    %2973 = vmatpush1.msra.mxu0 0.0
    %2974 = vmatprep.subr.mxu0 0.0
    %2975 = vmatpush1.msra.mxu0 0.0
    %2976 = vmatprep.subr.mxu0 0.0
    %2977 = vmatpush1.msra.mxu0 0.0
    %2978 = vmatprep.mubr.f32.mxu0 0.0
    %2979 = vmatmul.mubr.f32.gmra.mrb[0].mxu0 %v1352
    %v2980 = vpop.f32.mrb[0].mxu0
    %v2981 = vadd.f32 0.0, %v2980
    %v2982 = vpop.f32.mrb[0].mxu0
    %2983 = vmatprep.mubr.f32.mxu0 0.0
    %2984 = vmatmul.mubr.f32.gmra.mrb[0].mxu0 %v1500
    %v2985 = vpop.f32.mrb[0].mxu0
    %v2986 = vadd.f32 0.0, %v2985
    %v2987 = vpop.f32.mrb[0].mxu0
    %2988 = vmatprep.mubr.f32.mxu0 0.0
    %2989 = vmatmul.mubr.f32.gmra.mrb[0].mxu0 %v1503
    %v2990 = vpop.f32.mrb[0].mxu0
    %v2991 = vadd.f32 0.0, %v2990
    %v2992 = vpop.f32.mrb[0].mxu0
    %2993 = vdwg.mxu0
    %2995 = vrot.lane.b32.xlu0 %v2986, 16
    %v2996 = vpop.permute.xlu0 %2995
    %2999 = vrot.lane.b32.xlu0 %v2991, 32
    %v3000 = vpop.permute.xlu0 %2999
    %v3002 = vsel %vm348, %v2981, %v2996
    %v3003 = vsel %vm1594, %v3002, %v3000
    %v3004 = vld [vmem:[#allocation21] sm:$0xff]
    %v3005 = vld [vmem:[#allocation21 + $0x8] sm:$0xff]
    %v3006 = vld [vmem:[#allocation21 + $0x10] sm:$0xff]
    %v3007 = vld [vmem:[#allocation21 + $0x18] sm:$0xff]
    %v3008 = vld [vmem:[#allocation21 + $0x20] sm:$0xff]
    %v3009 = vld [vmem:[#allocation21 + $0x28] sm:$0xff]
    %v3010 = vld [vmem:[#allocation21 + $0x30] sm:$0xff]
    %v3011 = vld [vmem:[#allocation21 + $0x38] sm:$0xff]
    %v3012 = vld [vmem:[#allocation21 + $0x40] sm:$0xff]
    %v3013 = vld [vmem:[#allocation21 + $0x48] sm:$0xff]
    %v3014 = vld [vmem:[#allocation21 + $0x50] sm:$0xff]
    %v3015 = vld [vmem:[#allocation21 + $0x58] sm:$0xff]
    %v3016 = vld [vmem:[#allocation21 + $0x60] sm:$0xff]
    %v3017 = vld [vmem:[#allocation21 + $0x68] sm:$0xff]
    %v3018 = vld [vmem:[#allocation21 + $0x70] sm:$0xff]
    %v3019 = vld [vmem:[#allocation21 + $0x78] sm:$0xff]
    %v3020 = vld [vmem:[#allocation21 + $0x80] sm:$0xff]
    %v3021 = vld [vmem:[#allocation21 + $0x88] sm:$0xff]
    %v3022 = vld [vmem:[#allocation21 + $0x90] sm:$0xff]
    %v3023 = vld [vmem:[#allocation21 + $0x98] sm:$0xff]
    %v3024 = vld [vmem:[#allocation21 + $0xa0] sm:$0xff]
    %v3025 = vld [vmem:[#allocation21 + $0xa8] sm:$0xff]
    %v3026 = vld [vmem:[#allocation21 + $0xb0] sm:$0xff]
    %v3027 = vld [vmem:[#allocation21 + $0xb8] sm:$0xff]
    %v3028 = vld [vmem:[%s47] sm:$0xf]
    %v3030 = vlaneseq
    %v3031 = vshrl.u32 %v3030, 7
    %v3032 = vsub.s32 0, %v3031
    %v3033 = vrot.slane %v3028, %v3032
    %v3034 = vlaneseq
    %v3035 = vshrl.u32 %v3034, 7
    %v3036 = vsub.s32 1, %v3035
    %v3037 = vrot.slane %v3028, %v3036
    %v3038 = vlaneseq
    %v3039 = vshrl.u32 %v3038, 7
    %v3040 = vsub.s32 2, %v3039
    %v3041 = vrot.slane %v3028, %v3040
    %v3042 = vlaneseq
    %v3043 = vshrl.u32 %v3042, 7
    %v3044 = vsub.s32 3, %v3043
    %v3045 = vrot.slane %v3028, %v3044
    %v3051 = vsel %vm1732, %v2913, 0
    %v3054 = vsel %vm1732, %v3003, 0
    %3056 = vmatprep.subr.mxu0 %v3005
    %3057 = vmatpush1.msra.mxu0 %v3004
    %3058 = vmatprep.subr.mxu0 %v3009
    %3059 = vmatpush1.msra.mxu0 %v3008
    %3060 = vmatprep.subr.mxu0 %v3013
    %3061 = vmatpush1.msra.mxu0 %v3012
    %3062 = vmatprep.subr.mxu0 %v3017
    %3063 = vmatpush1.msra.mxu0 %v3016
    %3064 = vmatprep.subr.mxu0 %v3021
    %3065 = vmatpush1.msra.mxu0 %v3020
    %3066 = vmatprep.subr.mxu0 %v3025
    %3067 = vmatpush1.msra.mxu0 %v3024
    %3068 = vmatprep.subr.mxu0 0.0
    %3069 = vmatpush1.msra.mxu0 0.0
    %3070 = vmatprep.subr.mxu0 0.0
    %3071 = vmatpush1.msra.mxu0 0.0
    %3072 = vmatprep.subr.mxu0 0.0
    %3073 = vmatpush1.msra.mxu0 0.0
    %3074 = vmatprep.subr.mxu0 0.0
    %3075 = vmatpush1.msra.mxu0 0.0
    %3076 = vmatprep.subr.mxu0 0.0
    %3077 = vmatpush1.msra.mxu0 0.0
    %3078 = vmatprep.subr.mxu0 0.0
    %3079 = vmatpush1.msra.mxu0 0.0
    %3080 = vmatprep.subr.mxu0 0.0
    %3081 = vmatpush1.msra.mxu0 0.0
    %3082 = vmatprep.subr.mxu0 0.0
    %3083 = vmatpush1.msra.mxu0 0.0
    %3084 = vmatprep.subr.mxu0 0.0
    %3085 = vmatpush1.msra.mxu0 0.0
    %3086 = vmatprep.subr.mxu0 0.0
    %3087 = vmatpush1.msra.mxu0 0.0
    %3088 = vmatprep.subr.mxu0 0.0
    %3089 = vmatpush1.msra.mxu0 0.0
    %3090 = vmatprep.subr.mxu0 0.0
    %3091 = vmatpush1.msra.mxu0 0.0
    %3092 = vmatprep.subr.mxu0 0.0
    %3093 = vmatpush1.msra.mxu0 0.0
    %3094 = vmatprep.subr.mxu0 0.0
    %3095 = vmatpush1.msra.mxu0 0.0
    %3096 = vmatprep.subr.mxu0 0.0
    %3097 = vmatpush1.msra.mxu0 0.0
    %3098 = vmatprep.subr.mxu0 0.0
    %3099 = vmatpush1.msra.mxu0 0.0
    %3100 = vmatprep.subr.mxu0 0.0
    %3101 = vmatpush1.msra.mxu0 0.0
    %3102 = vmatprep.subr.mxu0 0.0
    %3103 = vmatpush1.msra.mxu0 0.0
    %3104 = vmatprep.subr.mxu0 0.0
    %3105 = vmatpush1.msra.mxu0 0.0
    %3106 = vmatprep.subr.mxu0 0.0
    %3107 = vmatpush1.msra.mxu0 0.0
    %3108 = vmatprep.subr.mxu0 0.0
    %3109 = vmatpush1.msra.mxu0 0.0
    %3110 = vmatprep.subr.mxu0 0.0
    %3111 = vmatpush1.msra.mxu0 0.0
    %3112 = vmatprep.subr.mxu0 0.0
    %3113 = vmatpush1.msra.mxu0 0.0
    %3114 = vmatprep.subr.mxu0 0.0
    %3115 = vmatpush1.msra.mxu0 0.0
    %3116 = vmatprep.subr.mxu0 0.0
    %3117 = vmatpush1.msra.mxu0 0.0
    %3118 = vmatprep.subr.mxu0 0.0
    %3119 = vmatpush1.msra.mxu0 0.0
    %3120 = vmatprep.mubr.f32.mxu0 0.0
    %3121 = vmatmul.mubr.f32.gmra.mrb[0].mxu0 %v3051
    %v3122 = vpop.f32.mrb[0].mxu0
    %v3123 = vadd.f32 %v3033, %v3122
    %v3124 = vpop.f32.mrb[0].mxu0
    %v3125 = vadd.f32 %v3037, %v3124
    %3126 = vmatprep.mubr.f32.mxu0 0.0
    %3127 = vmatmul.mubr.f32.gmra.mrb[0].mxu0 %v3054
    %v3128 = vpop.f32.mrb[0].mxu0
    %v3129 = vadd.f32 %v3033, %v3128
    %v3130 = vpop.f32.mrb[0].mxu0
    %v3131 = vadd.f32 %v3037, %v3130
    %3132 = vdwg.mxu0
    %3133 = vmatprep.subr.mxu0 %v3007
    %3134 = vmatpush1.msra.mxu0 %v3006
    %3135 = vmatprep.subr.mxu0 %v3011
    %3136 = vmatpush1.msra.mxu0 %v3010
    %3137 = vmatprep.subr.mxu0 %v3015
    %3138 = vmatpush1.msra.mxu0 %v3014
    %3139 = vmatprep.subr.mxu0 %v3019
    %3140 = vmatpush1.msra.mxu0 %v3018
    %3141 = vmatprep.subr.mxu0 %v3023
    %3142 = vmatpush1.msra.mxu0 %v3022
    %3143 = vmatprep.subr.mxu0 %v3027
    %3144 = vmatpush1.msra.mxu0 %v3026
    %3145 = vmatprep.subr.mxu0 0.0
    %3146 = vmatpush1.msra.mxu0 0.0
    %3147 = vmatprep.subr.mxu0 0.0
    %3148 = vmatpush1.msra.mxu0 0.0
    %3149 = vmatprep.subr.mxu0 0.0
    %3150 = vmatpush1.msra.mxu0 0.0
    %3151 = vmatprep.subr.mxu0 0.0
    %3152 = vmatpush1.msra.mxu0 0.0
    %3153 = vmatprep.subr.mxu0 0.0
    %3154 = vmatpush1.msra.mxu0 0.0
    %3155 = vmatprep.subr.mxu0 0.0
    %3156 = vmatpush1.msra.mxu0 0.0
    %3157 = vmatprep.subr.mxu0 0.0
    %3158 = vmatpush1.msra.mxu0 0.0
    %3159 = vmatprep.subr.mxu0 0.0
    %3160 = vmatpush1.msra.mxu0 0.0
    %3161 = vmatprep.subr.mxu0 0.0
    %3162 = vmatpush1.msra.mxu0 0.0
    %3163 = vmatprep.subr.mxu0 0.0
    %3164 = vmatpush1.msra.mxu0 0.0
    %3165 = vmatprep.subr.mxu0 0.0
    %3166 = vmatpush1.msra.mxu0 0.0
    %3167 = vmatprep.subr.mxu0 0.0
    %3168 = vmatpush1.msra.mxu0 0.0
    %3169 = vmatprep.subr.mxu0 0.0
    %3170 = vmatpush1.msra.mxu0 0.0
    %3171 = vmatprep.subr.mxu0 0.0
    %3172 = vmatpush1.msra.mxu0 0.0
    %3173 = vmatprep.subr.mxu0 0.0
    %3174 = vmatpush1.msra.mxu0 0.0
    %3175 = vmatprep.subr.mxu0 0.0
    %3176 = vmatpush1.msra.mxu0 0.0
    %3177 = vmatprep.subr.mxu0 0.0
    %3178 = vmatpush1.msra.mxu0 0.0
    %3179 = vmatprep.subr.mxu0 0.0
    %3180 = vmatpush1.msra.mxu0 0.0
    %3181 = vmatprep.subr.mxu0 0.0
    %3182 = vmatpush1.msra.mxu0 0.0
    %3183 = vmatprep.subr.mxu0 0.0
    %3184 = vmatpush1.msra.mxu0 0.0
    %3185 = vmatprep.subr.mxu0 0.0
    %3186 = vmatpush1.msra.mxu0 0.0
    %3187 = vmatprep.subr.mxu0 0.0
    %3188 = vmatpush1.msra.mxu0 0.0
    %3189 = vmatprep.subr.mxu0 0.0
    %3190 = vmatpush1.msra.mxu0 0.0
    %3191 = vmatprep.subr.mxu0 0.0
    %3192 = vmatpush1.msra.mxu0 0.0
    %3193 = vmatprep.subr.mxu0 0.0
    %3194 = vmatpush1.msra.mxu0 0.0
    %3195 = vmatprep.subr.mxu0 0.0
    %3196 = vmatpush1.msra.mxu0 0.0
    %3197 = vmatprep.mubr.f32.mxu0 0.0
    %3198 = vmatmul.mubr.f32.gmra.mrb[0].mxu0 %v3051
    %v3199 = vpop.f32.mrb[0].mxu0
    %v3200 = vadd.f32 %v3041, %v3199
    %v3201 = vpop.f32.mrb[0].mxu0
    %v3202 = vadd.f32 %v3045, %v3201
    %3203 = vmatprep.mubr.f32.mxu0 0.0
    %3204 = vmatmul.mubr.f32.gmra.mrb[0].mxu0 %v3054
    %v3205 = vpop.f32.mrb[0].mxu0
    %v3206 = vadd.f32 %v3041, %v3205
    %v3207 = vpop.f32.mrb[0].mxu0
    %v3208 = vadd.f32 %v3045, %v3207
    %3209 = vdwg.mxu0
    %v3210 = vxor.u32 %v3125, 2147483648
    %v3211 = vxor.u32 %v3131, 2147483648
    %v3212 = vmul.f32 %v3210, 1.442695
    %v3213 = vpow.pop %v3212
    %v3214 = vmul.f32 %v3211, 1.442695
    %v3215 = vpow.pop %v3214
    %v3216 = vadd.f32 %v3213, 1.0
    %v3217 = vadd.f32 %v3215, 1.0
    %v3218 = vrcp.pop %v3216
    %v3219 = vmul.f32 1.0, %v3218
    %v3220 = vrcp.pop %v3217
    %v3221 = vmul.f32 1.0, %v3220
    %v3222 = vmul.f32 %v3123, %v3219
    %v3223 = vmul.f32 %v3129, %v3221
    %v3224 = vxor.u32 %v3202, 2147483648
    %v3225 = vxor.u32 %v3208, 2147483648
    %v3226 = vmul.f32 %v3224, 1.442695
    %v3227 = vpow.pop %v3226
    %v3228 = vmul.f32 %v3225, 1.442695
    %v3229 = vpow.pop %v3228
    %v3230 = vadd.f32 %v3227, 1.0
    %v3231 = vadd.f32 %v3229, 1.0
    %v3232 = vrcp.pop %v3230
    %v3233 = vmul.f32 1.0, %v3232
    %v3234 = vrcp.pop %v3231
    %v3235 = vmul.f32 1.0, %v3234
    %v3236 = vmul.f32 %v3200, %v3233
    %v3237 = vmul.f32 %v3206, %v3235
    %v3238 = vld [vmem:[#allocation23] sm:$0xff]
    %v3239 = vld [vmem:[#allocation23 + $0x8] sm:$0xff]
    %v3240 = vld [vmem:[#allocation23 + $0x10] sm:$0xff]
    %v3241 = vld [vmem:[#allocation23 + $0x18] sm:$0xff]
    %v3242 = vld [vmem:[#allocation23 + $0x20] sm:$0xff]
    %v3243 = vld [vmem:[#allocation23 + $0x28] sm:$0xff]
    %v3244 = vld [vmem:[#allocation23 + $0x30] sm:$0xff]
    %v3245 = vld [vmem:[#allocation23 + $0x38] sm:$0xff]
    %v3246 = vld [vmem:[#allocation23 + $0x40] sm:$0xff]
    %v3247 = vld [vmem:[#allocation23 + $0x48] sm:$0xff]
    %v3248 = vld [vmem:[#allocation23 + $0x50] sm:$0xff]
    %v3249 = vld [vmem:[#allocation23 + $0x58] sm:$0xff]
    %v3250 = vld [vmem:[#allocation23 + $0x60] sm:$0xff]
    %v3251 = vld [vmem:[#allocation23 + $0x68] sm:$0xff]
    %v3252 = vld [vmem:[#allocation23 + $0x70] sm:$0xff]
    %v3253 = vld [vmem:[#allocation23 + $0x78] sm:$0xff]
    %v3254 = vld [vmem:[#allocation23 + $0x80] sm:$0xff]
    %v3255 = vld [vmem:[#allocation23 + $0x88] sm:$0xff]
    %v3256 = vld [vmem:[#allocation23 + $0x90] sm:$0xff]
    %v3257 = vld [vmem:[#allocation23 + $0x98] sm:$0xff]
    %v3258 = vld [vmem:[#allocation23 + $0xa0] sm:$0xff]
    %v3259 = vld [vmem:[#allocation23 + $0xa8] sm:$0xff]
    %v3260 = vld [vmem:[#allocation23 + $0xb0] sm:$0xff]
    %v3261 = vld [vmem:[#allocation23 + $0xb8] sm:$0xff]
    %v3262 = vld [vmem:[#allocation23 + $0xc0] sm:$0xff]
    %v3263 = vld [vmem:[#allocation23 + $0xc8] sm:$0xff]
    %v3264 = vld [vmem:[#allocation23 + $0xd0] sm:$0xff]
    %v3265 = vld [vmem:[#allocation23 + $0xd8] sm:$0xff]
    %v3266 = vld [vmem:[#allocation23 + $0xe0] sm:$0xff]
    %v3267 = vld [vmem:[#allocation23 + $0xe8] sm:$0xff]
    %v3268 = vld [vmem:[#allocation23 + $0xf0] sm:$0xff]
    %v3269 = vld [vmem:[#allocation23 + $0xf8] sm:$0xff]
    %v3270 = vld [vmem:[#allocation23 + $0x100] sm:$0xff]
    %v3271 = vld [vmem:[#allocation23 + $0x108] sm:$0xff]
    %v3272 = vld [vmem:[#allocation23 + $0x110] sm:$0xff]
    %v3273 = vld [vmem:[#allocation23 + $0x118] sm:$0xff]
    %v3274 = vld [vmem:[#allocation23 + $0x120] sm:$0xff]
    %v3275 = vld [vmem:[#allocation23 + $0x128] sm:$0xff]
    %v3276 = vld [vmem:[#allocation23 + $0x130] sm:$0xff]
    %v3277 = vld [vmem:[#allocation23 + $0x138] sm:$0xff]
    %v3278 = vld [vmem:[#allocation23 + $0x140] sm:$0xff]
    %v3279 = vld [vmem:[#allocation23 + $0x148] sm:$0xff]
    %v3280 = vld [vmem:[#allocation23 + $0x150] sm:$0xff]
    %v3281 = vld [vmem:[#allocation23 + $0x158] sm:$0xff]
    %v3282 = vld [vmem:[#allocation23 + $0x160] sm:$0xff]
    %v3283 = vld [vmem:[#allocation23 + $0x168] sm:$0xff]
    %v3284 = vld [vmem:[#allocation23 + $0x170] sm:$0xff]
    %v3285 = vld [vmem:[#allocation23 + $0x178] sm:$0xff]
    %v3286 = vld [vmem:[#allocation23 + $0x180] sm:$0xff]
    %v3287 = vld [vmem:[#allocation23 + $0x188] sm:$0xff]
    %v3288 = vld [vmem:[#allocation23 + $0x190] sm:$0xff]
    %v3289 = vld [vmem:[#allocation23 + $0x198] sm:$0xff]
    %v3290 = vld [vmem:[#allocation23 + $0x1a0] sm:$0xff]
    %v3291 = vld [vmem:[#allocation23 + $0x1a8] sm:$0xff]
    %v3292 = vld [vmem:[#allocation23 + $0x1b0] sm:$0xff]
    %v3293 = vld [vmem:[#allocation23 + $0x1b8] sm:$0xff]
    %v3294 = vld [vmem:[#allocation23 + $0x1c0] sm:$0xff]
    %v3295 = vld [vmem:[#allocation23 + $0x1c8] sm:$0xff]
    %v3296 = vld [vmem:[#allocation23 + $0x1d0] sm:$0xff]
    %v3297 = vld [vmem:[#allocation23 + $0x1d8] sm:$0xff]
    %v3298 = vld [vmem:[#allocation23 + $0x1e0] sm:$0xff]
    %v3299 = vld [vmem:[#allocation23 + $0x1e8] sm:$0xff]
    %v3300 = vld [vmem:[#allocation23 + $0x1f0] sm:$0xff]
    %v3301 = vld [vmem:[#allocation23 + $0x1f8] sm:$0xff]
    %v3302 = vld [vmem:[#allocation23 + $0x200] sm:$0xff]
    %v3303 = vld [vmem:[#allocation23 + $0x208] sm:$0xff]
    %v3304 = vld [vmem:[#allocation23 + $0x210] sm:$0xff]
    %v3305 = vld [vmem:[#allocation23 + $0x218] sm:$0xff]
    %v3306 = vld [vmem:[#allocation23 + $0x220] sm:$0xff]
    %v3307 = vld [vmem:[#allocation23 + $0x228] sm:$0xff]
    %v3308 = vld [vmem:[#allocation23 + $0x230] sm:$0xff]
    %v3309 = vld [vmem:[#allocation23 + $0x238] sm:$0xff]
    %v3310 = vld [vmem:[#allocation23 + $0x240] sm:$0xff]
    %v3311 = vld [vmem:[#allocation23 + $0x248] sm:$0xff]
    %v3312 = vld [vmem:[#allocation23 + $0x250] sm:$0xff]
    %v3313 = vld [vmem:[#allocation23 + $0x258] sm:$0xff]
    %v3314 = vld [vmem:[#allocation23 + $0x260] sm:$0xff]
    %v3315 = vld [vmem:[#allocation23 + $0x268] sm:$0xff]
    %v3316 = vld [vmem:[#allocation23 + $0x270] sm:$0xff]
    %v3317 = vld [vmem:[#allocation23 + $0x278] sm:$0xff]
    %v3318 = vld [vmem:[#allocation23 + $0x280] sm:$0xff]
    %v3319 = vld [vmem:[#allocation23 + $0x288] sm:$0xff]
    %v3320 = vld [vmem:[#allocation23 + $0x290] sm:$0xff]
    %v3321 = vld [vmem:[#allocation23 + $0x298] sm:$0xff]
    %v3322 = vld [vmem:[#allocation23 + $0x2a0] sm:$0xff]
    %v3323 = vld [vmem:[#allocation23 + $0x2a8] sm:$0xff]
    %v3324 = vld [vmem:[#allocation23 + $0x2b0] sm:$0xff]
    %v3325 = vld [vmem:[#allocation23 + $0x2b8] sm:$0xff]
    %v3326 = vld [vmem:[#allocation23 + $0x2c0] sm:$0xff]
    %v3327 = vld [vmem:[#allocation23 + $0x2c8] sm:$0xff]
    %v3328 = vld [vmem:[#allocation23 + $0x2d0] sm:$0xff]
    %v3329 = vld [vmem:[#allocation23 + $0x2d8] sm:$0xff]
    %v3330 = vld [vmem:[#allocation23 + $0x2e0] sm:$0xff]
    %v3331 = vld [vmem:[#allocation23 + $0x2e8] sm:$0xff]
    %v3332 = vld [vmem:[#allocation23 + $0x2f0] sm:$0xff]
    %v3333 = vld [vmem:[#allocation23 + $0x2f8] sm:$0xff]
    %v3334 = vld [vmem:[#allocation23 + $0x300] sm:$0xff]
    %v3335 = vld [vmem:[#allocation23 + $0x308] sm:$0xff]
    %v3336 = vld [vmem:[#allocation23 + $0x310] sm:$0xff]
    %v3337 = vld [vmem:[#allocation23 + $0x318] sm:$0xff]
    %v3338 = vld [vmem:[#allocation23 + $0x320] sm:$0xff]
    %v3339 = vld [vmem:[#allocation23 + $0x328] sm:$0xff]
    %v3340 = vld [vmem:[#allocation23 + $0x330] sm:$0xff]
    %v3341 = vld [vmem:[#allocation23 + $0x338] sm:$0xff]
    %v3342 = vld [vmem:[#allocation23 + $0x340] sm:$0xff]
    %v3343 = vld [vmem:[#allocation23 + $0x348] sm:$0xff]
    %v3344 = vld [vmem:[#allocation23 + $0x350] sm:$0xff]
    %v3345 = vld [vmem:[#allocation23 + $0x358] sm:$0xff]
    %v3346 = vld [vmem:[#allocation23 + $0x360] sm:$0xff]
    %v3347 = vld [vmem:[#allocation23 + $0x368] sm:$0xff]
    %v3348 = vld [vmem:[#allocation23 + $0x370] sm:$0xff]
    %v3349 = vld [vmem:[#allocation23 + $0x378] sm:$0xff]
    %v3350 = vld [vmem:[#allocation23 + $0x380] sm:$0xff]
    %v3351 = vld [vmem:[#allocation23 + $0x388] sm:$0xff]
    %v3352 = vld [vmem:[#allocation23 + $0x390] sm:$0xff]
    %v3353 = vld [vmem:[#allocation23 + $0x398] sm:$0xff]
    %v3354 = vld [vmem:[#allocation23 + $0x3a0] sm:$0xff]
    %v3355 = vld [vmem:[#allocation23 + $0x3a8] sm:$0xff]
    %v3356 = vld [vmem:[#allocation23 + $0x3b0] sm:$0xff]
    %v3357 = vld [vmem:[#allocation23 + $0x3b8] sm:$0xff]
    %v3358 = vld [vmem:[#allocation23 + $0x3c0] sm:$0xff]
    %v3359 = vld [vmem:[#allocation23 + $0x3c8] sm:$0xff]
    %v3360 = vld [vmem:[#allocation23 + $0x3d0] sm:$0xff]
    %v3361 = vld [vmem:[#allocation23 + $0x3d8] sm:$0xff]
    %v3362 = vld [vmem:[#allocation23 + $0x3e0] sm:$0xff]
    %v3363 = vld [vmem:[#allocation23 + $0x3e8] sm:$0xff]
    %v3364 = vld [vmem:[#allocation23 + $0x3f0] sm:$0xff]
    %v3365 = vld [vmem:[#allocation23 + $0x3f8] sm:$0xff]
    %v3366 = vld [vmem:[%s51] sm:$0xf]
    %v3368 = vlaneseq
    %v3369 = vshrl.u32 %v3368, 7
    %v3370 = vsub.s32 0, %v3369
    %v3371 = vrot.slane %v3366, %v3370
    %v3372 = vlaneseq
    %v3373 = vshrl.u32 %v3372, 7
    %v3374 = vsub.s32 1, %v3373
    %v3375 = vrot.slane %v3366, %v3374
    %v3376 = vlaneseq
    %v3377 = vshrl.u32 %v3376, 7
    %v3378 = vsub.s32 2, %v3377
    %v3379 = vrot.slane %v3366, %v3378
    %v3380 = vlaneseq
    %v3381 = vshrl.u32 %v3380, 7
    %v3382 = vsub.s32 3, %v3381
    %v3383 = vrot.slane %v3366, %v3382
    %3388 = vmatprep.subr.mxu0 %v3239
    %3389 = vmatpush1.msra.mxu0 %v3238
    %3390 = vmatprep.subr.mxu0 %v3243
    %3391 = vmatpush1.msra.mxu0 %v3242
    %3392 = vmatprep.subr.mxu0 %v3247
    %3393 = vmatpush1.msra.mxu0 %v3246
    %3394 = vmatprep.subr.mxu0 %v3251
    %3395 = vmatpush1.msra.mxu0 %v3250
    %3396 = vmatprep.subr.mxu0 %v3255
    %3397 = vmatpush1.msra.mxu0 %v3254
    %3398 = vmatprep.subr.mxu0 %v3259
    %3399 = vmatpush1.msra.mxu0 %v3258
    %3400 = vmatprep.subr.mxu0 %v3263
    %3401 = vmatpush1.msra.mxu0 %v3262
    %3402 = vmatprep.subr.mxu0 %v3267
    %3403 = vmatpush1.msra.mxu0 %v3266
    %3404 = vmatprep.subr.mxu0 %v3271
    %3405 = vmatpush1.msra.mxu0 %v3270
    %3406 = vmatprep.subr.mxu0 %v3275
    %3407 = vmatpush1.msra.mxu0 %v3274
    %3408 = vmatprep.subr.mxu0 %v3279
    %3409 = vmatpush1.msra.mxu0 %v3278
    %3410 = vmatprep.subr.mxu0 %v3283
    %3411 = vmatpush1.msra.mxu0 %v3282
    %3412 = vmatprep.subr.mxu0 %v3287
    %3413 = vmatpush1.msra.mxu0 %v3286
    %3414 = vmatprep.subr.mxu0 %v3291
    %3415 = vmatpush1.msra.mxu0 %v3290
    %3416 = vmatprep.subr.mxu0 %v3295
    %3417 = vmatpush1.msra.mxu0 %v3294
    %3418 = vmatprep.subr.mxu0 %v3299
    %3419 = vmatpush1.msra.mxu0 %v3298
    %3420 = vmatprep.subr.mxu0 %v3303
    %3421 = vmatpush1.msra.mxu0 %v3302
    %3422 = vmatprep.subr.mxu0 %v3307
    %3423 = vmatpush1.msra.mxu0 %v3306
    %3424 = vmatprep.subr.mxu0 %v3311
    %3425 = vmatpush1.msra.mxu0 %v3310
    %3426 = vmatprep.subr.mxu0 %v3315
    %3427 = vmatpush1.msra.mxu0 %v3314
    %3428 = vmatprep.subr.mxu0 %v3319
    %3429 = vmatpush1.msra.mxu0 %v3318
    %3430 = vmatprep.subr.mxu0 %v3323
    %3431 = vmatpush1.msra.mxu0 %v3322
    %3432 = vmatprep.subr.mxu0 %v3327
    %3433 = vmatpush1.msra.mxu0 %v3326
    %3434 = vmatprep.subr.mxu0 %v3331
    %3435 = vmatpush1.msra.mxu0 %v3330
    %3436 = vmatprep.subr.mxu0 %v3335
    %3437 = vmatpush1.msra.mxu0 %v3334
    %3438 = vmatprep.subr.mxu0 %v3339
    %3439 = vmatpush1.msra.mxu0 %v3338
    %3440 = vmatprep.subr.mxu0 %v3343
    %3441 = vmatpush1.msra.mxu0 %v3342
    %3442 = vmatprep.subr.mxu0 %v3347
    %3443 = vmatpush1.msra.mxu0 %v3346
    %3444 = vmatprep.subr.mxu0 %v3351
    %3445 = vmatpush1.msra.mxu0 %v3350
    %3446 = vmatprep.subr.mxu0 %v3355
    %3447 = vmatpush1.msra.mxu0 %v3354
    %3448 = vmatprep.subr.mxu0 %v3359
    %3449 = vmatpush1.msra.mxu0 %v3358
    %3450 = vmatprep.subr.mxu0 %v3363
    %3451 = vmatpush1.msra.mxu0 %v3362
    %3452 = vmatprep.mubr.f32.mxu0 %v3236
    %3453 = vmatmul.mubr.f32.gmra.mrb[0].mxu0 %v3222
    %v3454 = vpop.f32.mrb[0].mxu0
    %v3455 = vadd.f32 %v3371, %v3454
    %v3456 = vpop.f32.mrb[0].mxu0
    %v3457 = vadd.f32 %v3375, %v3456
    %3458 = vmatprep.mubr.f32.mxu0 %v3237
    %3459 = vmatmul.mubr.f32.gmra.mrb[0].mxu0 %v3223
    %v3460 = vpop.f32.mrb[0].mxu0
    %v3461 = vadd.f32 %v3371, %v3460
    %v3462 = vpop.f32.mrb[0].mxu0
    %v3463 = vadd.f32 %v3375, %v3462
    %3464 = vdwg.mxu0
    %3465 = vmatprep.subr.mxu0 %v3241
    %3466 = vmatpush1.msra.mxu0 %v3240
    %3467 = vmatprep.subr.mxu0 %v3245
    %3468 = vmatpush1.msra.mxu0 %v3244
    %3469 = vmatprep.subr.mxu0 %v3249
    %3470 = vmatpush1.msra.mxu0 %v3248
    %3471 = vmatprep.subr.mxu0 %v3253
    %3472 = vmatpush1.msra.mxu0 %v3252
    %3473 = vmatprep.subr.mxu0 %v3257
    %3474 = vmatpush1.msra.mxu0 %v3256
    %3475 = vmatprep.subr.mxu0 %v3261
    %3476 = vmatpush1.msra.mxu0 %v3260
    %3477 = vmatprep.subr.mxu0 %v3265
    %3478 = vmatpush1.msra.mxu0 %v3264
    %3479 = vmatprep.subr.mxu0 %v3269
    %3480 = vmatpush1.msra.mxu0 %v3268
    %3481 = vmatprep.subr.mxu0 %v3273
    %3482 = vmatpush1.msra.mxu0 %v3272
    %3483 = vmatprep.subr.mxu0 %v3277
    %3484 = vmatpush1.msra.mxu0 %v3276
    %3485 = vmatprep.subr.mxu0 %v3281
    %3486 = vmatpush1.msra.mxu0 %v3280
    %3487 = vmatprep.subr.mxu0 %v3285
    %3488 = vmatpush1.msra.mxu0 %v3284
    %3489 = vmatprep.subr.mxu0 %v3289
    %3490 = vmatpush1.msra.mxu0 %v3288
    %3491 = vmatprep.subr.mxu0 %v3293
    %3492 = vmatpush1.msra.mxu0 %v3292
    %3493 = vmatprep.subr.mxu0 %v3297
    %3494 = vmatpush1.msra.mxu0 %v3296
    %3495 = vmatprep.subr.mxu0 %v3301
    %3496 = vmatpush1.msra.mxu0 %v3300
    %3497 = vmatprep.subr.mxu0 %v3305
    %3498 = vmatpush1.msra.mxu0 %v3304
    %3499 = vmatprep.subr.mxu0 %v3309
    %3500 = vmatpush1.msra.mxu0 %v3308
    %3501 = vmatprep.subr.mxu0 %v3313
    %3502 = vmatpush1.msra.mxu0 %v3312
    %3503 = vmatprep.subr.mxu0 %v3317
    %3504 = vmatpush1.msra.mxu0 %v3316
    %3505 = vmatprep.subr.mxu0 %v3321
    %3506 = vmatpush1.msra.mxu0 %v3320
    %3507 = vmatprep.subr.mxu0 %v3325
    %3508 = vmatpush1.msra.mxu0 %v3324
    %3509 = vmatprep.subr.mxu0 %v3329
    %3510 = vmatpush1.msra.mxu0 %v3328
    %3511 = vmatprep.subr.mxu0 %v3333
    %3512 = vmatpush1.msra.mxu0 %v3332
    %3513 = vmatprep.subr.mxu0 %v3337
    %3514 = vmatpush1.msra.mxu0 %v3336
    %3515 = vmatprep.subr.mxu0 %v3341
    %3516 = vmatpush1.msra.mxu0 %v3340
    %3517 = vmatprep.subr.mxu0 %v3345
    %3518 = vmatpush1.msra.mxu0 %v3344
    %3519 = vmatprep.subr.mxu0 %v3349
    %3520 = vmatpush1.msra.mxu0 %v3348
    %3521 = vmatprep.subr.mxu0 %v3353
    %3522 = vmatpush1.msra.mxu0 %v3352
    %3523 = vmatprep.subr.mxu0 %v3357
    %3524 = vmatpush1.msra.mxu0 %v3356
    %3525 = vmatprep.subr.mxu0 %v3361
    %3526 = vmatpush1.msra.mxu0 %v3360
    %3527 = vmatprep.subr.mxu0 %v3365
    %3528 = vmatpush1.msra.mxu0 %v3364
    %3529 = vmatprep.mubr.f32.mxu0 %v3236
    %3530 = vmatmul.mubr.f32.gmra.mrb[0].mxu0 %v3222
    %v3531 = vpop.f32.mrb[0].mxu0
    %v3532 = vadd.f32 %v3379, %v3531
    %v3533 = vpop.f32.mrb[0].mxu0
    %v3534 = vadd.f32 %v3383, %v3533
    %3535 = vmatprep.mubr.f32.mxu0 %v3237
    %3536 = vmatmul.mubr.f32.gmra.mrb[0].mxu0 %v3223
    %v3537 = vpop.f32.mrb[0].mxu0
    %v3538 = vadd.f32 %v3379, %v3537
    %v3539 = vpop.f32.mrb[0].mxu0
    %v3540 = vadd.f32 %v3383, %v3539
    %3541 = vdwg.mxu0
    %v3542 = vxor.u32 %v3457, 2147483648
    %v3543 = vxor.u32 %v3463, 2147483648
    %v3544 = vmul.f32 %v3542, 1.442695
    %v3545 = vpow.pop %v3544
    %v3546 = vmul.f32 %v3543, 1.442695
    %v3547 = vpow.pop %v3546
    %v3548 = vadd.f32 %v3545, 1.0
    %v3549 = vadd.f32 %v3547, 1.0
    %v3550 = vrcp.pop %v3548
    %v3551 = vmul.f32 1.0, %v3550
    %v3552 = vrcp.pop %v3549
    %v3553 = vmul.f32 1.0, %v3552
    %v3554 = vmul.f32 %v3455, %v3551
    %v3555 = vmul.f32 %v3461, %v3553
    %v3556 = vxor.u32 %v3534, 2147483648
    %v3557 = vxor.u32 %v3540, 2147483648
    %v3558 = vmul.f32 %v3556, 1.442695
    %v3559 = vpow.pop %v3558
    %v3560 = vmul.f32 %v3557, 1.442695
    %v3561 = vpow.pop %v3560
    %v3562 = vadd.f32 %v3559, 1.0
    %v3563 = vadd.f32 %v3561, 1.0
    %v3564 = vrcp.pop %v3562
    %v3565 = vmul.f32 1.0, %v3564
    %v3566 = vrcp.pop %v3563
    %v3567 = vmul.f32 1.0, %v3566
    %v3568 = vmul.f32 %v3532, %v3565
    %v3569 = vmul.f32 %v3538, %v3567
    %v3570 = vld [vmem:[#allocation24] sm:$0xff]
    %v3571 = vld [vmem:[#allocation24 + $0x8] sm:$0xff]
    %v3572 = vld [vmem:[#allocation24 + $0x10] sm:$0xff]
    %v3573 = vld [vmem:[#allocation24 + $0x18] sm:$0xff]
    %v3574 = vld [vmem:[#allocation24 + $0x20] sm:$0xff]
    %v3575 = vld [vmem:[#allocation24 + $0x28] sm:$0xff]
    %v3576 = vld [vmem:[#allocation24 + $0x30] sm:$0xff]
    %v3577 = vld [vmem:[#allocation24 + $0x38] sm:$0xff]
    %v3578 = vld [vmem:[#allocation24 + $0x40] sm:$0xff]
    %v3579 = vld [vmem:[#allocation24 + $0x48] sm:$0xff]
    %v3580 = vld [vmem:[#allocation24 + $0x50] sm:$0xff]
    %v3581 = vld [vmem:[#allocation24 + $0x58] sm:$0xff]
    %v3582 = vld [vmem:[#allocation24 + $0x60] sm:$0xff]
    %v3583 = vld [vmem:[#allocation24 + $0x68] sm:$0xff]
    %v3584 = vld [vmem:[#allocation24 + $0x70] sm:$0xff]
    %v3585 = vld [vmem:[#allocation24 + $0x78] sm:$0xff]
    %v3586 = vld [vmem:[#allocation24 + $0x80] sm:$0xff]
    %v3587 = vld [vmem:[#allocation24 + $0x88] sm:$0xff]
    %v3588 = vld [vmem:[#allocation24 + $0x90] sm:$0xff]
    %v3589 = vld [vmem:[#allocation24 + $0x98] sm:$0xff]
    %v3590 = vld [vmem:[#allocation24 + $0xa0] sm:$0xff]
    %v3591 = vld [vmem:[#allocation24 + $0xa8] sm:$0xff]
    %v3592 = vld [vmem:[#allocation24 + $0xb0] sm:$0xff]
    %v3593 = vld [vmem:[#allocation24 + $0xb8] sm:$0xff]
    %v3594 = vld [vmem:[#allocation24 + $0xc0] sm:$0xff]
    %v3595 = vld [vmem:[#allocation24 + $0xc8] sm:$0xff]
    %v3596 = vld [vmem:[#allocation24 + $0xd0] sm:$0xff]
    %v3597 = vld [vmem:[#allocation24 + $0xd8] sm:$0xff]
    %v3598 = vld [vmem:[#allocation24 + $0xe0] sm:$0xff]
    %v3599 = vld [vmem:[#allocation24 + $0xe8] sm:$0xff]
    %v3600 = vld [vmem:[#allocation24 + $0xf0] sm:$0xff]
    %v3601 = vld [vmem:[#allocation24 + $0xf8] sm:$0xff]
    %v3602 = vld [vmem:[#allocation24 + $0x100] sm:$0xff]
    %v3603 = vld [vmem:[#allocation24 + $0x108] sm:$0xff]
    %v3604 = vld [vmem:[#allocation24 + $0x110] sm:$0xff]
    %v3605 = vld [vmem:[#allocation24 + $0x118] sm:$0xff]
    %v3606 = vld [vmem:[#allocation24 + $0x120] sm:$0xff]
    %v3607 = vld [vmem:[#allocation24 + $0x128] sm:$0xff]
    %v3608 = vld [vmem:[#allocation24 + $0x130] sm:$0xff]
    %v3609 = vld [vmem:[#allocation24 + $0x138] sm:$0xff]
    %v3610 = vld [vmem:[#allocation24 + $0x140] sm:$0xff]
    %v3611 = vld [vmem:[#allocation24 + $0x148] sm:$0xff]
    %v3612 = vld [vmem:[#allocation24 + $0x150] sm:$0xff]
    %v3613 = vld [vmem:[#allocation24 + $0x158] sm:$0xff]
    %v3614 = vld [vmem:[#allocation24 + $0x160] sm:$0xff]
    %v3615 = vld [vmem:[#allocation24 + $0x168] sm:$0xff]
    %v3616 = vld [vmem:[#allocation24 + $0x170] sm:$0xff]
    %v3617 = vld [vmem:[#allocation24 + $0x178] sm:$0xff]
    %v3618 = vld [vmem:[#allocation24 + $0x180] sm:$0xff]
    %v3619 = vld [vmem:[#allocation24 + $0x188] sm:$0xff]
    %v3620 = vld [vmem:[#allocation24 + $0x190] sm:$0xff]
    %v3621 = vld [vmem:[#allocation24 + $0x198] sm:$0xff]
    %v3622 = vld [vmem:[#allocation24 + $0x1a0] sm:$0xff]
    %v3623 = vld [vmem:[#allocation24 + $0x1a8] sm:$0xff]
    %v3624 = vld [vmem:[#allocation24 + $0x1b0] sm:$0xff]
    %v3625 = vld [vmem:[#allocation24 + $0x1b8] sm:$0xff]
    %v3626 = vld [vmem:[#allocation24 + $0x1c0] sm:$0xff]
    %v3627 = vld [vmem:[#allocation24 + $0x1c8] sm:$0xff]
    %v3628 = vld [vmem:[#allocation24 + $0x1d0] sm:$0xff]
    %v3629 = vld [vmem:[#allocation24 + $0x1d8] sm:$0xff]
    %v3630 = vld [vmem:[#allocation24 + $0x1e0] sm:$0xff]
    %v3631 = vld [vmem:[#allocation24 + $0x1e8] sm:$0xff]
    %v3632 = vld [vmem:[#allocation24 + $0x1f0] sm:$0xff]
    %v3633 = vld [vmem:[#allocation24 + $0x1f8] sm:$0xff]
    %v3634 = vld [vmem:[%s55] sm:$0x3]
    %v3636 = vlaneseq
    %v3637 = vshrl.u32 %v3636, 7
    %v3638 = vsub.s32 0, %v3637
    %v3639 = vrot.slane %v3634, %v3638
    %v3640 = vlaneseq
    %v3641 = vshrl.u32 %v3640, 7
    %v3642 = vsub.s32 1, %v3641
    %v3643 = vrot.slane %v3634, %v3642
    %3646 = vmatprep.subr.mxu0 %v3571
    %3647 = vmatpush1.msra.mxu0 %v3570
    %3648 = vmatprep.subr.mxu0 %v3573
    %3649 = vmatpush1.msra.mxu0 %v3572
    %3650 = vmatprep.subr.mxu0 %v3575
    %3651 = vmatpush1.msra.mxu0 %v3574
    %3652 = vmatprep.subr.mxu0 %v3577
    %3653 = vmatpush1.msra.mxu0 %v3576
    %3654 = vmatprep.subr.mxu0 %v3579
    %3655 = vmatpush1.msra.mxu0 %v3578
    %3656 = vmatprep.subr.mxu0 %v3581
    %3657 = vmatpush1.msra.mxu0 %v3580
    %3658 = vmatprep.subr.mxu0 %v3583
    %3659 = vmatpush1.msra.mxu0 %v3582
    %3660 = vmatprep.subr.mxu0 %v3585
    %3661 = vmatpush1.msra.mxu0 %v3584
    %3662 = vmatprep.subr.mxu0 %v3587
    %3663 = vmatpush1.msra.mxu0 %v3586
    %3664 = vmatprep.subr.mxu0 %v3589
    %3665 = vmatpush1.msra.mxu0 %v3588
    %3666 = vmatprep.subr.mxu0 %v3591
    %3667 = vmatpush1.msra.mxu0 %v3590
    %3668 = vmatprep.subr.mxu0 %v3593
    %3669 = vmatpush1.msra.mxu0 %v3592
    %3670 = vmatprep.subr.mxu0 %v3595
    %3671 = vmatpush1.msra.mxu0 %v3594
    %3672 = vmatprep.subr.mxu0 %v3597
    %3673 = vmatpush1.msra.mxu0 %v3596
    %3674 = vmatprep.subr.mxu0 %v3599
    %3675 = vmatpush1.msra.mxu0 %v3598
    %3676 = vmatprep.subr.mxu0 %v3601
    %3677 = vmatpush1.msra.mxu0 %v3600
    %3678 = vmatprep.subr.mxu0 %v3603
    %3679 = vmatpush1.msra.mxu0 %v3602
    %3680 = vmatprep.subr.mxu0 %v3605
    %3681 = vmatpush1.msra.mxu0 %v3604
    %3682 = vmatprep.subr.mxu0 %v3607
    %3683 = vmatpush1.msra.mxu0 %v3606
    %3684 = vmatprep.subr.mxu0 %v3609
    %3685 = vmatpush1.msra.mxu0 %v3608
    %3686 = vmatprep.subr.mxu0 %v3611
    %3687 = vmatpush1.msra.mxu0 %v3610
    %3688 = vmatprep.subr.mxu0 %v3613
    %3689 = vmatpush1.msra.mxu0 %v3612
    %3690 = vmatprep.subr.mxu0 %v3615
    %3691 = vmatpush1.msra.mxu0 %v3614
    %3692 = vmatprep.subr.mxu0 %v3617
    %3693 = vmatpush1.msra.mxu0 %v3616
    %3694 = vmatprep.subr.mxu0 %v3619
    %3695 = vmatpush1.msra.mxu0 %v3618
    %3696 = vmatprep.subr.mxu0 %v3621
    %3697 = vmatpush1.msra.mxu0 %v3620
    %3698 = vmatprep.subr.mxu0 %v3623
    %3699 = vmatpush1.msra.mxu0 %v3622
    %3700 = vmatprep.subr.mxu0 %v3625
    %3701 = vmatpush1.msra.mxu0 %v3624
    %3702 = vmatprep.subr.mxu0 %v3627
    %3703 = vmatpush1.msra.mxu0 %v3626
    %3704 = vmatprep.subr.mxu0 %v3629
    %3705 = vmatpush1.msra.mxu0 %v3628
    %3706 = vmatprep.subr.mxu0 %v3631
    %3707 = vmatpush1.msra.mxu0 %v3630
    %3708 = vmatprep.subr.mxu0 %v3633
    %3709 = vmatpush1.msra.mxu0 %v3632
    %3710 = vmatprep.mubr.f32.mxu0 %v3568
    %3711 = vmatmul.mubr.f32.gmra.mrb[0].mxu0 %v3554
    %v3712 = vpop.f32.mrb[0].mxu0
    %v3713 = vadd.f32 %v3639, %v3712
    %v3714 = vpop.f32.mrb[0].mxu0
    %v3715 = vadd.f32 %v3643, %v3714
    %3716 = vmatprep.mubr.f32.mxu0 %v3569
    %3717 = vmatmul.mubr.f32.gmra.mrb[0].mxu0 %v3555
    %v3718 = vpop.f32.mrb[0].mxu0
    %v3719 = vadd.f32 %v3639, %v3718
    %v3720 = vpop.f32.mrb[0].mxu0
    %v3721 = vadd.f32 %v3643, %v3720
    %3722 = vdwg.mxu0
    %v3723 = vxor.u32 %v3715, 2147483648
    %v3724 = vxor.u32 %v3721, 2147483648
    %v3725 = vmul.f32 %v3723, 1.442695
    %v3726 = vpow.pop %v3725
    %v3727 = vmul.f32 %v3724, 1.442695
    %v3728 = vpow.pop %v3727
    %v3729 = vadd.f32 %v3726, 1.0
    %v3730 = vadd.f32 %v3728, 1.0
    %v3731 = vrcp.pop %v3729
    %v3732 = vmul.f32 1.0, %v3731
    %v3733 = vrcp.pop %v3730
    %v3734 = vmul.f32 1.0, %v3733
    %v3735 = vmul.f32 %v3713, %v3732
    %v3736 = vmul.f32 %v3719, %v3734
    %v3737 = vld [vmem:[%s57] sm:$0xff]
    %v3738 = vld [vmem:[%s57 + $0x8] sm:$0xff]
    %v3739 = vld [vmem:[%s57 + $0x10] sm:$0xff]
    %v3740 = vld [vmem:[%s57 + $0x18] sm:$0xff]
    %v3741 = vld [vmem:[%s57 + $0x20] sm:$0xff]
    %v3742 = vld [vmem:[%s57 + $0x28] sm:$0xff]
    %v3743 = vld [vmem:[%s57 + $0x30] sm:$0xff]
    %v3744 = vld [vmem:[%s57 + $0x38] sm:$0xff]
    %v3745 = vld [vmem:[%s57 + $0x40] sm:$0xff]
    %v3746 = vld [vmem:[%s57 + $0x48] sm:$0xff]
    %v3747 = vld [vmem:[%s57 + $0x50] sm:$0xff]
    %v3748 = vld [vmem:[%s57 + $0x58] sm:$0xff]
    %v3749 = vld [vmem:[%s57 + $0x60] sm:$0xff]
    %v3750 = vld [vmem:[%s57 + $0x68] sm:$0xff]
    %v3751 = vld [vmem:[%s57 + $0x70] sm:$0xff]
    %v3752 = vld [vmem:[%s57 + $0x78] sm:$0xff]
    %v3753 = vld [vmem:[%s59] sm:$0x1]
    %v3755 = vlaneseq
    %v3756 = vshrl.u32 %v3755, 7
    %v3757 = vsub.s32 0, %v3756
    %v3758 = vrot.slane %v3753, %v3757
    %3760 = vmatprep.subr.mxu0 0.0
    %3761 = vmatpush1.msra.mxu0 %v3737
    %3762 = vmatprep.subr.mxu0 0.0
    %3763 = vmatpush1.msra.mxu0 %v3738
    %3764 = vmatprep.subr.mxu0 0.0
    %3765 = vmatpush1.msra.mxu0 %v3739
    %3766 = vmatprep.subr.mxu0 0.0
    %3767 = vmatpush1.msra.mxu0 %v3740
    %3768 = vmatprep.subr.mxu0 0.0
    %3769 = vmatpush1.msra.mxu0 %v3741
    %3770 = vmatprep.subr.mxu0 0.0
    %3771 = vmatpush1.msra.mxu0 %v3742
    %3772 = vmatprep.subr.mxu0 0.0
    %3773 = vmatpush1.msra.mxu0 %v3743
    %3774 = vmatprep.subr.mxu0 0.0
    %3775 = vmatpush1.msra.mxu0 %v3744
    %3776 = vmatprep.subr.mxu0 0.0
    %3777 = vmatpush1.msra.mxu0 %v3745
    %3778 = vmatprep.subr.mxu0 0.0
    %3779 = vmatpush1.msra.mxu0 %v3746
    %3780 = vmatprep.subr.mxu0 0.0
    %3781 = vmatpush1.msra.mxu0 %v3747
    %3782 = vmatprep.subr.mxu0 0.0
    %3783 = vmatpush1.msra.mxu0 %v3748
    %3784 = vmatprep.subr.mxu0 0.0
    %3785 = vmatpush1.msra.mxu0 %v3749
    %3786 = vmatprep.subr.mxu0 0.0
    %3787 = vmatpush1.msra.mxu0 %v3750
    %3788 = vmatprep.subr.mxu0 0.0
    %3789 = vmatpush1.msra.mxu0 %v3751
    %3790 = vmatprep.subr.mxu0 0.0
    %3791 = vmatpush1.msra.mxu0 %v3752
    %3792 = vmatprep.subr.mxu0 0.0
    %3793 = vmatpush1.msra.mxu0 0.0
    %3794 = vmatprep.subr.mxu0 0.0
    %3795 = vmatpush1.msra.mxu0 0.0
    %3796 = vmatprep.subr.mxu0 0.0
    %3797 = vmatpush1.msra.mxu0 0.0
    %3798 = vmatprep.subr.mxu0 0.0
    %3799 = vmatpush1.msra.mxu0 0.0
    %3800 = vmatprep.subr.mxu0 0.0
    %3801 = vmatpush1.msra.mxu0 0.0
    %3802 = vmatprep.subr.mxu0 0.0
    %3803 = vmatpush1.msra.mxu0 0.0
    %3804 = vmatprep.subr.mxu0 0.0
    %3805 = vmatpush1.msra.mxu0 0.0
    %3806 = vmatprep.subr.mxu0 0.0
    %3807 = vmatpush1.msra.mxu0 0.0
    %3808 = vmatprep.subr.mxu0 0.0
    %3809 = vmatpush1.msra.mxu0 0.0
    %3810 = vmatprep.subr.mxu0 0.0
    %3811 = vmatpush1.msra.mxu0 0.0
    %3812 = vmatprep.subr.mxu0 0.0
    %3813 = vmatpush1.msra.mxu0 0.0
    %3814 = vmatprep.subr.mxu0 0.0
    %3815 = vmatpush1.msra.mxu0 0.0
    %3816 = vmatprep.subr.mxu0 0.0
    %3817 = vmatpush1.msra.mxu0 0.0
    %3818 = vmatprep.subr.mxu0 0.0
    %3819 = vmatpush1.msra.mxu0 0.0
    %3820 = vmatprep.subr.mxu0 0.0
    %3821 = vmatpush1.msra.mxu0 0.0
    %3822 = vmatprep.subr.mxu0 0.0
    %3823 = vmatpush1.msra.mxu0 0.0
    %3824 = vmatprep.mubr.f32.mxu0 0.0
    %3825 = vmatmul.mubr.f32.gmra.mrb[0].mxu0 %v3735
    %v3826 = vpop.f32.mrb[0].mxu0
    %v3827 = vadd.f32 %v3758, %v3826
    %v3828 = vpop.f32.mrb[0].mxu0
    %3829 = vmatprep.mubr.f32.mxu0 0.0
    %3830 = vmatmul.mubr.f32.gmra.mrb[0].mxu0 %v3736
    %v3831 = vpop.f32.mrb[0].mxu0
    %v3832 = vadd.f32 %v3758, %v3831
    %v3833 = vpop.f32.mrb[0].mxu0
    %3834 = vdwg.mxu0
    %v3835 = vxor.u32 %v3827, 2147483648
    %v3836 = vxor.u32 %v3832, 2147483648
    %v3837 = vmul.f32 %v3835, 1.442695
    %v3838 = vpow.pop %v3837
    %v3839 = vmul.f32 %v3836, 1.442695
    %v3840 = vpow.pop %v3839
    %v3841 = vadd.f32 %v3838, 1.0
    %v3842 = vadd.f32 %v3840, 1.0
    %v3843 = vrcp.pop %v3841
    %v3844 = vmul.f32 1.0, %v3843
    %v3845 = vrcp.pop %v3842
    %v3846 = vmul.f32 1.0, %v3845
    %v3847 = vld [vmem:[%s61] sm:$0xff]
    %v3848 = vld [vmem:[%s61 + $0x8] sm:$0xff]
    %v3849 = vld [vmem:[%s61 + $0x10] sm:$0xff]
    %v3850 = vld [vmem:[%s61 + $0x18] sm:$0xff]
    %v3851 = vld [vmem:[%s63] sm:$0x1]
    %v3853 = vlaneseq
    %v3854 = vshrl.u32 %v3853, 7
    %v3855 = vsub.s32 0, %v3854
    %v3856 = vrot.slane %v3851, %v3855
    %v3859 = vsel %vm1594, %v3844, 0
    %v3862 = vsel %vm1594, %v3846, 0
    %3864 = vmatprep.subr.mxu0 0.0
    %3865 = vmatpush1.msra.mxu0 %v3847
    %3866 = vmatprep.subr.mxu0 0.0
    %3867 = vmatpush1.msra.mxu0 %v3848
    %3868 = vmatprep.subr.mxu0 0.0
    %3869 = vmatpush1.msra.mxu0 %v3849
    %3870 = vmatprep.subr.mxu0 0.0
    %3871 = vmatpush1.msra.mxu0 %v3850
    %3872 = vmatprep.subr.mxu0 0.0
    %3873 = vmatpush1.msra.mxu0 0.0
    %3874 = vmatprep.subr.mxu0 0.0
    %3875 = vmatpush1.msra.mxu0 0.0
    %3876 = vmatprep.subr.mxu0 0.0
    %3877 = vmatpush1.msra.mxu0 0.0
    %3878 = vmatprep.subr.mxu0 0.0
    %3879 = vmatpush1.msra.mxu0 0.0
    %3880 = vmatprep.subr.mxu0 0.0
    %3881 = vmatpush1.msra.mxu0 0.0
    %3882 = vmatprep.subr.mxu0 0.0
    %3883 = vmatpush1.msra.mxu0 0.0
    %3884 = vmatprep.subr.mxu0 0.0
    %3885 = vmatpush1.msra.mxu0 0.0
    %3886 = vmatprep.subr.mxu0 0.0
    %3887 = vmatpush1.msra.mxu0 0.0
    %3888 = vmatprep.subr.mxu0 0.0
    %3889 = vmatpush1.msra.mxu0 0.0
    %3890 = vmatprep.subr.mxu0 0.0
    %3891 = vmatpush1.msra.mxu0 0.0
    %3892 = vmatprep.subr.mxu0 0.0
    %3893 = vmatpush1.msra.mxu0 0.0
    %3894 = vmatprep.subr.mxu0 0.0
    %3895 = vmatpush1.msra.mxu0 0.0
    %3896 = vmatprep.subr.mxu0 0.0
    %3897 = vmatpush1.msra.mxu0 0.0
    %3898 = vmatprep.subr.mxu0 0.0
    %3899 = vmatpush1.msra.mxu0 0.0
    %3900 = vmatprep.subr.mxu0 0.0
    %3901 = vmatpush1.msra.mxu0 0.0
    %3902 = vmatprep.subr.mxu0 0.0
    %3903 = vmatpush1.msra.mxu0 0.0
    %3904 = vmatprep.subr.mxu0 0.0
    %3905 = vmatpush1.msra.mxu0 0.0
    %3906 = vmatprep.subr.mxu0 0.0
    %3907 = vmatpush1.msra.mxu0 0.0
    %3908 = vmatprep.subr.mxu0 0.0
    %3909 = vmatpush1.msra.mxu0 0.0
    %3910 = vmatprep.subr.mxu0 0.0
    %3911 = vmatpush1.msra.mxu0 0.0
    %3912 = vmatprep.subr.mxu0 0.0
    %3913 = vmatpush1.msra.mxu0 0.0
    %3914 = vmatprep.subr.mxu0 0.0
    %3915 = vmatpush1.msra.mxu0 0.0
    %3916 = vmatprep.subr.mxu0 0.0
    %3917 = vmatpush1.msra.mxu0 0.0
    %3918 = vmatprep.subr.mxu0 0.0
    %3919 = vmatpush1.msra.mxu0 0.0
    %3920 = vmatprep.subr.mxu0 0.0
    %3921 = vmatpush1.msra.mxu0 0.0
    %3922 = vmatprep.subr.mxu0 0.0
    %3923 = vmatpush1.msra.mxu0 0.0
    %3924 = vmatprep.subr.mxu0 0.0
    %3925 = vmatpush1.msra.mxu0 0.0
    %3926 = vmatprep.subr.mxu0 0.0
    %3927 = vmatpush1.msra.mxu0 0.0
    %3928 = vmatprep.mubr.f32.mxu0 0.0
    %3929 = vmatmul.mubr.f32.gmra.mrb[0].mxu0 %v3859
    %v3930 = vpop.f32.mrb[0].mxu0
    %v3931 = vadd.f32 %v3856, %v3930
    %v3932 = vpop.f32.mrb[0].mxu0
    %3933 = vmatprep.mubr.f32.mxu0 0.0
    %3934 = vmatmul.mubr.f32.gmra.mrb[0].mxu0 %v3862
    %v3935 = vpop.f32.mrb[0].mxu0
    %v3936 = vadd.f32 %v3856, %v3935
    %v3937 = vpop.f32.mrb[0].mxu0
    %3938 = vdwg.mxu0
    %v3939 = vadd.f32 %v2614, %v3931
    %v3940 = vadd.f32 %v2619, %v3936
    %v3941 = vld [vmem:[%s65] sm:$0xff]
    %v3942 = vld [vmem:[%s65 + $0x8] sm:$0xff]
    %v3943 = vld [vmem:[#allocation26] sm:$0x1]
    %v3945 = vlaneseq
    %v3946 = vshrl.u32 %v3945, 7
    %v3947 = vsub.s32 0, %v3946
    %v3948 = vrot.slane %v3943, %v3947
    %v3951 = vsel %vm348, %v3939, 0
    %v3954 = vsel %vm348, %v3940, 0
    %3956 = vmatprep.subr.mxu0 0.0
    %3957 = vmatpush1.msra.mxu0 %v3941
    %3958 = vmatprep.subr.mxu0 0.0
    %3959 = vmatpush1.msra.mxu0 %v3942
    %3960 = vmatprep.subr.mxu0 0.0
    %3961 = vmatpush1.msra.mxu0 0.0
    %3962 = vmatprep.subr.mxu0 0.0
    %3963 = vmatpush1.msra.mxu0 0.0
    %3964 = vmatprep.subr.mxu0 0.0
    %3965 = vmatpush1.msra.mxu0 0.0
    %3966 = vmatprep.subr.mxu0 0.0
    %3967 = vmatpush1.msra.mxu0 0.0
    %3968 = vmatprep.subr.mxu0 0.0
    %3969 = vmatpush1.msra.mxu0 0.0
    %3970 = vmatprep.subr.mxu0 0.0
    %3971 = vmatpush1.msra.mxu0 0.0
    %3972 = vmatprep.subr.mxu0 0.0
    %3973 = vmatpush1.msra.mxu0 0.0
    %3974 = vmatprep.subr.mxu0 0.0
    %3975 = vmatpush1.msra.mxu0 0.0
    %3976 = vmatprep.subr.mxu0 0.0
    %3977 = vmatpush1.msra.mxu0 0.0
    %3978 = vmatprep.subr.mxu0 0.0
    %3979 = vmatpush1.msra.mxu0 0.0
    %3980 = vmatprep.subr.mxu0 0.0
    %3981 = vmatpush1.msra.mxu0 0.0
    %3982 = vmatprep.subr.mxu0 0.0
    %3983 = vmatpush1.msra.mxu0 0.0
    %3984 = vmatprep.subr.mxu0 0.0
    %3985 = vmatpush1.msra.mxu0 0.0
    %3986 = vmatprep.subr.mxu0 0.0
    %3987 = vmatpush1.msra.mxu0 0.0
    %3988 = vmatprep.subr.mxu0 0.0
    %3989 = vmatpush1.msra.mxu0 0.0
    %3990 = vmatprep.subr.mxu0 0.0
    %3991 = vmatpush1.msra.mxu0 0.0
    %3992 = vmatprep.subr.mxu0 0.0
    %3993 = vmatpush1.msra.mxu0 0.0
    %3994 = vmatprep.subr.mxu0 0.0
    %3995 = vmatpush1.msra.mxu0 0.0
    %3996 = vmatprep.subr.mxu0 0.0
    %3997 = vmatpush1.msra.mxu0 0.0
    %3998 = vmatprep.subr.mxu0 0.0
    %3999 = vmatpush1.msra.mxu0 0.0
    %4000 = vmatprep.subr.mxu0 0.0
    %4001 = vmatpush1.msra.mxu0 0.0
    %4002 = vmatprep.subr.mxu0 0.0
    %4003 = vmatpush1.msra.mxu0 0.0
    %4004 = vmatprep.subr.mxu0 0.0
    %4005 = vmatpush1.msra.mxu0 0.0
    %4006 = vmatprep.subr.mxu0 0.0
    %4007 = vmatpush1.msra.mxu0 0.0
    %4008 = vmatprep.subr.mxu0 0.0
    %4009 = vmatpush1.msra.mxu0 0.0
    %4010 = vmatprep.subr.mxu0 0.0
    %4011 = vmatpush1.msra.mxu0 0.0
    %4012 = vmatprep.subr.mxu0 0.0
    %4013 = vmatpush1.msra.mxu0 0.0
    %4014 = vmatprep.subr.mxu0 0.0
    %4015 = vmatpush1.msra.mxu0 0.0
    %4016 = vmatprep.subr.mxu0 0.0
    %4017 = vmatpush1.msra.mxu0 0.0
    %4018 = vmatprep.subr.mxu0 0.0
    %4019 = vmatpush1.msra.mxu0 0.0
    %4020 = vmatprep.mubr.f32.mxu0 0.0
    %4021 = vmatmul.mubr.f32.gmra.mrb[0].mxu0 %v3951
    %v4022 = vpop.f32.mrb[0].mxu0
    %v4023 = vadd.f32 %v3948, %v4022
    %v4024 = vpop.f32.mrb[0].mxu0
    %4025 = vmatprep.mubr.f32.mxu0 0.0
    %4026 = vmatmul.mubr.f32.gmra.mrb[0].mxu0 %v3954
    %v4027 = vpop.f32.mrb[0].mxu0
    %v4028 = vadd.f32 %v3948, %v4027
    %v4029 = vpop.f32.mrb[0].mxu0
    %4030 = vdwg.mxu0
    %vm4031 = vcmp.gt.f32.partialorder %v4023, 0.0
    %vm4032 = vcmp.gt.f32.partialorder %v4028, 0.0
    %v4033 = vmul.f32 %v4023, 0.01
    %v4034 = vmul.f32 %v4028, 0.01
    %v4035 = vsel %vm4031, %v4023, %v4033
    %v4036 = vsel %vm4032, %v4028, %v4034
    %v4037 = vld [vmem:[%s69] sm:$0xff]
    %v4038 = vld [vmem:[%s69 + $0x8] sm:$0xff]
    %v4039 = vld [vmem:[#allocation2] sm:$0x1]
    %v4041 = vlaneseq
    %v4042 = vshrl.u32 %v4041, 7
    %v4043 = vsub.s32 0, %v4042
    %v4044 = vrot.slane %v4039, %v4043
    %v4047 = vsel %vm348, %v4035, 0
    %v4050 = vsel %vm348, %v4036, 0
    %4052 = vmatprep.subr.mxu0 0.0
    %4053 = vmatpush1.msra.mxu0 %v4037
    %4054 = vmatprep.subr.mxu0 0.0
    %4055 = vmatpush1.msra.mxu0 %v4038
    %4056 = vmatprep.subr.mxu0 0.0
    %4057 = vmatpush1.msra.mxu0 0.0
    %4058 = vmatprep.subr.mxu0 0.0
    %4059 = vmatpush1.msra.mxu0 0.0
    %4060 = vmatprep.subr.mxu0 0.0
    %4061 = vmatpush1.msra.mxu0 0.0
    %4062 = vmatprep.subr.mxu0 0.0
    %4063 = vmatpush1.msra.mxu0 0.0
    %4064 = vmatprep.subr.mxu0 0.0
    %4065 = vmatpush1.msra.mxu0 0.0
    %4066 = vmatprep.subr.mxu0 0.0
    %4067 = vmatpush1.msra.mxu0 0.0
    %4068 = vmatprep.subr.mxu0 0.0
    %4069 = vmatpush1.msra.mxu0 0.0
    %4070 = vmatprep.subr.mxu0 0.0
    %4071 = vmatpush1.msra.mxu0 0.0
    %4072 = vmatprep.subr.mxu0 0.0
    %4073 = vmatpush1.msra.mxu0 0.0
    %4074 = vmatprep.subr.mxu0 0.0
    %4075 = vmatpush1.msra.mxu0 0.0
    %4076 = vmatprep.subr.mxu0 0.0
    %4077 = vmatpush1.msra.mxu0 0.0
    %4078 = vmatprep.subr.mxu0 0.0
    %4079 = vmatpush1.msra.mxu0 0.0
    %4080 = vmatprep.subr.mxu0 0.0
    %4081 = vmatpush1.msra.mxu0 0.0
    %4082 = vmatprep.subr.mxu0 0.0
    %4083 = vmatpush1.msra.mxu0 0.0
    %4084 = vmatprep.subr.mxu0 0.0
    %4085 = vmatpush1.msra.mxu0 0.0
    %4086 = vmatprep.subr.mxu0 0.0
    %4087 = vmatpush1.msra.mxu0 0.0
    %4088 = vmatprep.subr.mxu0 0.0
    %4089 = vmatpush1.msra.mxu0 0.0
    %4090 = vmatprep.subr.mxu0 0.0
    %4091 = vmatpush1.msra.mxu0 0.0
    %4092 = vmatprep.subr.mxu0 0.0
    %4093 = vmatpush1.msra.mxu0 0.0
    %4094 = vmatprep.subr.mxu0 0.0
    %4095 = vmatpush1.msra.mxu0 0.0
    %4096 = vmatprep.subr.mxu0 0.0
    %4097 = vmatpush1.msra.mxu0 0.0
    %4098 = vmatprep.subr.mxu0 0.0
    %4099 = vmatpush1.msra.mxu0 0.0
    %4100 = vmatprep.subr.mxu0 0.0
    %4101 = vmatpush1.msra.mxu0 0.0
    %4102 = vmatprep.subr.mxu0 0.0
    %4103 = vmatpush1.msra.mxu0 0.0
    %4104 = vmatprep.subr.mxu0 0.0
    %4105 = vmatpush1.msra.mxu0 0.0
    %4106 = vmatprep.subr.mxu0 0.0
    %4107 = vmatpush1.msra.mxu0 0.0
    %4108 = vmatprep.subr.mxu0 0.0
    %4109 = vmatpush1.msra.mxu0 0.0
    %4110 = vmatprep.subr.mxu0 0.0
    %4111 = vmatpush1.msra.mxu0 0.0
    %4112 = vmatprep.subr.mxu0 0.0
    %4113 = vmatpush1.msra.mxu0 0.0
    %4114 = vmatprep.subr.mxu0 0.0
    %4115 = vmatpush1.msra.mxu0 0.0
    %4116 = vmatprep.mubr.f32.mxu0 0.0
    %4117 = vmatmul.mubr.f32.gmra.mrb[0].mxu0 %v4047
    %v4118 = vpop.f32.mrb[0].mxu0
    %v4119 = vadd.f32 %v4044, %v4118
    %v4120 = vpop.f32.mrb[0].mxu0
    %4121 = vmatprep.mubr.f32.mxu0 0.0
    %4122 = vmatmul.mubr.f32.gmra.mrb[0].mxu0 %v4050
    %v4123 = vpop.f32.mrb[0].mxu0
    %v4124 = vadd.f32 %v4044, %v4123
    %v4125 = vpop.f32.mrb[0].mxu0
    %4126 = vdwg.mxu0
    %vm4127 = vcmask 7168
    %4128 = vst.msk [vmem:[%s73] sm:$0xff] %vm4127, %v4119
    %4129 = vst.msk [vmem:[%s73 + $0x8] sm:$0xff] %vm4127, %v4124
    // Predicated region
    $region206: #{forward.1} parent=1 // pred_check
      _
    $region207: #{forward.1} parent=1 // pred_check_branch
      %4131 = sbr.rel (0) target = $region209
    $region208: #{forward.1} parent=1 // pred_region
      _
    $region209: #{forward.1} parent=1 // pred_fallthru
      _
    // Predicated region
    $region210: #{forward.1} parent=1 // pred_check
      _
    $region211: #{forward.1} parent=1 // pred_check_branch
      %4133 = sbr.rel (0) target = $region213
    $region212: #{forward.1} parent=1 // pred_region
      _
    $region213: #{forward.1} parent=1 // pred_fallthru
      _
    %4134 = vsyncpa [#allocation4], 1
    %4135 = vsyncpa [#allocation10], 1
    %4136 = vsyncpa [#allocation13], 1
    %4137 = vsyncpa [#allocation16], 1
    %4138 = vsyncpa [#allocation19], 1
    %4139 = vsyncpa [#allocation22], 1
    %4140 = vsyncpa [#allocation25], 1
    %4141 = vsyncpa [#allocation5], 1
    %4142 = vsyncpa [#allocation7], 1

</llo_original>
